<compile_context>
chip_gen: v6e
topology: v6e:2x2x1
jax: 0.10.0
libtpu: 0.0.40
codegen_flags: <defaults>
</compile_context>

<pallas_src>
import functools
import math

import jax
import jax.numpy as jnp
from jax.experimental import pallas as pl
from jax.experimental.pallas import tpu as pltpu


# ----------------------------- Pallas kernel --------------------------------
def _bilstm_chunk_kernel(gf_ref, gr_ref, mf_ref, mr_ref, whh_f_ref, whh_r_ref,
                         of_ref, or_ref,
                         hf_scr, cf_scr, hr_scr, cr_scr,
                         *, chunk, hidden):
    """One time-chunk per grid step; fwd + rev LSTM recurrences fused.

    gf_ref / gr_ref : (C, B, 4H) precomputed x @ W_ih + b (fwd / rev stream)
    mf_ref / mr_ref : (C, B, 1)  float validity mask (1.0 where t < length)
    whh_*_ref       : (H, 4H)    recurrent weights
    of_ref / or_ref : (C, B, H)  per-direction outputs
    h*/c* scratch   : (B, H)     f32 carries, persist across grid steps
    """
    H = hidden

    @pl.when(pl.program_id(0) == 0)
    def _():
        hf_scr[...] = jnp.zeros_like(hf_scr)
        cf_scr[...] = jnp.zeros_like(cf_scr)
        hr_scr[...] = jnp.zeros_like(hr_scr)
        cr_scr[...] = jnp.zeros_like(cr_scr)

    # Hoist the (small) recurrent weights out of the inner loop.
    whh_f = whh_f_ref[...]
    whh_r = whh_r_ref[...]

    def cell(pre, h, c):
        # PyTorch gate order: i, f, g, o.  (For H >= 128 these lane slices are
        # vreg-aligned; at the tiny test H=32 they are sub-vreg but correct.)
        i_g = jax.nn.sigmoid(pre[:, 0 * H:1 * H])
        f_g = jax.nn.sigmoid(pre[:, 1 * H:2 * H])
        g_g = jnp.tanh(pre[:, 2 * H:3 * H])
        o_g = jax.nn.sigmoid(pre[:, 3 * H:4 * H])
        c_new = f_g * c + i_g * g_g
        h_new = o_g * jnp.tanh(c_new)
        return h_new, c_new

    def body(i, carry):
        # ---------------- forward direction: local time i ----------------
        h, c = hf_scr[...], cf_scr[...]
        pre = gf_ref[i] + jnp.dot(h, whh_f, preferred_element_type=jnp.float32)
        h_new, c_new = cell(pre, h, c)
        m = mf_ref[i]                               # (B, 1) in {0., 1.}
        hf_scr[...] = h + m * (h_new - h)           # masked state update
        cf_scr[...] = c + m * (c_new - c)
        of_ref[i] = (m * h_new).astype(of_ref.dtype)

        # ---------------- reverse direction: local time C-1-i ------------
        j = chunk - 1 - i
        h, c = hr_scr[...], cr_scr[...]
        pre = gr_ref[j] + jnp.dot(h, whh_r, preferred_element_type=jnp.float32)
        h_new, c_new = cell(pre, h, c)
        m = mr_ref[j]
        hr_scr[...] = h + m * (h_new - h)
        cr_scr[...] = c + m * (c_new - c)
        or_ref[j] = (m * h_new).astype(or_ref.dtype)
        return carry

    jax.lax.fori_loop(0, chunk, body, 0, unroll=True)


def bilstm_layer_pallas(g_fwd, g_rev, mask, whh_f, whh_r, hidden, t_chunk):
    """Fused bidirectional LSTM recurrence over precomputed pre-gates.

    g_fwd, g_rev: (T, B, 4H) f32;  mask: (T, B, 1) f32;  whh_*: (H, 4H) f32.
    Returns (out_fwd, out_rev), each (T, B, H) f32.
    """
    T, B, G4 = g_fwd.shape
    H = hidden
    C = t_chunk
    nk = T // C

    kernel = functools.partial(_bilstm_chunk_kernel, chunk=C, hidden=H)

    return pl.pallas_call(
        kernel,
        out_shape=(jax.ShapeDtypeStruct((T, B, H), jnp.float32),
                   jax.ShapeDtypeStruct((T, B, H), jnp.float32)),
        grid=(nk,),
        in_specs=[
            pl.BlockSpec((C, B, G4), lambda k: (k, 0, 0)),           # pre-gates fwd
            pl.BlockSpec((C, B, G4), lambda k: (nk - 1 - k, 0, 0)),  # pre-gates rev
            pl.BlockSpec((C, B, 1), lambda k: (k, 0, 0)),            # mask (fwd order)
            pl.BlockSpec((C, B, 1), lambda k: (nk - 1 - k, 0, 0)),   # mask (rev order)
            pl.BlockSpec((H, G4), lambda k: (0, 0)),                 # W_hh fwd
            pl.BlockSpec((H, G4), lambda k: (0, 0)),                 # W_hh rev
        ],
        out_specs=(
            pl.BlockSpec((C, B, H), lambda k: (k, 0, 0)),
            pl.BlockSpec((C, B, H), lambda k: (nk - 1 - k, 0, 0)),
        ),
        scratch_shapes=[pltpu.VMEM((B, H), jnp.float32),   # h fwd
                        pltpu.VMEM((B, H), jnp.float32),   # c fwd
                        pltpu.VMEM((B, H), jnp.float32),   # h rev
                        pltpu.VMEM((B, H), jnp.float32)],  # c rev
        compiler_params=pltpu.CompilerParams(
            dimension_semantics=("arbitrary",)),           # sequential recurrence
    )(g_fwd, g_rev, mask, mask, whh_f, whh_r)


# ----------------------------- Module wrapper --------------------------------
def init_rnn_encoder_params(key, input_size, hidden_size, num_layers):
    """Deterministic PyTorch-style LSTM init: U(-1/sqrt(H), 1/sqrt(H))."""
    k = 1.0 / math.sqrt(hidden_size)
    params = {}
    for layer in range(num_layers):
        d_in = input_size if layer == 0 else 2 * hidden_size
        for direction in range(2):
            key, k1, k2, k3, k4 = jax.random.split(key, 5)
            w_ih = jax.random.uniform(k1, (d_in, 4 * hidden_size),
                                      jnp.float32, -k, k)
            w_hh = jax.random.uniform(k2, (hidden_size, 4 * hidden_size),
                                      jnp.float32, -k, k)
            b_ih = jax.random.uniform(k3, (4 * hidden_size,), jnp.float32, -k, k)
            b_hh = jax.random.uniform(k4, (4 * hidden_size,), jnp.float32, -k, k)
            params[(layer, direction)] = dict(w_ih=w_ih, w_hh=w_hh, b=b_ih + b_hh)
    return params


def rnn_encoder_forward(x, lengths, params, hidden_size, num_layers,
                        drop_prob=0.0, t_chunk=8):
    """x: (B, T, input_size) batch-first; lengths: (B,) ints.
    Returns (B, T, 2 * hidden_size), matching RNNEncoder.forward in eval mode."""
    B, T, D = x.shape
    H = hidden_size
    t_chunk = min(t_chunk, T)
    B_pad = ((B + 7) // 8) * 8                       # sublane-align the batch
    T_pad = ((T + t_chunk - 1) // t_chunk) * t_chunk

    x_p = jnp.zeros((B_pad, T_pad, D), jnp.float32).at[:B, :T].set(
        x.astype(jnp.float32))
    len_p = jnp.zeros((B_pad,), jnp.int32).at[:B].set(lengths.astype(jnp.int32))

    inp = jnp.transpose(x_p, (1, 0, 2))              # (T_pad, B_pad, D)
    # Precomputed float validity mask: 1.0 where t < length (packed-seq rules).
    mask = (jnp.arange(T_pad)[:, None] < len_p[None, :]).astype(
        jnp.float32)[..., None]                      # (T_pad, B_pad, 1)

    of = orr = None
    for layer in range(num_layers):
        pf = params[(layer, 0)]
        pr = params[(layer, 1)]
        if layer == 0:
            # Hoisted input projection: one big (T*B, D) x (D, 4H) matmul/dir.
            gf = jnp.einsum('tbd,dg->tbg', inp, pf['w_ih']) + pf['b']
            gr = jnp.einsum('tbd,dg->tbg', inp, pr['w_ih']) + pr['b']
        else:
            # Consume fwd/rev halves separately — no materialized concat.
            gf = (jnp.einsum('tbh,hg->tbg', of, pf['w_ih'][:H]) +
                  jnp.einsum('tbh,hg->tbg', orr, pf['w_ih'][H:]) + pf['b'])
            gr = (jnp.einsum('tbh,hg->tbg', of, pr['w_ih'][:H]) +
                  jnp.einsum('tbh,hg->tbg', orr, pr['w_ih'][H:]) + pr['b'])
        of, orr = bilstm_layer_pallas(gf, gr, mask, pf['w_hh'], pr['w_hh'],
                                      H, t_chunk)
        # Inter-layer dropout: identity in eval mode (drop_prob == 0).
    out = jnp.concatenate([of, orr], axis=-1)        # (T_pad, B_pad, 2H)
    out = jnp.transpose(out, (1, 0, 2))[:B, :T]      # (B, T, 2H)
    # Final F.dropout(x, drop_prob, self.training): identity in eval mode.
    return out


# ----------------------------- Pure-JAX reference ----------------------------
def _lstm_direction_ref(x_tbd, lengths, w_ih, w_hh, b, H, reverse):
    T, B, _ = x_tbd.shape

    def step(carry, inp):
        h, c = carry
        x_t, t = inp
        gates = x_t @ w_ih + h @ w_hh + b
        i_g = jax.nn.sigmoid(gates[:, :H])
        f_g = jax.nn.sigmoid(gates[:, H:2 * H])
        g_g = jnp.tanh(gates[:, 2 * H:3 * H])
        o_g = jax.nn.sigmoid(gates[:, 3 * H:])
        c_new = f_g * c + i_g * g_g
        h_new = o_g * jnp.tanh(c_new)
        valid = (t < lengths)[:, None]
        return ((jnp.where(valid, h_new, h), jnp.where(valid, c_new, c)),
                jnp.where(valid, h_new, 0.0))

    ts = jnp.arange(T)
    xs = x_tbd
    if reverse:
        xs, ts = xs[::-1], ts[::-1]
    init = (jnp.zeros((B, H), jnp.float32), jnp.zeros((B, H), jnp.float32))
    _, outs = jax.lax.scan(step, init, (xs, ts))
    return outs[::-1] if reverse else outs


def rnn_encoder_ref(x, lengths, params, hidden_size, num_layers):
    inp = jnp.transpose(x, (1, 0, 2)).astype(jnp.float32)
    for layer in range(num_layers):
        outs = []
        for direction, reverse in ((0, False), (1, True)):
            p = params[(layer, direction)]
            outs.append(_lstm_direction_ref(inp, lengths, p["w_ih"], p["w_hh"],
                                            p["b"], hidden_size, reverse))
        inp = jnp.concatenate(outs, axis=-1)
    return jnp.transpose(inp, (1, 0, 2))


# ----------------------------------- Main ------------------------------------
if __name__ == "__main__":
    B, T, INPUT_SIZE, HIDDEN, NUM_LAYERS = 2, 16, 16, 32, 2
    T_CHUNK = 8

    key = jax.random.PRNGKey(0)
    key, kx = jax.random.split(key)
    x = jax.random.normal(kx, (B, T, INPUT_SIZE), dtype=jnp.float32)
    lengths = jnp.array([T, 11], dtype=jnp.int32)     # variable-length batch

    params = init_rnn_encoder_params(key, INPUT_SIZE, HIDDEN, NUM_LAYERS)

    out = rnn_encoder_forward(x, lengths, params, HIDDEN, NUM_LAYERS,
                              drop_prob=0.0, t_chunk=T_CHUNK)
    out = jax.block_until_ready(out)
    assert out.shape == (B, T, 2 * HIDDEN), out.shape

    ref = jax.block_until_ready(
        rnn_encoder_ref(x, lengths, params, HIDDEN, NUM_LAYERS))
    assert jnp.allclose(out, ref, atol=1e-4, rtol=1e-4), \
        float(jnp.max(jnp.abs(out - ref)))

    print("KERNEL_OK")
</pallas_src>

<mosaic_0001>
module attributes {stable_mosaic.version = 11 : i64} {
  func.func @_bilstm_chunk_kernel(%arg0: i32, %arg1: memref<8x8x128xf32, #tpu.memory_space<vmem>>, %arg2: memref<8x8x128xf32, #tpu.memory_space<vmem>>, %arg3: memref<8x8x1xf32, #tpu.memory_space<vmem>>, %arg4: memref<8x8x1xf32, #tpu.memory_space<vmem>>, %arg5: memref<32x128xf32, #tpu.memory_space<vmem>>, %arg6: memref<32x128xf32, #tpu.memory_space<vmem>>, %arg7: memref<8x8x32xf32, #tpu.memory_space<vmem>>, %arg8: memref<8x8x32xf32, #tpu.memory_space<vmem>>, %arg9: memref<8x32xf32, #tpu.memory_space<vmem>>, %arg10: memref<8x32xf32, #tpu.memory_space<vmem>>, %arg11: memref<8x32xf32, #tpu.memory_space<vmem>>, %arg12: memref<8x32xf32, #tpu.memory_space<vmem>>) attributes {dimension_semantics = [#tpu.dimension_semantics<arbitrary>], iteration_bounds = array<i64: 2>, scalar_prefetch = 0 : i64, scratch_operands = 4 : i64, tpu.core_type = #tpu.core_type<tc>, window_params = [{transform_indices = @transform_0, window_bounds = array<i64: 8, 8, 128>}, {transform_indices = @transform_1, window_bounds = array<i64: 8, 8, 128>}, {transform_indices = @transform_2, window_bounds = array<i64: 8, 8, 1>}, {transform_indices = @transform_3, window_bounds = array<i64: 8, 8, 1>}, {pipeline_mode = #tpu.pipeline_mode<synchronous>, transform_indices = @transform_4, window_bounds = array<i64: 32, 128>}, {pipeline_mode = #tpu.pipeline_mode<synchronous>, transform_indices = @transform_5, window_bounds = array<i64: 32, 128>}, {transform_indices = @transform_6, window_bounds = array<i64: 8, 8, 32>}, {transform_indices = @transform_7, window_bounds = array<i64: 8, 8, 32>}]} {
    %c0_i32 = arith.constant 0 : i32
    %0 = arith.cmpi eq, %arg0, %c0_i32 : i32
    %1 = arith.extui %0 : i1 to i32
    %c0_i32_0 = arith.constant 0 : i32
    %2 = arith.cmpi ne, %1, %c0_i32_0 : i32
    scf.if %2 {
      %cst_300 = arith.constant 0.000000e+00 : f32
      %829 = vector.broadcast %cst_300 : f32 to vector<8x32xf32>
      %c0_301 = arith.constant 0 : index
      %c0_302 = arith.constant 0 : index
      %830 = vector.load %arg9[%c0_301, %c0_302] : memref<8x32xf32, #tpu.memory_space<vmem>>, vector<8x32xf32>
      tpu.vector_store %arg9[%c0_301, %c0_302], %829 {strides = array<i32>} : memref<8x32xf32, #tpu.memory_space<vmem>>, vector<8x32xf32>,
      %cst_303 = arith.constant 0.000000e+00 : f32
      %831 = vector.broadcast %cst_303 : f32 to vector<8x32xf32>
      %c0_304 = arith.constant 0 : index
      %c0_305 = arith.constant 0 : index
      %832 = vector.load %arg10[%c0_304, %c0_305] : memref<8x32xf32, #tpu.memory_space<vmem>>, vector<8x32xf32>
      tpu.vector_store %arg10[%c0_304, %c0_305], %831 {strides = array<i32>} : memref<8x32xf32, #tpu.memory_space<vmem>>, vector<8x32xf32>,
      %cst_306 = arith.constant 0.000000e+00 : f32
      %833 = vector.broadcast %cst_306 : f32 to vector<8x32xf32>
      %c0_307 = arith.constant 0 : index
      %c0_308 = arith.constant 0 : index
      %834 = vector.load %arg11[%c0_307, %c0_308] : memref<8x32xf32, #tpu.memory_space<vmem>>, vector<8x32xf32>
      tpu.vector_store %arg11[%c0_307, %c0_308], %833 {strides = array<i32>} : memref<8x32xf32, #tpu.memory_space<vmem>>, vector<8x32xf32>,
      %cst_309 = arith.constant 0.000000e+00 : f32
      %835 = vector.broadcast %cst_309 : f32 to vector<8x32xf32>
      %c0_310 = arith.constant 0 : index
      %c0_311 = arith.constant 0 : index
      %836 = vector.load %arg12[%c0_310, %c0_311] : memref<8x32xf32, #tpu.memory_space<vmem>>, vector<8x32xf32>
      tpu.vector_store %arg12[%c0_310, %c0_311], %835 {strides = array<i32>} : memref<8x32xf32, #tpu.memory_space<vmem>>, vector<8x32xf32>,
    } else {
    }
    %c0 = arith.constant 0 : index
    %c0_1 = arith.constant 0 : index
    %3 = vector.load %arg5[%c0, %c0_1] : memref<32x128xf32, #tpu.memory_space<vmem>>, vector<32x128xf32>
    %c0_2 = arith.constant 0 : index
    %c0_3 = arith.constant 0 : index
    %4 = vector.load %arg6[%c0_2, %c0_3] : memref<32x128xf32, #tpu.memory_space<vmem>>, vector<32x128xf32>
    %c0_i32_4 = arith.constant 0 : i32
    %c0_5 = arith.constant 0 : index
    %c0_6 = arith.constant 0 : index
    %5 = vector.load %arg9[%c0_5, %c0_6] : memref<8x32xf32, #tpu.memory_space<vmem>>, vector<8x32xf32>
    %c0_7 = arith.constant 0 : index
    %c0_8 = arith.constant 0 : index
    %6 = vector.load %arg10[%c0_7, %c0_8] : memref<8x32xf32, #tpu.memory_space<vmem>>, vector<8x32xf32>
    %7 = arith.index_cast %c0_i32_4 : i32 to index
    %c0_9 = arith.constant 0 : index
    %c0_10 = arith.constant 0 : index
    %8 = vector.load %arg1[%7, %c0_9, %c0_10] : memref<8x8x128xf32, #tpu.memory_space<vmem>>, vector<1x8x128xf32>
    %9 = vector.shape_cast %8 : vector<1x8x128xf32> to vector<8x128xf32>
    %cst = arith.constant dense<0.000000e+00> : vector<8x128xf32>
    %10 = tpu.matmul %5, %3, %cst {dimension_numbers = #tpu.dot_dimension_numbers<[1], [0], [0], [1], [0, 0, 1, 1], [], []>} : vector<8x32xf32>, vector<32x128xf32>, vector<8x128xf32> -> vector<8x128xf32>
    %11 = arith.addf %9, %10 : vector<8x128xf32>
    %12 = vector.extract_strided_slice %11 {offsets = [0, 0], sizes = [8, 32], strides = [1, 1]} : vector<8x128xf32> to vector<8x32xf32>
    %13 = arith.negf %12 : vector<8x32xf32>
    %14 = math.exp %13 : vector<8x32xf32>
    %cst_11 = arith.constant 1.000000e+00 : f32
    %15 = vector.broadcast %cst_11 : f32 to vector<8x32xf32>
    %16 = arith.addf %15, %14 : vector<8x32xf32>
    %17 = arith.divf %15, %16 : vector<8x32xf32>
    %18 = vector.extract_strided_slice %11 {offsets = [0, 32], sizes = [8, 32], strides = [1, 1]} : vector<8x128xf32> to vector<8x32xf32>
    %19 = arith.negf %18 : vector<8x32xf32>
    %20 = math.exp %19 : vector<8x32xf32>
    %cst_12 = arith.constant 1.000000e+00 : f32
    %21 = vector.broadcast %cst_12 : f32 to vector<8x32xf32>
    %22 = arith.addf %21, %20 : vector<8x32xf32>
    %23 = arith.divf %21, %22 : vector<8x32xf32>
    %24 = vector.extract_strided_slice %11 {offsets = [0, 64], sizes = [8, 32], strides = [1, 1]} : vector<8x128xf32> to vector<8x32xf32>
    %25 = math.tanh %24 : vector<8x32xf32>
    %26 = vector.extract_strided_slice %11 {offsets = [0, 96], sizes = [8, 32], strides = [1, 1]} : vector<8x128xf32> to vector<8x32xf32>
    %27 = arith.negf %26 : vector<8x32xf32>
    %28 = math.exp %27 : vector<8x32xf32>
    %cst_13 = arith.constant 1.000000e+00 : f32
    %29 = vector.broadcast %cst_13 : f32 to vector<8x32xf32>
    %30 = arith.addf %29, %28 : vector<8x32xf32>
    %31 = arith.divf %29, %30 : vector<8x32xf32>
    %32 = arith.mulf %23, %6 : vector<8x32xf32>
    %33 = arith.mulf %17, %25 : vector<8x32xf32>
    %34 = arith.addf %32, %33 : vector<8x32xf32>
    %35 = math.tanh %34 : vector<8x32xf32>
    %36 = arith.mulf %31, %35 : vector<8x32xf32>
    %37 = arith.index_cast %c0_i32_4 : i32 to index
    %c0_14 = arith.constant 0 : index
    %c0_15 = arith.constant 0 : index
    %38 = vector.load %arg3[%37, %c0_14, %c0_15] : memref<8x8x1xf32, #tpu.memory_space<vmem>>, vector<1x8x1xf32>
    %39 = vector.shape_cast %38 : vector<1x8x1xf32> to vector<8x1xf32>
    %40 = arith.subf %36, %5 : vector<8x32xf32>
    %41 = vector.broadcast %39 : vector<8x1xf32> to vector<8x32xf32>
    %42 = arith.mulf %41, %40 : vector<8x32xf32>
    %43 = arith.addf %5, %42 : vector<8x32xf32>
    %c0_16 = arith.constant 0 : index
    %c0_17 = arith.constant 0 : index
    %44 = vector.load %arg9[%c0_16, %c0_17] : memref<8x32xf32, #tpu.memory_space<vmem>>, vector<8x32xf32>
    tpu.vector_store %arg9[%c0_16, %c0_17], %43 {strides = array<i32>} : memref<8x32xf32, #tpu.memory_space<vmem>>, vector<8x32xf32>,
    %45 = arith.subf %34, %6 : vector<8x32xf32>
    %46 = vector.broadcast %39 : vector<8x1xf32> to vector<8x32xf32>
    %47 = arith.mulf %46, %45 : vector<8x32xf32>
    %48 = arith.addf %6, %47 : vector<8x32xf32>
    %c0_18 = arith.constant 0 : index
    %c0_19 = arith.constant 0 : index
    %49 = vector.load %arg10[%c0_18, %c0_19] : memref<8x32xf32, #tpu.memory_space<vmem>>, vector<8x32xf32>
    tpu.vector_store %arg10[%c0_18, %c0_19], %48 {strides = array<i32>} : memref<8x32xf32, #tpu.memory_space<vmem>>, vector<8x32xf32>,
    %50 = vector.broadcast %39 : vector<8x1xf32> to vector<8x32xf32>
    %51 = arith.mulf %50, %36 : vector<8x32xf32>
    %52 = arith.index_cast %c0_i32_4 : i32 to index
    %c0_20 = arith.constant 0 : index
    %c0_21 = arith.constant 0 : index
    %53 = vector.load %arg7[%52, %c0_20, %c0_21] : memref<8x8x32xf32, #tpu.memory_space<vmem>>, vector<1x8x32xf32>
    %54 = vector.shape_cast %53 : vector<1x8x32xf32> to vector<8x32xf32>
    %55 = vector.shape_cast %51 : vector<8x32xf32> to vector<1x8x32xf32>
    tpu.vector_store %arg7[%52, %c0_20, %c0_21], %55 {strides = array<i32>} : memref<8x8x32xf32, #tpu.memory_space<vmem>>, vector<1x8x32xf32>,
    %c7_i32 = arith.constant 7 : i32
    %56 = arith.subi %c7_i32, %c0_i32_4 : i32
    %c0_22 = arith.constant 0 : index
    %c0_23 = arith.constant 0 : index
    %57 = vector.load %arg11[%c0_22, %c0_23] : memref<8x32xf32, #tpu.memory_space<vmem>>, vector<8x32xf32>
    %c0_24 = arith.constant 0 : index
    %c0_25 = arith.constant 0 : index
    %58 = vector.load %arg12[%c0_24, %c0_25] : memref<8x32xf32, #tpu.memory_space<vmem>>, vector<8x32xf32>
    %59 = arith.index_cast %56 : i32 to index
    %c0_26 = arith.constant 0 : index
    %c0_27 = arith.constant 0 : index
    %60 = vector.load %arg2[%59, %c0_26, %c0_27] : memref<8x8x128xf32, #tpu.memory_space<vmem>>, vector<1x8x128xf32>
    %61 = vector.shape_cast %60 : vector<1x8x128xf32> to vector<8x128xf32>
    %cst_28 = arith.constant dense<0.000000e+00> : vector<8x128xf32>
    %62 = tpu.matmul %57, %4, %cst_28 {dimension_numbers = #tpu.dot_dimension_numbers<[1], [0], [0], [1], [0, 0, 1, 1], [], []>} : vector<8x32xf32>, vector<32x128xf32>, vector<8x128xf32> -> vector<8x128xf32>
    %63 = arith.addf %61, %62 : vector<8x128xf32>
    %64 = vector.extract_strided_slice %63 {offsets = [0, 0], sizes = [8, 32], strides = [1, 1]} : vector<8x128xf32> to vector<8x32xf32>
    %65 = arith.negf %64 : vector<8x32xf32>
    %66 = math.exp %65 : vector<8x32xf32>
    %cst_29 = arith.constant 1.000000e+00 : f32
    %67 = vector.broadcast %cst_29 : f32 to vector<8x32xf32>
    %68 = arith.addf %67, %66 : vector<8x32xf32>
    %69 = arith.divf %67, %68 : vector<8x32xf32>
    %70 = vector.extract_strided_slice %63 {offsets = [0, 32], sizes = [8, 32], strides = [1, 1]} : vector<8x128xf32> to vector<8x32xf32>
    %71 = arith.negf %70 : vector<8x32xf32>
    %72 = math.exp %71 : vector<8x32xf32>
    %cst_30 = arith.constant 1.000000e+00 : f32
    %73 = vector.broadcast %cst_30 : f32 to vector<8x32xf32>
    %74 = arith.addf %73, %72 : vector<8x32xf32>
    %75 = arith.divf %73, %74 : vector<8x32xf32>
    %76 = vector.extract_strided_slice %63 {offsets = [0, 64], sizes = [8, 32], strides = [1, 1]} : vector<8x128xf32> to vector<8x32xf32>
    %77 = math.tanh %76 : vector<8x32xf32>
    %78 = vector.extract_strided_slice %63 {offsets = [0, 96], sizes = [8, 32], strides = [1, 1]} : vector<8x128xf32> to vector<8x32xf32>
    %79 = arith.negf %78 : vector<8x32xf32>
    %80 = math.exp %79 : vector<8x32xf32>
    %cst_31 = arith.constant 1.000000e+00 : f32
    %81 = vector.broadcast %cst_31 : f32 to vector<8x32xf32>
    %82 = arith.addf %81, %80 : vector<8x32xf32>
    %83 = arith.divf %81, %82 : vector<8x32xf32>
    %84 = arith.mulf %75, %58 : vector<8x32xf32>
    %85 = arith.mulf %69, %77 : vector<8x32xf32>
    %86 = arith.addf %84, %85 : vector<8x32xf32>
    %87 = math.tanh %86 : vector<8x32xf32>
    %88 = arith.mulf %83, %87 : vector<8x32xf32>
    %89 = arith.index_cast %56 : i32 to index
    %c0_32 = arith.constant 0 : index
    %c0_33 = arith.constant 0 : index
    %90 = vector.load %arg4[%89, %c0_32, %c0_33] : memref<8x8x1xf32, #tpu.memory_space<vmem>>, vector<1x8x1xf32>
    %91 = vector.shape_cast %90 : vector<1x8x1xf32> to vector<8x1xf32>
    %92 = arith.subf %88, %57 : vector<8x32xf32>
    %93 = vector.broadcast %91 : vector<8x1xf32> to vector<8x32xf32>
    %94 = arith.mulf %93, %92 : vector<8x32xf32>
    %95 = arith.addf %57, %94 : vector<8x32xf32>
    %c0_34 = arith.constant 0 : index
    %c0_35 = arith.constant 0 : index
    %96 = vector.load %arg11[%c0_34, %c0_35] : memref<8x32xf32, #tpu.memory_space<vmem>>, vector<8x32xf32>
    tpu.vector_store %arg11[%c0_34, %c0_35], %95 {strides = array<i32>} : memref<8x32xf32, #tpu.memory_space<vmem>>, vector<8x32xf32>,
    %97 = arith.subf %86, %58 : vector<8x32xf32>
    %98 = vector.broadcast %91 : vector<8x1xf32> to vector<8x32xf32>
    %99 = arith.mulf %98, %97 : vector<8x32xf32>
    %100 = arith.addf %58, %99 : vector<8x32xf32>
    %c0_36 = arith.constant 0 : index
    %c0_37 = arith.constant 0 : index
    %101 = vector.load %arg12[%c0_36, %c0_37] : memref<8x32xf32, #tpu.memory_space<vmem>>, vector<8x32xf32>
    tpu.vector_store %arg12[%c0_36, %c0_37], %100 {strides = array<i32>} : memref<8x32xf32, #tpu.memory_space<vmem>>, vector<8x32xf32>,
    %102 = vector.broadcast %91 : vector<8x1xf32> to vector<8x32xf32>
    %103 = arith.mulf %102, %88 : vector<8x32xf32>
    %104 = arith.index_cast %56 : i32 to index
    %c0_38 = arith.constant 0 : index
    %c0_39 = arith.constant 0 : index
    %105 = vector.load %arg8[%104, %c0_38, %c0_39] : memref<8x8x32xf32, #tpu.memory_space<vmem>>, vector<1x8x32xf32>
    %106 = vector.shape_cast %105 : vector<1x8x32xf32> to vector<8x32xf32>
    %107 = vector.shape_cast %103 : vector<8x32xf32> to vector<1x8x32xf32>
    tpu.vector_store %arg8[%104, %c0_38, %c0_39], %107 {strides = array<i32>} : memref<8x8x32xf32, #tpu.memory_space<vmem>>, vector<1x8x32xf32>,
    %c1_i32 = arith.constant 1 : i32
    %c0_40 = arith.constant 0 : index
    %c0_41 = arith.constant 0 : index
    %108 = vector.load %arg9[%c0_40, %c0_41] : memref<8x32xf32, #tpu.memory_space<vmem>>, vector<8x32xf32>
    %c0_42 = arith.constant 0 : index
    %c0_43 = arith.constant 0 : index
    %109 = vector.load %arg10[%c0_42, %c0_43] : memref<8x32xf32, #tpu.memory_space<vmem>>, vector<8x32xf32>
    %110 = arith.index_cast %c1_i32 : i32 to index
    %c0_44 = arith.constant 0 : index
    %c0_45 = arith.constant 0 : index
    %111 = vector.load %arg1[%110, %c0_44, %c0_45] : memref<8x8x128xf32, #tpu.memory_space<vmem>>, vector<1x8x128xf32>
    %112 = vector.shape_cast %111 : vector<1x8x128xf32> to vector<8x128xf32>
    %cst_46 = arith.constant dense<0.000000e+00> : vector<8x128xf32>
    %113 = tpu.matmul %108, %3, %cst_46 {dimension_numbers = #tpu.dot_dimension_numbers<[1], [0], [0], [1], [0, 0, 1, 1], [], []>} : vector<8x32xf32>, vector<32x128xf32>, vector<8x128xf32> -> vector<8x128xf32>
    %114 = arith.addf %112, %113 : vector<8x128xf32>
    %115 = vector.extract_strided_slice %114 {offsets = [0, 0], sizes = [8, 32], strides = [1, 1]} : vector<8x128xf32> to vector<8x32xf32>
    %116 = arith.negf %115 : vector<8x32xf32>
    %117 = math.exp %116 : vector<8x32xf32>
    %cst_47 = arith.constant 1.000000e+00 : f32
    %118 = vector.broadcast %cst_47 : f32 to vector<8x32xf32>
    %119 = arith.addf %118, %117 : vector<8x32xf32>
    %120 = arith.divf %118, %119 : vector<8x32xf32>
    %121 = vector.extract_strided_slice %114 {offsets = [0, 32], sizes = [8, 32], strides = [1, 1]} : vector<8x128xf32> to vector<8x32xf32>
    %122 = arith.negf %121 : vector<8x32xf32>
    %123 = math.exp %122 : vector<8x32xf32>
    %cst_48 = arith.constant 1.000000e+00 : f32
    %124 = vector.broadcast %cst_48 : f32 to vector<8x32xf32>
    %125 = arith.addf %124, %123 : vector<8x32xf32>
    %126 = arith.divf %124, %125 : vector<8x32xf32>
    %127 = vector.extract_strided_slice %114 {offsets = [0, 64], sizes = [8, 32], strides = [1, 1]} : vector<8x128xf32> to vector<8x32xf32>
    %128 = math.tanh %127 : vector<8x32xf32>
    %129 = vector.extract_strided_slice %114 {offsets = [0, 96], sizes = [8, 32], strides = [1, 1]} : vector<8x128xf32> to vector<8x32xf32>
    %130 = arith.negf %129 : vector<8x32xf32>
    %131 = math.exp %130 : vector<8x32xf32>
    %cst_49 = arith.constant 1.000000e+00 : f32
    %132 = vector.broadcast %cst_49 : f32 to vector<8x32xf32>
    %133 = arith.addf %132, %131 : vector<8x32xf32>
    %134 = arith.divf %132, %133 : vector<8x32xf32>
    %135 = arith.mulf %126, %109 : vector<8x32xf32>
    %136 = arith.mulf %120, %128 : vector<8x32xf32>
    %137 = arith.addf %135, %136 : vector<8x32xf32>
    %138 = math.tanh %137 : vector<8x32xf32>
    %139 = arith.mulf %134, %138 : vector<8x32xf32>
    %140 = arith.index_cast %c1_i32 : i32 to index
    %c0_50 = arith.constant 0 : index
    %c0_51 = arith.constant 0 : index
    %141 = vector.load %arg3[%140, %c0_50, %c0_51] : memref<8x8x1xf32, #tpu.memory_space<vmem>>, vector<1x8x1xf32>
    %142 = vector.shape_cast %141 : vector<1x8x1xf32> to vector<8x1xf32>
    %143 = arith.subf %139, %108 : vector<8x32xf32>
    %144 = vector.broadcast %142 : vector<8x1xf32> to vector<8x32xf32>
    %145 = arith.mulf %144, %143 : vector<8x32xf32>
    %146 = arith.addf %108, %145 : vector<8x32xf32>
    %c0_52 = arith.constant 0 : index
    %c0_53 = arith.constant 0 : index
    %147 = vector.load %arg9[%c0_52, %c0_53] : memref<8x32xf32, #tpu.memory_space<vmem>>, vector<8x32xf32>
    tpu.vector_store %arg9[%c0_52, %c0_53], %146 {strides = array<i32>} : memref<8x32xf32, #tpu.memory_space<vmem>>, vector<8x32xf32>,
    %148 = arith.subf %137, %109 : vector<8x32xf32>
    %149 = vector.broadcast %142 : vector<8x1xf32> to vector<8x32xf32>
    %150 = arith.mulf %149, %148 : vector<8x32xf32>
    %151 = arith.addf %109, %150 : vector<8x32xf32>
    %c0_54 = arith.constant 0 : index
    %c0_55 = arith.constant 0 : index
    %152 = vector.load %arg10[%c0_54, %c0_55] : memref<8x32xf32, #tpu.memory_space<vmem>>, vector<8x32xf32>
    tpu.vector_store %arg10[%c0_54, %c0_55], %151 {strides = array<i32>} : memref<8x32xf32, #tpu.memory_space<vmem>>, vector<8x32xf32>,
    %153 = vector.broadcast %142 : vector<8x1xf32> to vector<8x32xf32>
    %154 = arith.mulf %153, %139 : vector<8x32xf32>
    %155 = arith.index_cast %c1_i32 : i32 to index
    %c0_56 = arith.constant 0 : index
    %c0_57 = arith.constant 0 : index
    %156 = vector.load %arg7[%155, %c0_56, %c0_57] : memref<8x8x32xf32, #tpu.memory_space<vmem>>, vector<1x8x32xf32>
    %157 = vector.shape_cast %156 : vector<1x8x32xf32> to vector<8x32xf32>
    %158 = vector.shape_cast %154 : vector<8x32xf32> to vector<1x8x32xf32>
    tpu.vector_store %arg7[%155, %c0_56, %c0_57], %158 {strides = array<i32>} : memref<8x8x32xf32, #tpu.memory_space<vmem>>, vector<1x8x32xf32>,
    %c7_i32_58 = arith.constant 7 : i32
    %159 = arith.subi %c7_i32_58, %c1_i32 : i32
    %c0_59 = arith.constant 0 : index
    %c0_60 = arith.constant 0 : index
    %160 = vector.load %arg11[%c0_59, %c0_60] : memref<8x32xf32, #tpu.memory_space<vmem>>, vector<8x32xf32>
    %c0_61 = arith.constant 0 : index
    %c0_62 = arith.constant 0 : index
    %161 = vector.load %arg12[%c0_61, %c0_62] : memref<8x32xf32, #tpu.memory_space<vmem>>, vector<8x32xf32>
    %162 = arith.index_cast %159 : i32 to index
    %c0_63 = arith.constant 0 : index
    %c0_64 = arith.constant 0 : index
    %163 = vector.load %arg2[%162, %c0_63, %c0_64] : memref<8x8x128xf32, #tpu.memory_space<vmem>>, vector<1x8x128xf32>
    %164 = vector.shape_cast %163 : vector<1x8x128xf32> to vector<8x128xf32>
    %cst_65 = arith.constant dense<0.000000e+00> : vector<8x128xf32>
    %165 = tpu.matmul %160, %4, %cst_65 {dimension_numbers = #tpu.dot_dimension_numbers<[1], [0], [0], [1], [0, 0, 1, 1], [], []>} : vector<8x32xf32>, vector<32x128xf32>, vector<8x128xf32> -> vector<8x128xf32>
    %166 = arith.addf %164, %165 : vector<8x128xf32>
    %167 = vector.extract_strided_slice %166 {offsets = [0, 0], sizes = [8, 32], strides = [1, 1]} : vector<8x128xf32> to vector<8x32xf32>
    %168 = arith.negf %167 : vector<8x32xf32>
    %169 = math.exp %168 : vector<8x32xf32>
    %cst_66 = arith.constant 1.000000e+00 : f32
    %170 = vector.broadcast %cst_66 : f32 to vector<8x32xf32>
    %171 = arith.addf %170, %169 : vector<8x32xf32>
    %172 = arith.divf %170, %171 : vector<8x32xf32>
    %173 = vector.extract_strided_slice %166 {offsets = [0, 32], sizes = [8, 32], strides = [1, 1]} : vector<8x128xf32> to vector<8x32xf32>
    %174 = arith.negf %173 : vector<8x32xf32>
    %175 = math.exp %174 : vector<8x32xf32>
    %cst_67 = arith.constant 1.000000e+00 : f32
    %176 = vector.broadcast %cst_67 : f32 to vector<8x32xf32>
    %177 = arith.addf %176, %175 : vector<8x32xf32>
    %178 = arith.divf %176, %177 : vector<8x32xf32>
    %179 = vector.extract_strided_slice %166 {offsets = [0, 64], sizes = [8, 32], strides = [1, 1]} : vector<8x128xf32> to vector<8x32xf32>
    %180 = math.tanh %179 : vector<8x32xf32>
    %181 = vector.extract_strided_slice %166 {offsets = [0, 96], sizes = [8, 32], strides = [1, 1]} : vector<8x128xf32> to vector<8x32xf32>
    %182 = arith.negf %181 : vector<8x32xf32>
    %183 = math.exp %182 : vector<8x32xf32>
    %cst_68 = arith.constant 1.000000e+00 : f32
    %184 = vector.broadcast %cst_68 : f32 to vector<8x32xf32>
    %185 = arith.addf %184, %183 : vector<8x32xf32>
    %186 = arith.divf %184, %185 : vector<8x32xf32>
    %187 = arith.mulf %178, %161 : vector<8x32xf32>
    %188 = arith.mulf %172, %180 : vector<8x32xf32>
    %189 = arith.addf %187, %188 : vector<8x32xf32>
    %190 = math.tanh %189 : vector<8x32xf32>
    %191 = arith.mulf %186, %190 : vector<8x32xf32>
    %192 = arith.index_cast %159 : i32 to index
    %c0_69 = arith.constant 0 : index
    %c0_70 = arith.constant 0 : index
    %193 = vector.load %arg4[%192, %c0_69, %c0_70] : memref<8x8x1xf32, #tpu.memory_space<vmem>>, vector<1x8x1xf32>
    %194 = vector.shape_cast %193 : vector<1x8x1xf32> to vector<8x1xf32>
    %195 = arith.subf %191, %160 : vector<8x32xf32>
    %196 = vector.broadcast %194 : vector<8x1xf32> to vector<8x32xf32>
    %197 = arith.mulf %196, %195 : vector<8x32xf32>
    %198 = arith.addf %160, %197 : vector<8x32xf32>
    %c0_71 = arith.constant 0 : index
    %c0_72 = arith.constant 0 : index
    %199 = vector.load %arg11[%c0_71, %c0_72] : memref<8x32xf32, #tpu.memory_space<vmem>>, vector<8x32xf32>
    tpu.vector_store %arg11[%c0_71, %c0_72], %198 {strides = array<i32>} : memref<8x32xf32, #tpu.memory_space<vmem>>, vector<8x32xf32>,
    %200 = arith.subf %189, %161 : vector<8x32xf32>
    %201 = vector.broadcast %194 : vector<8x1xf32> to vector<8x32xf32>
    %202 = arith.mulf %201, %200 : vector<8x32xf32>
    %203 = arith.addf %161, %202 : vector<8x32xf32>
    %c0_73 = arith.constant 0 : index
    %c0_74 = arith.constant 0 : index
    %204 = vector.load %arg12[%c0_73, %c0_74] : memref<8x32xf32, #tpu.memory_space<vmem>>, vector<8x32xf32>
    tpu.vector_store %arg12[%c0_73, %c0_74], %203 {strides = array<i32>} : memref<8x32xf32, #tpu.memory_space<vmem>>, vector<8x32xf32>,
    %205 = vector.broadcast %194 : vector<8x1xf32> to vector<8x32xf32>
    %206 = arith.mulf %205, %191 : vector<8x32xf32>
    %207 = arith.index_cast %159 : i32 to index
    %c0_75 = arith.constant 0 : index
    %c0_76 = arith.constant 0 : index
    %208 = vector.load %arg8[%207, %c0_75, %c0_76] : memref<8x8x32xf32, #tpu.memory_space<vmem>>, vector<1x8x32xf32>
    %209 = vector.shape_cast %208 : vector<1x8x32xf32> to vector<8x32xf32>
    %210 = vector.shape_cast %206 : vector<8x32xf32> to vector<1x8x32xf32>
    tpu.vector_store %arg8[%207, %c0_75, %c0_76], %210 {strides = array<i32>} : memref<8x8x32xf32, #tpu.memory_space<vmem>>, vector<1x8x32xf32>,
    %c2_i32 = arith.constant 2 : i32
    %c0_77 = arith.constant 0 : index
    %c0_78 = arith.constant 0 : index
    %211 = vector.load %arg9[%c0_77, %c0_78] : memref<8x32xf32, #tpu.memory_space<vmem>>, vector<8x32xf32>
    %c0_79 = arith.constant 0 : index
    %c0_80 = arith.constant 0 : index
    %212 = vector.load %arg10[%c0_79, %c0_80] : memref<8x32xf32, #tpu.memory_space<vmem>>, vector<8x32xf32>
    %213 = arith.index_cast %c2_i32 : i32 to index
    %c0_81 = arith.constant 0 : index
    %c0_82 = arith.constant 0 : index
    %214 = vector.load %arg1[%213, %c0_81, %c0_82] : memref<8x8x128xf32, #tpu.memory_space<vmem>>, vector<1x8x128xf32>
    %215 = vector.shape_cast %214 : vector<1x8x128xf32> to vector<8x128xf32>
    %cst_83 = arith.constant dense<0.000000e+00> : vector<8x128xf32>
    %216 = tpu.matmul %211, %3, %cst_83 {dimension_numbers = #tpu.dot_dimension_numbers<[1], [0], [0], [1], [0, 0, 1, 1], [], []>} : vector<8x32xf32>, vector<32x128xf32>, vector<8x128xf32> -> vector<8x128xf32>
    %217 = arith.addf %215, %216 : vector<8x128xf32>
    %218 = vector.extract_strided_slice %217 {offsets = [0, 0], sizes = [8, 32], strides = [1, 1]} : vector<8x128xf32> to vector<8x32xf32>
    %219 = arith.negf %218 : vector<8x32xf32>
    %220 = math.exp %219 : vector<8x32xf32>
    %cst_84 = arith.constant 1.000000e+00 : f32
    %221 = vector.broadcast %cst_84 : f32 to vector<8x32xf32>
    %222 = arith.addf %221, %220 : vector<8x32xf32>
    %223 = arith.divf %221, %222 : vector<8x32xf32>
    %224 = vector.extract_strided_slice %217 {offsets = [0, 32], sizes = [8, 32], strides = [1, 1]} : vector<8x128xf32> to vector<8x32xf32>
    %225 = arith.negf %224 : vector<8x32xf32>
    %226 = math.exp %225 : vector<8x32xf32>
    %cst_85 = arith.constant 1.000000e+00 : f32
    %227 = vector.broadcast %cst_85 : f32 to vector<8x32xf32>
    %228 = arith.addf %227, %226 : vector<8x32xf32>
    %229 = arith.divf %227, %228 : vector<8x32xf32>
    %230 = vector.extract_strided_slice %217 {offsets = [0, 64], sizes = [8, 32], strides = [1, 1]} : vector<8x128xf32> to vector<8x32xf32>
    %231 = math.tanh %230 : vector<8x32xf32>
    %232 = vector.extract_strided_slice %217 {offsets = [0, 96], sizes = [8, 32], strides = [1, 1]} : vector<8x128xf32> to vector<8x32xf32>
    %233 = arith.negf %232 : vector<8x32xf32>
    %234 = math.exp %233 : vector<8x32xf32>
    %cst_86 = arith.constant 1.000000e+00 : f32
    %235 = vector.broadcast %cst_86 : f32 to vector<8x32xf32>
    %236 = arith.addf %235, %234 : vector<8x32xf32>
    %237 = arith.divf %235, %236 : vector<8x32xf32>
    %238 = arith.mulf %229, %212 : vector<8x32xf32>
    %239 = arith.mulf %223, %231 : vector<8x32xf32>
    %240 = arith.addf %238, %239 : vector<8x32xf32>
    %241 = math.tanh %240 : vector<8x32xf32>
    %242 = arith.mulf %237, %241 : vector<8x32xf32>
    %243 = arith.index_cast %c2_i32 : i32 to index
    %c0_87 = arith.constant 0 : index
    %c0_88 = arith.constant 0 : index
    %244 = vector.load %arg3[%243, %c0_87, %c0_88] : memref<8x8x1xf32, #tpu.memory_space<vmem>>, vector<1x8x1xf32>
    %245 = vector.shape_cast %244 : vector<1x8x1xf32> to vector<8x1xf32>
    %246 = arith.subf %242, %211 : vector<8x32xf32>
    %247 = vector.broadcast %245 : vector<8x1xf32> to vector<8x32xf32>
    %248 = arith.mulf %247, %246 : vector<8x32xf32>
    %249 = arith.addf %211, %248 : vector<8x32xf32>
    %c0_89 = arith.constant 0 : index
    %c0_90 = arith.constant 0 : index
    %250 = vector.load %arg9[%c0_89, %c0_90] : memref<8x32xf32, #tpu.memory_space<vmem>>, vector<8x32xf32>
    tpu.vector_store %arg9[%c0_89, %c0_90], %249 {strides = array<i32>} : memref<8x32xf32, #tpu.memory_space<vmem>>, vector<8x32xf32>,
    %251 = arith.subf %240, %212 : vector<8x32xf32>
    %252 = vector.broadcast %245 : vector<8x1xf32> to vector<8x32xf32>
    %253 = arith.mulf %252, %251 : vector<8x32xf32>
    %254 = arith.addf %212, %253 : vector<8x32xf32>
    %c0_91 = arith.constant 0 : index
    %c0_92 = arith.constant 0 : index
    %255 = vector.load %arg10[%c0_91, %c0_92] : memref<8x32xf32, #tpu.memory_space<vmem>>, vector<8x32xf32>
    tpu.vector_store %arg10[%c0_91, %c0_92], %254 {strides = array<i32>} : memref<8x32xf32, #tpu.memory_space<vmem>>, vector<8x32xf32>,
    %256 = vector.broadcast %245 : vector<8x1xf32> to vector<8x32xf32>
    %257 = arith.mulf %256, %242 : vector<8x32xf32>
    %258 = arith.index_cast %c2_i32 : i32 to index
    %c0_93 = arith.constant 0 : index
    %c0_94 = arith.constant 0 : index
    %259 = vector.load %arg7[%258, %c0_93, %c0_94] : memref<8x8x32xf32, #tpu.memory_space<vmem>>, vector<1x8x32xf32>
    %260 = vector.shape_cast %259 : vector<1x8x32xf32> to vector<8x32xf32>
    %261 = vector.shape_cast %257 : vector<8x32xf32> to vector<1x8x32xf32>
    tpu.vector_store %arg7[%258, %c0_93, %c0_94], %261 {strides = array<i32>} : memref<8x8x32xf32, #tpu.memory_space<vmem>>, vector<1x8x32xf32>,
    %c7_i32_95 = arith.constant 7 : i32
    %262 = arith.subi %c7_i32_95, %c2_i32 : i32
    %c0_96 = arith.constant 0 : index
    %c0_97 = arith.constant 0 : index
    %263 = vector.load %arg11[%c0_96, %c0_97] : memref<8x32xf32, #tpu.memory_space<vmem>>, vector<8x32xf32>
    %c0_98 = arith.constant 0 : index
    %c0_99 = arith.constant 0 : index
    %264 = vector.load %arg12[%c0_98, %c0_99] : memref<8x32xf32, #tpu.memory_space<vmem>>, vector<8x32xf32>
    %265 = arith.index_cast %262 : i32 to index
    %c0_100 = arith.constant 0 : index
    %c0_101 = arith.constant 0 : index
    %266 = vector.load %arg2[%265, %c0_100, %c0_101] : memref<8x8x128xf32, #tpu.memory_space<vmem>>, vector<1x8x128xf32>
    %267 = vector.shape_cast %266 : vector<1x8x128xf32> to vector<8x128xf32>
    %cst_102 = arith.constant dense<0.000000e+00> : vector<8x128xf32>
    %268 = tpu.matmul %263, %4, %cst_102 {dimension_numbers = #tpu.dot_dimension_numbers<[1], [0], [0], [1], [0, 0, 1, 1], [], []>} : vector<8x32xf32>, vector<32x128xf32>, vector<8x128xf32> -> vector<8x128xf32>
    %269 = arith.addf %267, %268 : vector<8x128xf32>
    %270 = vector.extract_strided_slice %269 {offsets = [0, 0], sizes = [8, 32], strides = [1, 1]} : vector<8x128xf32> to vector<8x32xf32>
    %271 = arith.negf %270 : vector<8x32xf32>
    %272 = math.exp %271 : vector<8x32xf32>
    %cst_103 = arith.constant 1.000000e+00 : f32
    %273 = vector.broadcast %cst_103 : f32 to vector<8x32xf32>
    %274 = arith.addf %273, %272 : vector<8x32xf32>
    %275 = arith.divf %273, %274 : vector<8x32xf32>
    %276 = vector.extract_strided_slice %269 {offsets = [0, 32], sizes = [8, 32], strides = [1, 1]} : vector<8x128xf32> to vector<8x32xf32>
    %277 = arith.negf %276 : vector<8x32xf32>
    %278 = math.exp %277 : vector<8x32xf32>
    %cst_104 = arith.constant 1.000000e+00 : f32
    %279 = vector.broadcast %cst_104 : f32 to vector<8x32xf32>
    %280 = arith.addf %279, %278 : vector<8x32xf32>
    %281 = arith.divf %279, %280 : vector<8x32xf32>
    %282 = vector.extract_strided_slice %269 {offsets = [0, 64], sizes = [8, 32], strides = [1, 1]} : vector<8x128xf32> to vector<8x32xf32>
    %283 = math.tanh %282 : vector<8x32xf32>
    %284 = vector.extract_strided_slice %269 {offsets = [0, 96], sizes = [8, 32], strides = [1, 1]} : vector<8x128xf32> to vector<8x32xf32>
    %285 = arith.negf %284 : vector<8x32xf32>
    %286 = math.exp %285 : vector<8x32xf32>
    %cst_105 = arith.constant 1.000000e+00 : f32
    %287 = vector.broadcast %cst_105 : f32 to vector<8x32xf32>
    %288 = arith.addf %287, %286 : vector<8x32xf32>
    %289 = arith.divf %287, %288 : vector<8x32xf32>
    %290 = arith.mulf %281, %264 : vector<8x32xf32>
    %291 = arith.mulf %275, %283 : vector<8x32xf32>
    %292 = arith.addf %290, %291 : vector<8x32xf32>
    %293 = math.tanh %292 : vector<8x32xf32>
    %294 = arith.mulf %289, %293 : vector<8x32xf32>
    %295 = arith.index_cast %262 : i32 to index
    %c0_106 = arith.constant 0 : index
    %c0_107 = arith.constant 0 : index
    %296 = vector.load %arg4[%295, %c0_106, %c0_107] : memref<8x8x1xf32, #tpu.memory_space<vmem>>, vector<1x8x1xf32>
    %297 = vector.shape_cast %296 : vector<1x8x1xf32> to vector<8x1xf32>
    %298 = arith.subf %294, %263 : vector<8x32xf32>
    %299 = vector.broadcast %297 : vector<8x1xf32> to vector<8x32xf32>
    %300 = arith.mulf %299, %298 : vector<8x32xf32>
    %301 = arith.addf %263, %300 : vector<8x32xf32>
    %c0_108 = arith.constant 0 : index
    %c0_109 = arith.constant 0 : index
    %302 = vector.load %arg11[%c0_108, %c0_109] : memref<8x32xf32, #tpu.memory_space<vmem>>, vector<8x32xf32>
    tpu.vector_store %arg11[%c0_108, %c0_109], %301 {strides = array<i32>} : memref<8x32xf32, #tpu.memory_space<vmem>>, vector<8x32xf32>,
    %303 = arith.subf %292, %264 : vector<8x32xf32>
    %304 = vector.broadcast %297 : vector<8x1xf32> to vector<8x32xf32>
    %305 = arith.mulf %304, %303 : vector<8x32xf32>
    %306 = arith.addf %264, %305 : vector<8x32xf32>
    %c0_110 = arith.constant 0 : index
    %c0_111 = arith.constant 0 : index
    %307 = vector.load %arg12[%c0_110, %c0_111] : memref<8x32xf32, #tpu.memory_space<vmem>>, vector<8x32xf32>
    tpu.vector_store %arg12[%c0_110, %c0_111], %306 {strides = array<i32>} : memref<8x32xf32, #tpu.memory_space<vmem>>, vector<8x32xf32>,
    %308 = vector.broadcast %297 : vector<8x1xf32> to vector<8x32xf32>
    %309 = arith.mulf %308, %294 : vector<8x32xf32>
    %310 = arith.index_cast %262 : i32 to index
    %c0_112 = arith.constant 0 : index
    %c0_113 = arith.constant 0 : index
    %311 = vector.load %arg8[%310, %c0_112, %c0_113] : memref<8x8x32xf32, #tpu.memory_space<vmem>>, vector<1x8x32xf32>
    %312 = vector.shape_cast %311 : vector<1x8x32xf32> to vector<8x32xf32>
    %313 = vector.shape_cast %309 : vector<8x32xf32> to vector<1x8x32xf32>
    tpu.vector_store %arg8[%310, %c0_112, %c0_113], %313 {strides = array<i32>} : memref<8x8x32xf32, #tpu.memory_space<vmem>>, vector<1x8x32xf32>,
    %c3_i32 = arith.constant 3 : i32
    %c0_114 = arith.constant 0 : index
    %c0_115 = arith.constant 0 : index
    %314 = vector.load %arg9[%c0_114, %c0_115] : memref<8x32xf32, #tpu.memory_space<vmem>>, vector<8x32xf32>
    %c0_116 = arith.constant 0 : index
    %c0_117 = arith.constant 0 : index
    %315 = vector.load %arg10[%c0_116, %c0_117] : memref<8x32xf32, #tpu.memory_space<vmem>>, vector<8x32xf32>
    %316 = arith.index_cast %c3_i32 : i32 to index
    %c0_118 = arith.constant 0 : index
    %c0_119 = arith.constant 0 : index
    %317 = vector.load %arg1[%316, %c0_118, %c0_119] : memref<8x8x128xf32, #tpu.memory_space<vmem>>, vector<1x8x128xf32>
    %318 = vector.shape_cast %317 : vector<1x8x128xf32> to vector<8x128xf32>
    %cst_120 = arith.constant dense<0.000000e+00> : vector<8x128xf32>
    %319 = tpu.matmul %314, %3, %cst_120 {dimension_numbers = #tpu.dot_dimension_numbers<[1], [0], [0], [1], [0, 0, 1, 1], [], []>} : vector<8x32xf32>, vector<32x128xf32>, vector<8x128xf32> -> vector<8x128xf32>
    %320 = arith.addf %318, %319 : vector<8x128xf32>
    %321 = vector.extract_strided_slice %320 {offsets = [0, 0], sizes = [8, 32], strides = [1, 1]} : vector<8x128xf32> to vector<8x32xf32>
    %322 = arith.negf %321 : vector<8x32xf32>
    %323 = math.exp %322 : vector<8x32xf32>
    %cst_121 = arith.constant 1.000000e+00 : f32
    %324 = vector.broadcast %cst_121 : f32 to vector<8x32xf32>
    %325 = arith.addf %324, %323 : vector<8x32xf32>
    %326 = arith.divf %324, %325 : vector<8x32xf32>
    %327 = vector.extract_strided_slice %320 {offsets = [0, 32], sizes = [8, 32], strides = [1, 1]} : vector<8x128xf32> to vector<8x32xf32>
    %328 = arith.negf %327 : vector<8x32xf32>
    %329 = math.exp %328 : vector<8x32xf32>
    %cst_122 = arith.constant 1.000000e+00 : f32
    %330 = vector.broadcast %cst_122 : f32 to vector<8x32xf32>
    %331 = arith.addf %330, %329 : vector<8x32xf32>
    %332 = arith.divf %330, %331 : vector<8x32xf32>
    %333 = vector.extract_strided_slice %320 {offsets = [0, 64], sizes = [8, 32], strides = [1, 1]} : vector<8x128xf32> to vector<8x32xf32>
    %334 = math.tanh %333 : vector<8x32xf32>
    %335 = vector.extract_strided_slice %320 {offsets = [0, 96], sizes = [8, 32], strides = [1, 1]} : vector<8x128xf32> to vector<8x32xf32>
    %336 = arith.negf %335 : vector<8x32xf32>
    %337 = math.exp %336 : vector<8x32xf32>
    %cst_123 = arith.constant 1.000000e+00 : f32
    %338 = vector.broadcast %cst_123 : f32 to vector<8x32xf32>
    %339 = arith.addf %338, %337 : vector<8x32xf32>
    %340 = arith.divf %338, %339 : vector<8x32xf32>
    %341 = arith.mulf %332, %315 : vector<8x32xf32>
    %342 = arith.mulf %326, %334 : vector<8x32xf32>
    %343 = arith.addf %341, %342 : vector<8x32xf32>
    %344 = math.tanh %343 : vector<8x32xf32>
    %345 = arith.mulf %340, %344 : vector<8x32xf32>
    %346 = arith.index_cast %c3_i32 : i32 to index
    %c0_124 = arith.constant 0 : index
    %c0_125 = arith.constant 0 : index
    %347 = vector.load %arg3[%346, %c0_124, %c0_125] : memref<8x8x1xf32, #tpu.memory_space<vmem>>, vector<1x8x1xf32>
    %348 = vector.shape_cast %347 : vector<1x8x1xf32> to vector<8x1xf32>
    %349 = arith.subf %345, %314 : vector<8x32xf32>
    %350 = vector.broadcast %348 : vector<8x1xf32> to vector<8x32xf32>
    %351 = arith.mulf %350, %349 : vector<8x32xf32>
    %352 = arith.addf %314, %351 : vector<8x32xf32>
    %c0_126 = arith.constant 0 : index
    %c0_127 = arith.constant 0 : index
    %353 = vector.load %arg9[%c0_126, %c0_127] : memref<8x32xf32, #tpu.memory_space<vmem>>, vector<8x32xf32>
    tpu.vector_store %arg9[%c0_126, %c0_127], %352 {strides = array<i32>} : memref<8x32xf32, #tpu.memory_space<vmem>>, vector<8x32xf32>,
    %354 = arith.subf %343, %315 : vector<8x32xf32>
    %355 = vector.broadcast %348 : vector<8x1xf32> to vector<8x32xf32>
    %356 = arith.mulf %355, %354 : vector<8x32xf32>
    %357 = arith.addf %315, %356 : vector<8x32xf32>
    %c0_128 = arith.constant 0 : index
    %c0_129 = arith.constant 0 : index
    %358 = vector.load %arg10[%c0_128, %c0_129] : memref<8x32xf32, #tpu.memory_space<vmem>>, vector<8x32xf32>
    tpu.vector_store %arg10[%c0_128, %c0_129], %357 {strides = array<i32>} : memref<8x32xf32, #tpu.memory_space<vmem>>, vector<8x32xf32>,
    %359 = vector.broadcast %348 : vector<8x1xf32> to vector<8x32xf32>
    %360 = arith.mulf %359, %345 : vector<8x32xf32>
    %361 = arith.index_cast %c3_i32 : i32 to index
    %c0_130 = arith.constant 0 : index
    %c0_131 = arith.constant 0 : index
    %362 = vector.load %arg7[%361, %c0_130, %c0_131] : memref<8x8x32xf32, #tpu.memory_space<vmem>>, vector<1x8x32xf32>
    %363 = vector.shape_cast %362 : vector<1x8x32xf32> to vector<8x32xf32>
    %364 = vector.shape_cast %360 : vector<8x32xf32> to vector<1x8x32xf32>
    tpu.vector_store %arg7[%361, %c0_130, %c0_131], %364 {strides = array<i32>} : memref<8x8x32xf32, #tpu.memory_space<vmem>>, vector<1x8x32xf32>,
    %c7_i32_132 = arith.constant 7 : i32
    %365 = arith.subi %c7_i32_132, %c3_i32 : i32
    %c0_133 = arith.constant 0 : index
    %c0_134 = arith.constant 0 : index
    %366 = vector.load %arg11[%c0_133, %c0_134] : memref<8x32xf32, #tpu.memory_space<vmem>>, vector<8x32xf32>
    %c0_135 = arith.constant 0 : index
    %c0_136 = arith.constant 0 : index
    %367 = vector.load %arg12[%c0_135, %c0_136] : memref<8x32xf32, #tpu.memory_space<vmem>>, vector<8x32xf32>
    %368 = arith.index_cast %365 : i32 to index
    %c0_137 = arith.constant 0 : index
    %c0_138 = arith.constant 0 : index
    %369 = vector.load %arg2[%368, %c0_137, %c0_138] : memref<8x8x128xf32, #tpu.memory_space<vmem>>, vector<1x8x128xf32>
    %370 = vector.shape_cast %369 : vector<1x8x128xf32> to vector<8x128xf32>
    %cst_139 = arith.constant dense<0.000000e+00> : vector<8x128xf32>
    %371 = tpu.matmul %366, %4, %cst_139 {dimension_numbers = #tpu.dot_dimension_numbers<[1], [0], [0], [1], [0, 0, 1, 1], [], []>} : vector<8x32xf32>, vector<32x128xf32>, vector<8x128xf32> -> vector<8x128xf32>
    %372 = arith.addf %370, %371 : vector<8x128xf32>
    %373 = vector.extract_strided_slice %372 {offsets = [0, 0], sizes = [8, 32], strides = [1, 1]} : vector<8x128xf32> to vector<8x32xf32>
    %374 = arith.negf %373 : vector<8x32xf32>
    %375 = math.exp %374 : vector<8x32xf32>
    %cst_140 = arith.constant 1.000000e+00 : f32
    %376 = vector.broadcast %cst_140 : f32 to vector<8x32xf32>
    %377 = arith.addf %376, %375 : vector<8x32xf32>
    %378 = arith.divf %376, %377 : vector<8x32xf32>
    %379 = vector.extract_strided_slice %372 {offsets = [0, 32], sizes = [8, 32], strides = [1, 1]} : vector<8x128xf32> to vector<8x32xf32>
    %380 = arith.negf %379 : vector<8x32xf32>
    %381 = math.exp %380 : vector<8x32xf32>
    %cst_141 = arith.constant 1.000000e+00 : f32
    %382 = vector.broadcast %cst_141 : f32 to vector<8x32xf32>
    %383 = arith.addf %382, %381 : vector<8x32xf32>
    %384 = arith.divf %382, %383 : vector<8x32xf32>
    %385 = vector.extract_strided_slice %372 {offsets = [0, 64], sizes = [8, 32], strides = [1, 1]} : vector<8x128xf32> to vector<8x32xf32>
    %386 = math.tanh %385 : vector<8x32xf32>
    %387 = vector.extract_strided_slice %372 {offsets = [0, 96], sizes = [8, 32], strides = [1, 1]} : vector<8x128xf32> to vector<8x32xf32>
    %388 = arith.negf %387 : vector<8x32xf32>
    %389 = math.exp %388 : vector<8x32xf32>
    %cst_142 = arith.constant 1.000000e+00 : f32
    %390 = vector.broadcast %cst_142 : f32 to vector<8x32xf32>
    %391 = arith.addf %390, %389 : vector<8x32xf32>
    %392 = arith.divf %390, %391 : vector<8x32xf32>
    %393 = arith.mulf %384, %367 : vector<8x32xf32>
    %394 = arith.mulf %378, %386 : vector<8x32xf32>
    %395 = arith.addf %393, %394 : vector<8x32xf32>
    %396 = math.tanh %395 : vector<8x32xf32>
    %397 = arith.mulf %392, %396 : vector<8x32xf32>
    %398 = arith.index_cast %365 : i32 to index
    %c0_143 = arith.constant 0 : index
    %c0_144 = arith.constant 0 : index
    %399 = vector.load %arg4[%398, %c0_143, %c0_144] : memref<8x8x1xf32, #tpu.memory_space<vmem>>, vector<1x8x1xf32>
    %400 = vector.shape_cast %399 : vector<1x8x1xf32> to vector<8x1xf32>
    %401 = arith.subf %397, %366 : vector<8x32xf32>
    %402 = vector.broadcast %400 : vector<8x1xf32> to vector<8x32xf32>
    %403 = arith.mulf %402, %401 : vector<8x32xf32>
    %404 = arith.addf %366, %403 : vector<8x32xf32>
    %c0_145 = arith.constant 0 : index
    %c0_146 = arith.constant 0 : index
    %405 = vector.load %arg11[%c0_145, %c0_146] : memref<8x32xf32, #tpu.memory_space<vmem>>, vector<8x32xf32>
    tpu.vector_store %arg11[%c0_145, %c0_146], %404 {strides = array<i32>} : memref<8x32xf32, #tpu.memory_space<vmem>>, vector<8x32xf32>,
    %406 = arith.subf %395, %367 : vector<8x32xf32>
    %407 = vector.broadcast %400 : vector<8x1xf32> to vector<8x32xf32>
    %408 = arith.mulf %407, %406 : vector<8x32xf32>
    %409 = arith.addf %367, %408 : vector<8x32xf32>
    %c0_147 = arith.constant 0 : index
    %c0_148 = arith.constant 0 : index
    %410 = vector.load %arg12[%c0_147, %c0_148] : memref<8x32xf32, #tpu.memory_space<vmem>>, vector<8x32xf32>
    tpu.vector_store %arg12[%c0_147, %c0_148], %409 {strides = array<i32>} : memref<8x32xf32, #tpu.memory_space<vmem>>, vector<8x32xf32>,
    %411 = vector.broadcast %400 : vector<8x1xf32> to vector<8x32xf32>
    %412 = arith.mulf %411, %397 : vector<8x32xf32>
    %413 = arith.index_cast %365 : i32 to index
    %c0_149 = arith.constant 0 : index
    %c0_150 = arith.constant 0 : index
    %414 = vector.load %arg8[%413, %c0_149, %c0_150] : memref<8x8x32xf32, #tpu.memory_space<vmem>>, vector<1x8x32xf32>
    %415 = vector.shape_cast %414 : vector<1x8x32xf32> to vector<8x32xf32>
    %416 = vector.shape_cast %412 : vector<8x32xf32> to vector<1x8x32xf32>
    tpu.vector_store %arg8[%413, %c0_149, %c0_150], %416 {strides = array<i32>} : memref<8x8x32xf32, #tpu.memory_space<vmem>>, vector<1x8x32xf32>,
    %c4_i32 = arith.constant 4 : i32
    %c0_151 = arith.constant 0 : index
    %c0_152 = arith.constant 0 : index
    %417 = vector.load %arg9[%c0_151, %c0_152] : memref<8x32xf32, #tpu.memory_space<vmem>>, vector<8x32xf32>
    %c0_153 = arith.constant 0 : index
    %c0_154 = arith.constant 0 : index
    %418 = vector.load %arg10[%c0_153, %c0_154] : memref<8x32xf32, #tpu.memory_space<vmem>>, vector<8x32xf32>
    %419 = arith.index_cast %c4_i32 : i32 to index
    %c0_155 = arith.constant 0 : index
    %c0_156 = arith.constant 0 : index
    %420 = vector.load %arg1[%419, %c0_155, %c0_156] : memref<8x8x128xf32, #tpu.memory_space<vmem>>, vector<1x8x128xf32>
    %421 = vector.shape_cast %420 : vector<1x8x128xf32> to vector<8x128xf32>
    %cst_157 = arith.constant dense<0.000000e+00> : vector<8x128xf32>
    %422 = tpu.matmul %417, %3, %cst_157 {dimension_numbers = #tpu.dot_dimension_numbers<[1], [0], [0], [1], [0, 0, 1, 1], [], []>} : vector<8x32xf32>, vector<32x128xf32>, vector<8x128xf32> -> vector<8x128xf32>
    %423 = arith.addf %421, %422 : vector<8x128xf32>
    %424 = vector.extract_strided_slice %423 {offsets = [0, 0], sizes = [8, 32], strides = [1, 1]} : vector<8x128xf32> to vector<8x32xf32>
    %425 = arith.negf %424 : vector<8x32xf32>
    %426 = math.exp %425 : vector<8x32xf32>
    %cst_158 = arith.constant 1.000000e+00 : f32
    %427 = vector.broadcast %cst_158 : f32 to vector<8x32xf32>
    %428 = arith.addf %427, %426 : vector<8x32xf32>
    %429 = arith.divf %427, %428 : vector<8x32xf32>
    %430 = vector.extract_strided_slice %423 {offsets = [0, 32], sizes = [8, 32], strides = [1, 1]} : vector<8x128xf32> to vector<8x32xf32>
    %431 = arith.negf %430 : vector<8x32xf32>
    %432 = math.exp %431 : vector<8x32xf32>
    %cst_159 = arith.constant 1.000000e+00 : f32
    %433 = vector.broadcast %cst_159 : f32 to vector<8x32xf32>
    %434 = arith.addf %433, %432 : vector<8x32xf32>
    %435 = arith.divf %433, %434 : vector<8x32xf32>
    %436 = vector.extract_strided_slice %423 {offsets = [0, 64], sizes = [8, 32], strides = [1, 1]} : vector<8x128xf32> to vector<8x32xf32>
    %437 = math.tanh %436 : vector<8x32xf32>
    %438 = vector.extract_strided_slice %423 {offsets = [0, 96], sizes = [8, 32], strides = [1, 1]} : vector<8x128xf32> to vector<8x32xf32>
    %439 = arith.negf %438 : vector<8x32xf32>
    %440 = math.exp %439 : vector<8x32xf32>
    %cst_160 = arith.constant 1.000000e+00 : f32
    %441 = vector.broadcast %cst_160 : f32 to vector<8x32xf32>
    %442 = arith.addf %441, %440 : vector<8x32xf32>
    %443 = arith.divf %441, %442 : vector<8x32xf32>
    %444 = arith.mulf %435, %418 : vector<8x32xf32>
    %445 = arith.mulf %429, %437 : vector<8x32xf32>
    %446 = arith.addf %444, %445 : vector<8x32xf32>
    %447 = math.tanh %446 : vector<8x32xf32>
    %448 = arith.mulf %443, %447 : vector<8x32xf32>
    %449 = arith.index_cast %c4_i32 : i32 to index
    %c0_161 = arith.constant 0 : index
    %c0_162 = arith.constant 0 : index
    %450 = vector.load %arg3[%449, %c0_161, %c0_162] : memref<8x8x1xf32, #tpu.memory_space<vmem>>, vector<1x8x1xf32>
    %451 = vector.shape_cast %450 : vector<1x8x1xf32> to vector<8x1xf32>
    %452 = arith.subf %448, %417 : vector<8x32xf32>
    %453 = vector.broadcast %451 : vector<8x1xf32> to vector<8x32xf32>
    %454 = arith.mulf %453, %452 : vector<8x32xf32>
    %455 = arith.addf %417, %454 : vector<8x32xf32>
    %c0_163 = arith.constant 0 : index
    %c0_164 = arith.constant 0 : index
    %456 = vector.load %arg9[%c0_163, %c0_164] : memref<8x32xf32, #tpu.memory_space<vmem>>, vector<8x32xf32>
    tpu.vector_store %arg9[%c0_163, %c0_164], %455 {strides = array<i32>} : memref<8x32xf32, #tpu.memory_space<vmem>>, vector<8x32xf32>,
    %457 = arith.subf %446, %418 : vector<8x32xf32>
    %458 = vector.broadcast %451 : vector<8x1xf32> to vector<8x32xf32>
    %459 = arith.mulf %458, %457 : vector<8x32xf32>
    %460 = arith.addf %418, %459 : vector<8x32xf32>
    %c0_165 = arith.constant 0 : index
    %c0_166 = arith.constant 0 : index
    %461 = vector.load %arg10[%c0_165, %c0_166] : memref<8x32xf32, #tpu.memory_space<vmem>>, vector<8x32xf32>
    tpu.vector_store %arg10[%c0_165, %c0_166], %460 {strides = array<i32>} : memref<8x32xf32, #tpu.memory_space<vmem>>, vector<8x32xf32>,
    %462 = vector.broadcast %451 : vector<8x1xf32> to vector<8x32xf32>
    %463 = arith.mulf %462, %448 : vector<8x32xf32>
    %464 = arith.index_cast %c4_i32 : i32 to index
    %c0_167 = arith.constant 0 : index
    %c0_168 = arith.constant 0 : index
    %465 = vector.load %arg7[%464, %c0_167, %c0_168] : memref<8x8x32xf32, #tpu.memory_space<vmem>>, vector<1x8x32xf32>
    %466 = vector.shape_cast %465 : vector<1x8x32xf32> to vector<8x32xf32>
    %467 = vector.shape_cast %463 : vector<8x32xf32> to vector<1x8x32xf32>
    tpu.vector_store %arg7[%464, %c0_167, %c0_168], %467 {strides = array<i32>} : memref<8x8x32xf32, #tpu.memory_space<vmem>>, vector<1x8x32xf32>,
    %c7_i32_169 = arith.constant 7 : i32
    %468 = arith.subi %c7_i32_169, %c4_i32 : i32
    %c0_170 = arith.constant 0 : index
    %c0_171 = arith.constant 0 : index
    %469 = vector.load %arg11[%c0_170, %c0_171] : memref<8x32xf32, #tpu.memory_space<vmem>>, vector<8x32xf32>
    %c0_172 = arith.constant 0 : index
    %c0_173 = arith.constant 0 : index
    %470 = vector.load %arg12[%c0_172, %c0_173] : memref<8x32xf32, #tpu.memory_space<vmem>>, vector<8x32xf32>
    %471 = arith.index_cast %468 : i32 to index
    %c0_174 = arith.constant 0 : index
    %c0_175 = arith.constant 0 : index
    %472 = vector.load %arg2[%471, %c0_174, %c0_175] : memref<8x8x128xf32, #tpu.memory_space<vmem>>, vector<1x8x128xf32>
    %473 = vector.shape_cast %472 : vector<1x8x128xf32> to vector<8x128xf32>
    %cst_176 = arith.constant dense<0.000000e+00> : vector<8x128xf32>
    %474 = tpu.matmul %469, %4, %cst_176 {dimension_numbers = #tpu.dot_dimension_numbers<[1], [0], [0], [1], [0, 0, 1, 1], [], []>} : vector<8x32xf32>, vector<32x128xf32>, vector<8x128xf32> -> vector<8x128xf32>
    %475 = arith.addf %473, %474 : vector<8x128xf32>
    %476 = vector.extract_strided_slice %475 {offsets = [0, 0], sizes = [8, 32], strides = [1, 1]} : vector<8x128xf32> to vector<8x32xf32>
    %477 = arith.negf %476 : vector<8x32xf32>
    %478 = math.exp %477 : vector<8x32xf32>
    %cst_177 = arith.constant 1.000000e+00 : f32
    %479 = vector.broadcast %cst_177 : f32 to vector<8x32xf32>
    %480 = arith.addf %479, %478 : vector<8x32xf32>
    %481 = arith.divf %479, %480 : vector<8x32xf32>
    %482 = vector.extract_strided_slice %475 {offsets = [0, 32], sizes = [8, 32], strides = [1, 1]} : vector<8x128xf32> to vector<8x32xf32>
    %483 = arith.negf %482 : vector<8x32xf32>
    %484 = math.exp %483 : vector<8x32xf32>
    %cst_178 = arith.constant 1.000000e+00 : f32
    %485 = vector.broadcast %cst_178 : f32 to vector<8x32xf32>
    %486 = arith.addf %485, %484 : vector<8x32xf32>
    %487 = arith.divf %485, %486 : vector<8x32xf32>
    %488 = vector.extract_strided_slice %475 {offsets = [0, 64], sizes = [8, 32], strides = [1, 1]} : vector<8x128xf32> to vector<8x32xf32>
    %489 = math.tanh %488 : vector<8x32xf32>
    %490 = vector.extract_strided_slice %475 {offsets = [0, 96], sizes = [8, 32], strides = [1, 1]} : vector<8x128xf32> to vector<8x32xf32>
    %491 = arith.negf %490 : vector<8x32xf32>
    %492 = math.exp %491 : vector<8x32xf32>
    %cst_179 = arith.constant 1.000000e+00 : f32
    %493 = vector.broadcast %cst_179 : f32 to vector<8x32xf32>
    %494 = arith.addf %493, %492 : vector<8x32xf32>
    %495 = arith.divf %493, %494 : vector<8x32xf32>
    %496 = arith.mulf %487, %470 : vector<8x32xf32>
    %497 = arith.mulf %481, %489 : vector<8x32xf32>
    %498 = arith.addf %496, %497 : vector<8x32xf32>
    %499 = math.tanh %498 : vector<8x32xf32>
    %500 = arith.mulf %495, %499 : vector<8x32xf32>
    %501 = arith.index_cast %468 : i32 to index
    %c0_180 = arith.constant 0 : index
    %c0_181 = arith.constant 0 : index
    %502 = vector.load %arg4[%501, %c0_180, %c0_181] : memref<8x8x1xf32, #tpu.memory_space<vmem>>, vector<1x8x1xf32>
    %503 = vector.shape_cast %502 : vector<1x8x1xf32> to vector<8x1xf32>
    %504 = arith.subf %500, %469 : vector<8x32xf32>
    %505 = vector.broadcast %503 : vector<8x1xf32> to vector<8x32xf32>
    %506 = arith.mulf %505, %504 : vector<8x32xf32>
    %507 = arith.addf %469, %506 : vector<8x32xf32>
    %c0_182 = arith.constant 0 : index
    %c0_183 = arith.constant 0 : index
    %508 = vector.load %arg11[%c0_182, %c0_183] : memref<8x32xf32, #tpu.memory_space<vmem>>, vector<8x32xf32>
    tpu.vector_store %arg11[%c0_182, %c0_183], %507 {strides = array<i32>} : memref<8x32xf32, #tpu.memory_space<vmem>>, vector<8x32xf32>,
    %509 = arith.subf %498, %470 : vector<8x32xf32>
    %510 = vector.broadcast %503 : vector<8x1xf32> to vector<8x32xf32>
    %511 = arith.mulf %510, %509 : vector<8x32xf32>
    %512 = arith.addf %470, %511 : vector<8x32xf32>
    %c0_184 = arith.constant 0 : index
    %c0_185 = arith.constant 0 : index
    %513 = vector.load %arg12[%c0_184, %c0_185] : memref<8x32xf32, #tpu.memory_space<vmem>>, vector<8x32xf32>
    tpu.vector_store %arg12[%c0_184, %c0_185], %512 {strides = array<i32>} : memref<8x32xf32, #tpu.memory_space<vmem>>, vector<8x32xf32>,
    %514 = vector.broadcast %503 : vector<8x1xf32> to vector<8x32xf32>
    %515 = arith.mulf %514, %500 : vector<8x32xf32>
    %516 = arith.index_cast %468 : i32 to index
    %c0_186 = arith.constant 0 : index
    %c0_187 = arith.constant 0 : index
    %517 = vector.load %arg8[%516, %c0_186, %c0_187] : memref<8x8x32xf32, #tpu.memory_space<vmem>>, vector<1x8x32xf32>
    %518 = vector.shape_cast %517 : vector<1x8x32xf32> to vector<8x32xf32>
    %519 = vector.shape_cast %515 : vector<8x32xf32> to vector<1x8x32xf32>
    tpu.vector_store %arg8[%516, %c0_186, %c0_187], %519 {strides = array<i32>} : memref<8x8x32xf32, #tpu.memory_space<vmem>>, vector<1x8x32xf32>,
    %c5_i32 = arith.constant 5 : i32
    %c0_188 = arith.constant 0 : index
    %c0_189 = arith.constant 0 : index
    %520 = vector.load %arg9[%c0_188, %c0_189] : memref<8x32xf32, #tpu.memory_space<vmem>>, vector<8x32xf32>
    %c0_190 = arith.constant 0 : index
    %c0_191 = arith.constant 0 : index
    %521 = vector.load %arg10[%c0_190, %c0_191] : memref<8x32xf32, #tpu.memory_space<vmem>>, vector<8x32xf32>
    %522 = arith.index_cast %c5_i32 : i32 to index
    %c0_192 = arith.constant 0 : index
    %c0_193 = arith.constant 0 : index
    %523 = vector.load %arg1[%522, %c0_192, %c0_193] : memref<8x8x128xf32, #tpu.memory_space<vmem>>, vector<1x8x128xf32>
    %524 = vector.shape_cast %523 : vector<1x8x128xf32> to vector<8x128xf32>
    %cst_194 = arith.constant dense<0.000000e+00> : vector<8x128xf32>
    %525 = tpu.matmul %520, %3, %cst_194 {dimension_numbers = #tpu.dot_dimension_numbers<[1], [0], [0], [1], [0, 0, 1, 1], [], []>} : vector<8x32xf32>, vector<32x128xf32>, vector<8x128xf32> -> vector<8x128xf32>
    %526 = arith.addf %524, %525 : vector<8x128xf32>
    %527 = vector.extract_strided_slice %526 {offsets = [0, 0], sizes = [8, 32], strides = [1, 1]} : vector<8x128xf32> to vector<8x32xf32>
    %528 = arith.negf %527 : vector<8x32xf32>
    %529 = math.exp %528 : vector<8x32xf32>
    %cst_195 = arith.constant 1.000000e+00 : f32
    %530 = vector.broadcast %cst_195 : f32 to vector<8x32xf32>
    %531 = arith.addf %530, %529 : vector<8x32xf32>
    %532 = arith.divf %530, %531 : vector<8x32xf32>
    %533 = vector.extract_strided_slice %526 {offsets = [0, 32], sizes = [8, 32], strides = [1, 1]} : vector<8x128xf32> to vector<8x32xf32>
    %534 = arith.negf %533 : vector<8x32xf32>
    %535 = math.exp %534 : vector<8x32xf32>
    %cst_196 = arith.constant 1.000000e+00 : f32
    %536 = vector.broadcast %cst_196 : f32 to vector<8x32xf32>
    %537 = arith.addf %536, %535 : vector<8x32xf32>
    %538 = arith.divf %536, %537 : vector<8x32xf32>
    %539 = vector.extract_strided_slice %526 {offsets = [0, 64], sizes = [8, 32], strides = [1, 1]} : vector<8x128xf32> to vector<8x32xf32>
    %540 = math.tanh %539 : vector<8x32xf32>
    %541 = vector.extract_strided_slice %526 {offsets = [0, 96], sizes = [8, 32], strides = [1, 1]} : vector<8x128xf32> to vector<8x32xf32>
    %542 = arith.negf %541 : vector<8x32xf32>
    %543 = math.exp %542 : vector<8x32xf32>
    %cst_197 = arith.constant 1.000000e+00 : f32
    %544 = vector.broadcast %cst_197 : f32 to vector<8x32xf32>
    %545 = arith.addf %544, %543 : vector<8x32xf32>
    %546 = arith.divf %544, %545 : vector<8x32xf32>
    %547 = arith.mulf %538, %521 : vector<8x32xf32>
    %548 = arith.mulf %532, %540 : vector<8x32xf32>
    %549 = arith.addf %547, %548 : vector<8x32xf32>
    %550 = math.tanh %549 : vector<8x32xf32>
    %551 = arith.mulf %546, %550 : vector<8x32xf32>
    %552 = arith.index_cast %c5_i32 : i32 to index
    %c0_198 = arith.constant 0 : index
    %c0_199 = arith.constant 0 : index
    %553 = vector.load %arg3[%552, %c0_198, %c0_199] : memref<8x8x1xf32, #tpu.memory_space<vmem>>, vector<1x8x1xf32>
    %554 = vector.shape_cast %553 : vector<1x8x1xf32> to vector<8x1xf32>
    %555 = arith.subf %551, %520 : vector<8x32xf32>
    %556 = vector.broadcast %554 : vector<8x1xf32> to vector<8x32xf32>
    %557 = arith.mulf %556, %555 : vector<8x32xf32>
    %558 = arith.addf %520, %557 : vector<8x32xf32>
    %c0_200 = arith.constant 0 : index
    %c0_201 = arith.constant 0 : index
    %559 = vector.load %arg9[%c0_200, %c0_201] : memref<8x32xf32, #tpu.memory_space<vmem>>, vector<8x32xf32>
    tpu.vector_store %arg9[%c0_200, %c0_201], %558 {strides = array<i32>} : memref<8x32xf32, #tpu.memory_space<vmem>>, vector<8x32xf32>,
    %560 = arith.subf %549, %521 : vector<8x32xf32>
    %561 = vector.broadcast %554 : vector<8x1xf32> to vector<8x32xf32>
    %562 = arith.mulf %561, %560 : vector<8x32xf32>
    %563 = arith.addf %521, %562 : vector<8x32xf32>
    %c0_202 = arith.constant 0 : index
    %c0_203 = arith.constant 0 : index
    %564 = vector.load %arg10[%c0_202, %c0_203] : memref<8x32xf32, #tpu.memory_space<vmem>>, vector<8x32xf32>
    tpu.vector_store %arg10[%c0_202, %c0_203], %563 {strides = array<i32>} : memref<8x32xf32, #tpu.memory_space<vmem>>, vector<8x32xf32>,
    %565 = vector.broadcast %554 : vector<8x1xf32> to vector<8x32xf32>
    %566 = arith.mulf %565, %551 : vector<8x32xf32>
    %567 = arith.index_cast %c5_i32 : i32 to index
    %c0_204 = arith.constant 0 : index
    %c0_205 = arith.constant 0 : index
    %568 = vector.load %arg7[%567, %c0_204, %c0_205] : memref<8x8x32xf32, #tpu.memory_space<vmem>>, vector<1x8x32xf32>
    %569 = vector.shape_cast %568 : vector<1x8x32xf32> to vector<8x32xf32>
    %570 = vector.shape_cast %566 : vector<8x32xf32> to vector<1x8x32xf32>
    tpu.vector_store %arg7[%567, %c0_204, %c0_205], %570 {strides = array<i32>} : memref<8x8x32xf32, #tpu.memory_space<vmem>>, vector<1x8x32xf32>,
    %c7_i32_206 = arith.constant 7 : i32
    %571 = arith.subi %c7_i32_206, %c5_i32 : i32
    %c0_207 = arith.constant 0 : index
    %c0_208 = arith.constant 0 : index
    %572 = vector.load %arg11[%c0_207, %c0_208] : memref<8x32xf32, #tpu.memory_space<vmem>>, vector<8x32xf32>
    %c0_209 = arith.constant 0 : index
    %c0_210 = arith.constant 0 : index
    %573 = vector.load %arg12[%c0_209, %c0_210] : memref<8x32xf32, #tpu.memory_space<vmem>>, vector<8x32xf32>
    %574 = arith.index_cast %571 : i32 to index
    %c0_211 = arith.constant 0 : index
    %c0_212 = arith.constant 0 : index
    %575 = vector.load %arg2[%574, %c0_211, %c0_212] : memref<8x8x128xf32, #tpu.memory_space<vmem>>, vector<1x8x128xf32>
    %576 = vector.shape_cast %575 : vector<1x8x128xf32> to vector<8x128xf32>
    %cst_213 = arith.constant dense<0.000000e+00> : vector<8x128xf32>
    %577 = tpu.matmul %572, %4, %cst_213 {dimension_numbers = #tpu.dot_dimension_numbers<[1], [0], [0], [1], [0, 0, 1, 1], [], []>} : vector<8x32xf32>, vector<32x128xf32>, vector<8x128xf32> -> vector<8x128xf32>
    %578 = arith.addf %576, %577 : vector<8x128xf32>
    %579 = vector.extract_strided_slice %578 {offsets = [0, 0], sizes = [8, 32], strides = [1, 1]} : vector<8x128xf32> to vector<8x32xf32>
    %580 = arith.negf %579 : vector<8x32xf32>
    %581 = math.exp %580 : vector<8x32xf32>
    %cst_214 = arith.constant 1.000000e+00 : f32
    %582 = vector.broadcast %cst_214 : f32 to vector<8x32xf32>
    %583 = arith.addf %582, %581 : vector<8x32xf32>
    %584 = arith.divf %582, %583 : vector<8x32xf32>
    %585 = vector.extract_strided_slice %578 {offsets = [0, 32], sizes = [8, 32], strides = [1, 1]} : vector<8x128xf32> to vector<8x32xf32>
    %586 = arith.negf %585 : vector<8x32xf32>
    %587 = math.exp %586 : vector<8x32xf32>
    %cst_215 = arith.constant 1.000000e+00 : f32
    %588 = vector.broadcast %cst_215 : f32 to vector<8x32xf32>
    %589 = arith.addf %588, %587 : vector<8x32xf32>
    %590 = arith.divf %588, %589 : vector<8x32xf32>
    %591 = vector.extract_strided_slice %578 {offsets = [0, 64], sizes = [8, 32], strides = [1, 1]} : vector<8x128xf32> to vector<8x32xf32>
    %592 = math.tanh %591 : vector<8x32xf32>
    %593 = vector.extract_strided_slice %578 {offsets = [0, 96], sizes = [8, 32], strides = [1, 1]} : vector<8x128xf32> to vector<8x32xf32>
    %594 = arith.negf %593 : vector<8x32xf32>
    %595 = math.exp %594 : vector<8x32xf32>
    %cst_216 = arith.constant 1.000000e+00 : f32
    %596 = vector.broadcast %cst_216 : f32 to vector<8x32xf32>
    %597 = arith.addf %596, %595 : vector<8x32xf32>
    %598 = arith.divf %596, %597 : vector<8x32xf32>
    %599 = arith.mulf %590, %573 : vector<8x32xf32>
    %600 = arith.mulf %584, %592 : vector<8x32xf32>
    %601 = arith.addf %599, %600 : vector<8x32xf32>
    %602 = math.tanh %601 : vector<8x32xf32>
    %603 = arith.mulf %598, %602 : vector<8x32xf32>
    %604 = arith.index_cast %571 : i32 to index
    %c0_217 = arith.constant 0 : index
    %c0_218 = arith.constant 0 : index
    %605 = vector.load %arg4[%604, %c0_217, %c0_218] : memref<8x8x1xf32, #tpu.memory_space<vmem>>, vector<1x8x1xf32>
    %606 = vector.shape_cast %605 : vector<1x8x1xf32> to vector<8x1xf32>
    %607 = arith.subf %603, %572 : vector<8x32xf32>
    %608 = vector.broadcast %606 : vector<8x1xf32> to vector<8x32xf32>
    %609 = arith.mulf %608, %607 : vector<8x32xf32>
    %610 = arith.addf %572, %609 : vector<8x32xf32>
    %c0_219 = arith.constant 0 : index
    %c0_220 = arith.constant 0 : index
    %611 = vector.load %arg11[%c0_219, %c0_220] : memref<8x32xf32, #tpu.memory_space<vmem>>, vector<8x32xf32>
    tpu.vector_store %arg11[%c0_219, %c0_220], %610 {strides = array<i32>} : memref<8x32xf32, #tpu.memory_space<vmem>>, vector<8x32xf32>,
    %612 = arith.subf %601, %573 : vector<8x32xf32>
    %613 = vector.broadcast %606 : vector<8x1xf32> to vector<8x32xf32>
    %614 = arith.mulf %613, %612 : vector<8x32xf32>
    %615 = arith.addf %573, %614 : vector<8x32xf32>
    %c0_221 = arith.constant 0 : index
    %c0_222 = arith.constant 0 : index
    %616 = vector.load %arg12[%c0_221, %c0_222] : memref<8x32xf32, #tpu.memory_space<vmem>>, vector<8x32xf32>
    tpu.vector_store %arg12[%c0_221, %c0_222], %615 {strides = array<i32>} : memref<8x32xf32, #tpu.memory_space<vmem>>, vector<8x32xf32>,
    %617 = vector.broadcast %606 : vector<8x1xf32> to vector<8x32xf32>
    %618 = arith.mulf %617, %603 : vector<8x32xf32>
    %619 = arith.index_cast %571 : i32 to index
    %c0_223 = arith.constant 0 : index
    %c0_224 = arith.constant 0 : index
    %620 = vector.load %arg8[%619, %c0_223, %c0_224] : memref<8x8x32xf32, #tpu.memory_space<vmem>>, vector<1x8x32xf32>
    %621 = vector.shape_cast %620 : vector<1x8x32xf32> to vector<8x32xf32>
    %622 = vector.shape_cast %618 : vector<8x32xf32> to vector<1x8x32xf32>
    tpu.vector_store %arg8[%619, %c0_223, %c0_224], %622 {strides = array<i32>} : memref<8x8x32xf32, #tpu.memory_space<vmem>>, vector<1x8x32xf32>,
    %c6_i32 = arith.constant 6 : i32
    %c0_225 = arith.constant 0 : index
    %c0_226 = arith.constant 0 : index
    %623 = vector.load %arg9[%c0_225, %c0_226] : memref<8x32xf32, #tpu.memory_space<vmem>>, vector<8x32xf32>
    %c0_227 = arith.constant 0 : index
    %c0_228 = arith.constant 0 : index
    %624 = vector.load %arg10[%c0_227, %c0_228] : memref<8x32xf32, #tpu.memory_space<vmem>>, vector<8x32xf32>
    %625 = arith.index_cast %c6_i32 : i32 to index
    %c0_229 = arith.constant 0 : index
    %c0_230 = arith.constant 0 : index
    %626 = vector.load %arg1[%625, %c0_229, %c0_230] : memref<8x8x128xf32, #tpu.memory_space<vmem>>, vector<1x8x128xf32>
    %627 = vector.shape_cast %626 : vector<1x8x128xf32> to vector<8x128xf32>
    %cst_231 = arith.constant dense<0.000000e+00> : vector<8x128xf32>
    %628 = tpu.matmul %623, %3, %cst_231 {dimension_numbers = #tpu.dot_dimension_numbers<[1], [0], [0], [1], [0, 0, 1, 1], [], []>} : vector<8x32xf32>, vector<32x128xf32>, vector<8x128xf32> -> vector<8x128xf32>
    %629 = arith.addf %627, %628 : vector<8x128xf32>
    %630 = vector.extract_strided_slice %629 {offsets = [0, 0], sizes = [8, 32], strides = [1, 1]} : vector<8x128xf32> to vector<8x32xf32>
    %631 = arith.negf %630 : vector<8x32xf32>
    %632 = math.exp %631 : vector<8x32xf32>
    %cst_232 = arith.constant 1.000000e+00 : f32
    %633 = vector.broadcast %cst_232 : f32 to vector<8x32xf32>
    %634 = arith.addf %633, %632 : vector<8x32xf32>
    %635 = arith.divf %633, %634 : vector<8x32xf32>
    %636 = vector.extract_strided_slice %629 {offsets = [0, 32], sizes = [8, 32], strides = [1, 1]} : vector<8x128xf32> to vector<8x32xf32>
    %637 = arith.negf %636 : vector<8x32xf32>
    %638 = math.exp %637 : vector<8x32xf32>
    %cst_233 = arith.constant 1.000000e+00 : f32
    %639 = vector.broadcast %cst_233 : f32 to vector<8x32xf32>
    %640 = arith.addf %639, %638 : vector<8x32xf32>
    %641 = arith.divf %639, %640 : vector<8x32xf32>
    %642 = vector.extract_strided_slice %629 {offsets = [0, 64], sizes = [8, 32], strides = [1, 1]} : vector<8x128xf32> to vector<8x32xf32>
    %643 = math.tanh %642 : vector<8x32xf32>
    %644 = vector.extract_strided_slice %629 {offsets = [0, 96], sizes = [8, 32], strides = [1, 1]} : vector<8x128xf32> to vector<8x32xf32>
    %645 = arith.negf %644 : vector<8x32xf32>
    %646 = math.exp %645 : vector<8x32xf32>
    %cst_234 = arith.constant 1.000000e+00 : f32
    %647 = vector.broadcast %cst_234 : f32 to vector<8x32xf32>
    %648 = arith.addf %647, %646 : vector<8x32xf32>
    %649 = arith.divf %647, %648 : vector<8x32xf32>
    %650 = arith.mulf %641, %624 : vector<8x32xf32>
    %651 = arith.mulf %635, %643 : vector<8x32xf32>
    %652 = arith.addf %650, %651 : vector<8x32xf32>
    %653 = math.tanh %652 : vector<8x32xf32>
    %654 = arith.mulf %649, %653 : vector<8x32xf32>
    %655 = arith.index_cast %c6_i32 : i32 to index
    %c0_235 = arith.constant 0 : index
    %c0_236 = arith.constant 0 : index
    %656 = vector.load %arg3[%655, %c0_235, %c0_236] : memref<8x8x1xf32, #tpu.memory_space<vmem>>, vector<1x8x1xf32>
    %657 = vector.shape_cast %656 : vector<1x8x1xf32> to vector<8x1xf32>
    %658 = arith.subf %654, %623 : vector<8x32xf32>
    %659 = vector.broadcast %657 : vector<8x1xf32> to vector<8x32xf32>
    %660 = arith.mulf %659, %658 : vector<8x32xf32>
    %661 = arith.addf %623, %660 : vector<8x32xf32>
    %c0_237 = arith.constant 0 : index
    %c0_238 = arith.constant 0 : index
    %662 = vector.load %arg9[%c0_237, %c0_238] : memref<8x32xf32, #tpu.memory_space<vmem>>, vector<8x32xf32>
    tpu.vector_store %arg9[%c0_237, %c0_238], %661 {strides = array<i32>} : memref<8x32xf32, #tpu.memory_space<vmem>>, vector<8x32xf32>,
    %663 = arith.subf %652, %624 : vector<8x32xf32>
    %664 = vector.broadcast %657 : vector<8x1xf32> to vector<8x32xf32>
    %665 = arith.mulf %664, %663 : vector<8x32xf32>
    %666 = arith.addf %624, %665 : vector<8x32xf32>
    %c0_239 = arith.constant 0 : index
    %c0_240 = arith.constant 0 : index
    %667 = vector.load %arg10[%c0_239, %c0_240] : memref<8x32xf32, #tpu.memory_space<vmem>>, vector<8x32xf32>
    tpu.vector_store %arg10[%c0_239, %c0_240], %666 {strides = array<i32>} : memref<8x32xf32, #tpu.memory_space<vmem>>, vector<8x32xf32>,
    %668 = vector.broadcast %657 : vector<8x1xf32> to vector<8x32xf32>
    %669 = arith.mulf %668, %654 : vector<8x32xf32>
    %670 = arith.index_cast %c6_i32 : i32 to index
    %c0_241 = arith.constant 0 : index
    %c0_242 = arith.constant 0 : index
    %671 = vector.load %arg7[%670, %c0_241, %c0_242] : memref<8x8x32xf32, #tpu.memory_space<vmem>>, vector<1x8x32xf32>
    %672 = vector.shape_cast %671 : vector<1x8x32xf32> to vector<8x32xf32>
    %673 = vector.shape_cast %669 : vector<8x32xf32> to vector<1x8x32xf32>
    tpu.vector_store %arg7[%670, %c0_241, %c0_242], %673 {strides = array<i32>} : memref<8x8x32xf32, #tpu.memory_space<vmem>>, vector<1x8x32xf32>,
    %c7_i32_243 = arith.constant 7 : i32
    %674 = arith.subi %c7_i32_243, %c6_i32 : i32
    %c0_244 = arith.constant 0 : index
    %c0_245 = arith.constant 0 : index
    %675 = vector.load %arg11[%c0_244, %c0_245] : memref<8x32xf32, #tpu.memory_space<vmem>>, vector<8x32xf32>
    %c0_246 = arith.constant 0 : index
    %c0_247 = arith.constant 0 : index
    %676 = vector.load %arg12[%c0_246, %c0_247] : memref<8x32xf32, #tpu.memory_space<vmem>>, vector<8x32xf32>
    %677 = arith.index_cast %674 : i32 to index
    %c0_248 = arith.constant 0 : index
    %c0_249 = arith.constant 0 : index
    %678 = vector.load %arg2[%677, %c0_248, %c0_249] : memref<8x8x128xf32, #tpu.memory_space<vmem>>, vector<1x8x128xf32>
    %679 = vector.shape_cast %678 : vector<1x8x128xf32> to vector<8x128xf32>
    %cst_250 = arith.constant dense<0.000000e+00> : vector<8x128xf32>
    %680 = tpu.matmul %675, %4, %cst_250 {dimension_numbers = #tpu.dot_dimension_numbers<[1], [0], [0], [1], [0, 0, 1, 1], [], []>} : vector<8x32xf32>, vector<32x128xf32>, vector<8x128xf32> -> vector<8x128xf32>
    %681 = arith.addf %679, %680 : vector<8x128xf32>
    %682 = vector.extract_strided_slice %681 {offsets = [0, 0], sizes = [8, 32], strides = [1, 1]} : vector<8x128xf32> to vector<8x32xf32>
    %683 = arith.negf %682 : vector<8x32xf32>
    %684 = math.exp %683 : vector<8x32xf32>
    %cst_251 = arith.constant 1.000000e+00 : f32
    %685 = vector.broadcast %cst_251 : f32 to vector<8x32xf32>
    %686 = arith.addf %685, %684 : vector<8x32xf32>
    %687 = arith.divf %685, %686 : vector<8x32xf32>
    %688 = vector.extract_strided_slice %681 {offsets = [0, 32], sizes = [8, 32], strides = [1, 1]} : vector<8x128xf32> to vector<8x32xf32>
    %689 = arith.negf %688 : vector<8x32xf32>
    %690 = math.exp %689 : vector<8x32xf32>
    %cst_252 = arith.constant 1.000000e+00 : f32
    %691 = vector.broadcast %cst_252 : f32 to vector<8x32xf32>
    %692 = arith.addf %691, %690 : vector<8x32xf32>
    %693 = arith.divf %691, %692 : vector<8x32xf32>
    %694 = vector.extract_strided_slice %681 {offsets = [0, 64], sizes = [8, 32], strides = [1, 1]} : vector<8x128xf32> to vector<8x32xf32>
    %695 = math.tanh %694 : vector<8x32xf32>
    %696 = vector.extract_strided_slice %681 {offsets = [0, 96], sizes = [8, 32], strides = [1, 1]} : vector<8x128xf32> to vector<8x32xf32>
    %697 = arith.negf %696 : vector<8x32xf32>
    %698 = math.exp %697 : vector<8x32xf32>
    %cst_253 = arith.constant 1.000000e+00 : f32
    %699 = vector.broadcast %cst_253 : f32 to vector<8x32xf32>
    %700 = arith.addf %699, %698 : vector<8x32xf32>
    %701 = arith.divf %699, %700 : vector<8x32xf32>
    %702 = arith.mulf %693, %676 : vector<8x32xf32>
    %703 = arith.mulf %687, %695 : vector<8x32xf32>
    %704 = arith.addf %702, %703 : vector<8x32xf32>
    %705 = math.tanh %704 : vector<8x32xf32>
    %706 = arith.mulf %701, %705 : vector<8x32xf32>
    %707 = arith.index_cast %674 : i32 to index
    %c0_254 = arith.constant 0 : index
    %c0_255 = arith.constant 0 : index
    %708 = vector.load %arg4[%707, %c0_254, %c0_255] : memref<8x8x1xf32, #tpu.memory_space<vmem>>, vector<1x8x1xf32>
    %709 = vector.shape_cast %708 : vector<1x8x1xf32> to vector<8x1xf32>
    %710 = arith.subf %706, %675 : vector<8x32xf32>
    %711 = vector.broadcast %709 : vector<8x1xf32> to vector<8x32xf32>
    %712 = arith.mulf %711, %710 : vector<8x32xf32>
    %713 = arith.addf %675, %712 : vector<8x32xf32>
    %c0_256 = arith.constant 0 : index
    %c0_257 = arith.constant 0 : index
    %714 = vector.load %arg11[%c0_256, %c0_257] : memref<8x32xf32, #tpu.memory_space<vmem>>, vector<8x32xf32>
    tpu.vector_store %arg11[%c0_256, %c0_257], %713 {strides = array<i32>} : memref<8x32xf32, #tpu.memory_space<vmem>>, vector<8x32xf32>,
    %715 = arith.subf %704, %676 : vector<8x32xf32>
    %716 = vector.broadcast %709 : vector<8x1xf32> to vector<8x32xf32>
    %717 = arith.mulf %716, %715 : vector<8x32xf32>
    %718 = arith.addf %676, %717 : vector<8x32xf32>
    %c0_258 = arith.constant 0 : index
    %c0_259 = arith.constant 0 : index
    %719 = vector.load %arg12[%c0_258, %c0_259] : memref<8x32xf32, #tpu.memory_space<vmem>>, vector<8x32xf32>
    tpu.vector_store %arg12[%c0_258, %c0_259], %718 {strides = array<i32>} : memref<8x32xf32, #tpu.memory_space<vmem>>, vector<8x32xf32>,
    %720 = vector.broadcast %709 : vector<8x1xf32> to vector<8x32xf32>
    %721 = arith.mulf %720, %706 : vector<8x32xf32>
    %722 = arith.index_cast %674 : i32 to index
    %c0_260 = arith.constant 0 : index
    %c0_261 = arith.constant 0 : index
    %723 = vector.load %arg8[%722, %c0_260, %c0_261] : memref<8x8x32xf32, #tpu.memory_space<vmem>>, vector<1x8x32xf32>
    %724 = vector.shape_cast %723 : vector<1x8x32xf32> to vector<8x32xf32>
    %725 = vector.shape_cast %721 : vector<8x32xf32> to vector<1x8x32xf32>
    tpu.vector_store %arg8[%722, %c0_260, %c0_261], %725 {strides = array<i32>} : memref<8x8x32xf32, #tpu.memory_space<vmem>>, vector<1x8x32xf32>,
    %c7_i32_262 = arith.constant 7 : i32
    %c0_263 = arith.constant 0 : index
    %c0_264 = arith.constant 0 : index
    %726 = vector.load %arg9[%c0_263, %c0_264] : memref<8x32xf32, #tpu.memory_space<vmem>>, vector<8x32xf32>
    %c0_265 = arith.constant 0 : index
    %c0_266 = arith.constant 0 : index
    %727 = vector.load %arg10[%c0_265, %c0_266] : memref<8x32xf32, #tpu.memory_space<vmem>>, vector<8x32xf32>
    %728 = arith.index_cast %c7_i32_262 : i32 to index
    %c0_267 = arith.constant 0 : index
    %c0_268 = arith.constant 0 : index
    %729 = vector.load %arg1[%728, %c0_267, %c0_268] : memref<8x8x128xf32, #tpu.memory_space<vmem>>, vector<1x8x128xf32>
    %730 = vector.shape_cast %729 : vector<1x8x128xf32> to vector<8x128xf32>
    %cst_269 = arith.constant dense<0.000000e+00> : vector<8x128xf32>
    %731 = tpu.matmul %726, %3, %cst_269 {dimension_numbers = #tpu.dot_dimension_numbers<[1], [0], [0], [1], [0, 0, 1, 1], [], []>} : vector<8x32xf32>, vector<32x128xf32>, vector<8x128xf32> -> vector<8x128xf32>
    %732 = arith.addf %730, %731 : vector<8x128xf32>
    %733 = vector.extract_strided_slice %732 {offsets = [0, 0], sizes = [8, 32], strides = [1, 1]} : vector<8x128xf32> to vector<8x32xf32>
    %734 = arith.negf %733 : vector<8x32xf32>
    %735 = math.exp %734 : vector<8x32xf32>
    %cst_270 = arith.constant 1.000000e+00 : f32
    %736 = vector.broadcast %cst_270 : f32 to vector<8x32xf32>
    %737 = arith.addf %736, %735 : vector<8x32xf32>
    %738 = arith.divf %736, %737 : vector<8x32xf32>
    %739 = vector.extract_strided_slice %732 {offsets = [0, 32], sizes = [8, 32], strides = [1, 1]} : vector<8x128xf32> to vector<8x32xf32>
    %740 = arith.negf %739 : vector<8x32xf32>
    %741 = math.exp %740 : vector<8x32xf32>
    %cst_271 = arith.constant 1.000000e+00 : f32
    %742 = vector.broadcast %cst_271 : f32 to vector<8x32xf32>
    %743 = arith.addf %742, %741 : vector<8x32xf32>
    %744 = arith.divf %742, %743 : vector<8x32xf32>
    %745 = vector.extract_strided_slice %732 {offsets = [0, 64], sizes = [8, 32], strides = [1, 1]} : vector<8x128xf32> to vector<8x32xf32>
    %746 = math.tanh %745 : vector<8x32xf32>
    %747 = vector.extract_strided_slice %732 {offsets = [0, 96], sizes = [8, 32], strides = [1, 1]} : vector<8x128xf32> to vector<8x32xf32>
    %748 = arith.negf %747 : vector<8x32xf32>
    %749 = math.exp %748 : vector<8x32xf32>
    %cst_272 = arith.constant 1.000000e+00 : f32
    %750 = vector.broadcast %cst_272 : f32 to vector<8x32xf32>
    %751 = arith.addf %750, %749 : vector<8x32xf32>
    %752 = arith.divf %750, %751 : vector<8x32xf32>
    %753 = arith.mulf %744, %727 : vector<8x32xf32>
    %754 = arith.mulf %738, %746 : vector<8x32xf32>
    %755 = arith.addf %753, %754 : vector<8x32xf32>
    %756 = math.tanh %755 : vector<8x32xf32>
    %757 = arith.mulf %752, %756 : vector<8x32xf32>
    %758 = arith.index_cast %c7_i32_262 : i32 to index
    %c0_273 = arith.constant 0 : index
    %c0_274 = arith.constant 0 : index
    %759 = vector.load %arg3[%758, %c0_273, %c0_274] : memref<8x8x1xf32, #tpu.memory_space<vmem>>, vector<1x8x1xf32>
    %760 = vector.shape_cast %759 : vector<1x8x1xf32> to vector<8x1xf32>
    %761 = arith.subf %757, %726 : vector<8x32xf32>
    %762 = vector.broadcast %760 : vector<8x1xf32> to vector<8x32xf32>
    %763 = arith.mulf %762, %761 : vector<8x32xf32>
    %764 = arith.addf %726, %763 : vector<8x32xf32>
    %c0_275 = arith.constant 0 : index
    %c0_276 = arith.constant 0 : index
    %765 = vector.load %arg9[%c0_275, %c0_276] : memref<8x32xf32, #tpu.memory_space<vmem>>, vector<8x32xf32>
    tpu.vector_store %arg9[%c0_275, %c0_276], %764 {strides = array<i32>} : memref<8x32xf32, #tpu.memory_space<vmem>>, vector<8x32xf32>,
    %766 = arith.subf %755, %727 : vector<8x32xf32>
    %767 = vector.broadcast %760 : vector<8x1xf32> to vector<8x32xf32>
    %768 = arith.mulf %767, %766 : vector<8x32xf32>
    %769 = arith.addf %727, %768 : vector<8x32xf32>
    %c0_277 = arith.constant 0 : index
    %c0_278 = arith.constant 0 : index
    %770 = vector.load %arg10[%c0_277, %c0_278] : memref<8x32xf32, #tpu.memory_space<vmem>>, vector<8x32xf32>
    tpu.vector_store %arg10[%c0_277, %c0_278], %769 {strides = array<i32>} : memref<8x32xf32, #tpu.memory_space<vmem>>, vector<8x32xf32>,
    %771 = vector.broadcast %760 : vector<8x1xf32> to vector<8x32xf32>
    %772 = arith.mulf %771, %757 : vector<8x32xf32>
    %773 = arith.index_cast %c7_i32_262 : i32 to index
    %c0_279 = arith.constant 0 : index
    %c0_280 = arith.constant 0 : index
    %774 = vector.load %arg7[%773, %c0_279, %c0_280] : memref<8x8x32xf32, #tpu.memory_space<vmem>>, vector<1x8x32xf32>
    %775 = vector.shape_cast %774 : vector<1x8x32xf32> to vector<8x32xf32>
    %776 = vector.shape_cast %772 : vector<8x32xf32> to vector<1x8x32xf32>
    tpu.vector_store %arg7[%773, %c0_279, %c0_280], %776 {strides = array<i32>} : memref<8x8x32xf32, #tpu.memory_space<vmem>>, vector<1x8x32xf32>,
    %c7_i32_281 = arith.constant 7 : i32
    %777 = arith.subi %c7_i32_281, %c7_i32_262 : i32
    %c0_282 = arith.constant 0 : index
    %c0_283 = arith.constant 0 : index
    %778 = vector.load %arg11[%c0_282, %c0_283] : memref<8x32xf32, #tpu.memory_space<vmem>>, vector<8x32xf32>
    %c0_284 = arith.constant 0 : index
    %c0_285 = arith.constant 0 : index
    %779 = vector.load %arg12[%c0_284, %c0_285] : memref<8x32xf32, #tpu.memory_space<vmem>>, vector<8x32xf32>
    %780 = arith.index_cast %777 : i32 to index
    %c0_286 = arith.constant 0 : index
    %c0_287 = arith.constant 0 : index
    %781 = vector.load %arg2[%780, %c0_286, %c0_287] : memref<8x8x128xf32, #tpu.memory_space<vmem>>, vector<1x8x128xf32>
    %782 = vector.shape_cast %781 : vector<1x8x128xf32> to vector<8x128xf32>
    %cst_288 = arith.constant dense<0.000000e+00> : vector<8x128xf32>
    %783 = tpu.matmul %778, %4, %cst_288 {dimension_numbers = #tpu.dot_dimension_numbers<[1], [0], [0], [1], [0, 0, 1, 1], [], []>} : vector<8x32xf32>, vector<32x128xf32>, vector<8x128xf32> -> vector<8x128xf32>
    %784 = arith.addf %782, %783 : vector<8x128xf32>
    %785 = vector.extract_strided_slice %784 {offsets = [0, 0], sizes = [8, 32], strides = [1, 1]} : vector<8x128xf32> to vector<8x32xf32>
    %786 = arith.negf %785 : vector<8x32xf32>
    %787 = math.exp %786 : vector<8x32xf32>
    %cst_289 = arith.constant 1.000000e+00 : f32
    %788 = vector.broadcast %cst_289 : f32 to vector<8x32xf32>
    %789 = arith.addf %788, %787 : vector<8x32xf32>
    %790 = arith.divf %788, %789 : vector<8x32xf32>
    %791 = vector.extract_strided_slice %784 {offsets = [0, 32], sizes = [8, 32], strides = [1, 1]} : vector<8x128xf32> to vector<8x32xf32>
    %792 = arith.negf %791 : vector<8x32xf32>
    %793 = math.exp %792 : vector<8x32xf32>
    %cst_290 = arith.constant 1.000000e+00 : f32
    %794 = vector.broadcast %cst_290 : f32 to vector<8x32xf32>
    %795 = arith.addf %794, %793 : vector<8x32xf32>
    %796 = arith.divf %794, %795 : vector<8x32xf32>
    %797 = vector.extract_strided_slice %784 {offsets = [0, 64], sizes = [8, 32], strides = [1, 1]} : vector<8x128xf32> to vector<8x32xf32>
    %798 = math.tanh %797 : vector<8x32xf32>
    %799 = vector.extract_strided_slice %784 {offsets = [0, 96], sizes = [8, 32], strides = [1, 1]} : vector<8x128xf32> to vector<8x32xf32>
    %800 = arith.negf %799 : vector<8x32xf32>
    %801 = math.exp %800 : vector<8x32xf32>
    %cst_291 = arith.constant 1.000000e+00 : f32
    %802 = vector.broadcast %cst_291 : f32 to vector<8x32xf32>
    %803 = arith.addf %802, %801 : vector<8x32xf32>
    %804 = arith.divf %802, %803 : vector<8x32xf32>
    %805 = arith.mulf %796, %779 : vector<8x32xf32>
    %806 = arith.mulf %790, %798 : vector<8x32xf32>
    %807 = arith.addf %805, %806 : vector<8x32xf32>
    %808 = math.tanh %807 : vector<8x32xf32>
    %809 = arith.mulf %804, %808 : vector<8x32xf32>
    %810 = arith.index_cast %777 : i32 to index
    %c0_292 = arith.constant 0 : index
    %c0_293 = arith.constant 0 : index
    %811 = vector.load %arg4[%810, %c0_292, %c0_293] : memref<8x8x1xf32, #tpu.memory_space<vmem>>, vector<1x8x1xf32>
    %812 = vector.shape_cast %811 : vector<1x8x1xf32> to vector<8x1xf32>
    %813 = arith.subf %809, %778 : vector<8x32xf32>
    %814 = vector.broadcast %812 : vector<8x1xf32> to vector<8x32xf32>
    %815 = arith.mulf %814, %813 : vector<8x32xf32>
    %816 = arith.addf %778, %815 : vector<8x32xf32>
    %c0_294 = arith.constant 0 : index
    %c0_295 = arith.constant 0 : index
    %817 = vector.load %arg11[%c0_294, %c0_295] : memref<8x32xf32, #tpu.memory_space<vmem>>, vector<8x32xf32>
    tpu.vector_store %arg11[%c0_294, %c0_295], %816 {strides = array<i32>} : memref<8x32xf32, #tpu.memory_space<vmem>>, vector<8x32xf32>,
    %818 = arith.subf %807, %779 : vector<8x32xf32>
    %819 = vector.broadcast %812 : vector<8x1xf32> to vector<8x32xf32>
    %820 = arith.mulf %819, %818 : vector<8x32xf32>
    %821 = arith.addf %779, %820 : vector<8x32xf32>
    %c0_296 = arith.constant 0 : index
    %c0_297 = arith.constant 0 : index
    %822 = vector.load %arg12[%c0_296, %c0_297] : memref<8x32xf32, #tpu.memory_space<vmem>>, vector<8x32xf32>
    tpu.vector_store %arg12[%c0_296, %c0_297], %821 {strides = array<i32>} : memref<8x32xf32, #tpu.memory_space<vmem>>, vector<8x32xf32>,
    %823 = vector.broadcast %812 : vector<8x1xf32> to vector<8x32xf32>
    %824 = arith.mulf %823, %809 : vector<8x32xf32>
    %825 = arith.index_cast %777 : i32 to index
    %c0_298 = arith.constant 0 : index
    %c0_299 = arith.constant 0 : index
    %826 = vector.load %arg8[%825, %c0_298, %c0_299] : memref<8x8x32xf32, #tpu.memory_space<vmem>>, vector<1x8x32xf32>
    %827 = vector.shape_cast %826 : vector<1x8x32xf32> to vector<8x32xf32>
    %828 = vector.shape_cast %824 : vector<8x32xf32> to vector<1x8x32xf32>
    tpu.vector_store %arg8[%825, %c0_298, %c0_299], %828 {strides = array<i32>} : memref<8x8x32xf32, #tpu.memory_space<vmem>>, vector<1x8x32xf32>,
    %c8_i32 = arith.constant 8 : i32
    return
  }
  func.func @transform_0(%arg0: i32) -> (i32, i32, i32) {
    %c0_i32 = arith.constant 0 : i32
    %c0_i32_0 = arith.constant 0 : i32
    %c0_i32_1 = arith.constant 0 : i32
    return %arg0, %c0_i32, %c0_i32_0 : i32, i32, i32
  }
  func.func @transform_1(%arg0: i32) -> (i32, i32, i32) {
    %c1_i32 = arith.constant 1 : i32
    %0 = arith.subi %c1_i32, %arg0 : i32
    %c0_i32 = arith.constant 0 : i32
    %c0_i32_0 = arith.constant 0 : i32
    %c0_i32_1 = arith.constant 0 : i32
    return %0, %c0_i32, %c0_i32_0 : i32, i32, i32
  }
  func.func @transform_2(%arg0: i32) -> (i32, i32, i32) {
    %c0_i32 = arith.constant 0 : i32
    %c0_i32_0 = arith.constant 0 : i32
    %c0_i32_1 = arith.constant 0 : i32
    return %arg0, %c0_i32, %c0_i32_0 : i32, i32, i32
  }
  func.func @transform_3(%arg0: i32) -> (i32, i32, i32) {
    %c1_i32 = arith.constant 1 : i32
    %0 = arith.subi %c1_i32, %arg0 : i32
    %c0_i32 = arith.constant 0 : i32
    %c0_i32_0 = arith.constant 0 : i32
    %c0_i32_1 = arith.constant 0 : i32
    return %0, %c0_i32, %c0_i32_0 : i32, i32, i32
  }
  func.func @transform_4(%arg0: i32) -> (i32, i32) {
    %c0_i32 = arith.constant 0 : i32
    %c0_i32_0 = arith.constant 0 : i32
    %c0_i32_1 = arith.constant 0 : i32
    return %c0_i32, %c0_i32_0 : i32, i32
  }
  func.func @transform_5(%arg0: i32) -> (i32, i32) {
    %c0_i32 = arith.constant 0 : i32
    %c0_i32_0 = arith.constant 0 : i32
    %c0_i32_1 = arith.constant 0 : i32
    return %c0_i32, %c0_i32_0 : i32, i32
  }
  func.func @transform_6(%arg0: i32) -> (i32, i32, i32) {
    %c0_i32 = arith.constant 0 : i32
    %c0_i32_0 = arith.constant 0 : i32
    %c0_i32_1 = arith.constant 0 : i32
    return %arg0, %c0_i32, %c0_i32_0 : i32, i32, i32
  }
  func.func @transform_7(%arg0: i32) -> (i32, i32, i32) {
    %c1_i32 = arith.constant 1 : i32
    %0 = arith.subi %c1_i32, %arg0 : i32
    %c0_i32 = arith.constant 0 : i32
    %c0_i32_0 = arith.constant 0 : i32
    %c0_i32_1 = arith.constant 0 : i32
    return %0, %c0_i32, %c0_i32_0 : i32, i32, i32
  }
}

</mosaic_0001>

<llo_original>
// kernel: tpu_custom_call.1
$region0: #{tpu_custom_call.1}
  #allocation0 [shape = 'u32[]', space=smem, size = 0x4, offset = 0x4, fixed_abs, tag = 'smem constant byte address 0x4 - core index']
  #allocation1 [shape = 'u32[144,128]{1,0:T(1,128)}', space=vmem, size = 0x12000, scoped, tag = 'internal scratch']
  #allocation2 [shape = 'f32[8,32]{1,0:T(8,128)}', space=vmem, size = 0x1000, scoped, tag = 'scratch operand']
  #allocation3 [shape = 'f32[8,32]{1,0:T(8,128)}', space=vmem, size = 0x1000, scoped, tag = 'scratch operand']
  #allocation4 [shape = 'f32[8,32]{1,0:T(8,128)}', space=vmem, size = 0x1000, scoped, tag = 'scratch operand']
  #allocation5 [shape = 'f32[8,32]{1,0:T(8,128)}', space=vmem, size = 0x1000, scoped, tag = 'scratch operand']
  %s0 = inlined_call_operand.vmem [shape: f32[16,8,128], index: 0, kind: input, shape index: {}]
  %s1 = inlined_call_operand.vmem [shape: f32[16,8,128], index: 1, kind: input, shape index: {}]
  %s2 = inlined_call_operand.vmem [shape: f32[16,8,1], index: 2, kind: input, shape index: {}]
  %s3 = inlined_call_operand.vmem [shape: f32[16,8,1], index: 3, kind: input, shape index: {}]
  %s4 = inlined_call_operand.hbm [shape: f32[32,128], index: 4, kind: input, shape index: {}]
  %s5 = inlined_call_operand.hbm [shape: f32[32,128], index: 5, kind: input, shape index: {}]
  %s6 = inlined_call_operand.hbm [shape: f32[16,8,32], index: 6, kind: output, shape index: {0}]
  %s7 = inlined_call_operand.hbm [shape: f32[16,8,32], index: 7, kind: output, shape index: {1}]
  %8 = xla_tuple %s6, %s7
  %s9 = sld [smem:[#allocation0]]
  $region77: #{tpu_custom_call.1} parent=0
    _
  %s11 = ssub.s32 1, %s9
  %s12 = scalar_select 0, %s11, %s9
  $region1: #{tpu_custom_call.1} parent=0
    #allocation6 [shape = 'u8[16384]{0}', space=vmem, size = 0x4000, scoped, tag = 'input window, operand 4, single buffered']
    #allocation7 [shape = 's32[2]{0}', space=sflag, size = 0x8, scoped, tag = 'scoped memory for tpu_custom_call.1']
    #allocation8 [shape = 's32[2]{0}', space=sflag, size = 0x8, scoped, tag = 'scoped memory for tpu_custom_call.1']
    #allocation9 [shape = 'u8[16384]{0}', space=vmem, size = 0x4000, scoped, tag = 'input window, operand 5, single buffered']
    #allocation10 [shape = 's32[1]{0}', space=sflag, size = 0x4, scoped, tag = 'scoped memory for tpu_custom_call.1']
    #allocation11 [shape = 'u8[65536]{0}', space=vmem, size = 0x10000, scoped, tag = 'output window, operand 0']
    #allocation12 [shape = 'u8[65536]{0}', space=vmem, size = 0x10000, scoped, tag = 'output window, operand 1']
    #allocation13 [shape = 's32[2]{0}', space=sflag, size = 0x8, scoped, tag = 'scoped memory for tpu_custom_call.1']
    %13 = vsyncpa [#allocation7], 0
    %14 = vsyncpa [#allocation10], 0
    %15 = vsyncpa [#allocation8], 0
    %s16 = scalar_lea.sflag [#allocation8], 1
    %17 = vsyncpa %s16, 0
    %18 = vsyncpa [#allocation13], 0
    %s19 = scalar_lea.sflag [#allocation13], 1
    %20 = vsyncpa %s19, 0
    loop: start=0, step=1, limit=4
    $region2: #{tpu_custom_call.1} parent=1 // loop_pre_header
      _
    $region3: #{tpu_custom_call.1} parent=1 // loop_header
      %s22 = sphi 0, %s26
      %p23 = scmp.ge.s32.totalorder %s22, 4
      %s32 = sphi 0, %s34
      %s35 = sphi 0, %s32
      %s36 = sphi 0, %s35
      %s52 = sphi 0, %s36
      %s60 = sphi 0, %s62
      %s63 = sphi 0, %s60
      %s64 = sphi 0, %s63
      %s80 = sphi 0, %s64
      %s86 = sphi 0, %s88
      %s89 = sphi 0, %s86
      %s90 = sphi 0, %s89
      %s106 = sphi 0, %s90
      %s114 = sphi 0, %s116
      %s117 = sphi 0, %s114
      %s118 = sphi 0, %s117
      %s134 = sphi 0, %s118
      %s138 = sphi 0, %s138
      %s140 = sphi 0, %s138
      %s141 = sphi 0, %s140
      %s155 = sphi 0, %s141
      %s159 = sphi 0, %s159
      %s161 = sphi 0, %s159
      %s162 = sphi 0, %s161
      %s176 = sphi 0, %s162
      %s182 = sphi 0, %s184
      %s185 = sphi 0, %s182
      %s186 = sphi 0, %s185
      %s202 = sphi 0, %s186
      %s210 = sphi 0, %s212
      %s213 = sphi 0, %s210
      %s214 = sphi 0, %s213
      %s230 = sphi 0, %s214
    $region4: #{tpu_custom_call.1} parent=1 // loop_header_branch
      %25 = sbr.rel (%p23) target = $region8
    $region5: #{tpu_custom_call.1} parent=1 // loop_body
      %s27 = ssub.s32 %s22, 1
      %s28 = ssub.s32 %s22, 2
      %s29 = sadd.s32 %s22, 1
      %s30 = ssub.s32 %s22, %s29
      %p31 = scmp.eq.s32.totalorder %s30, 0
      %s33 = sadd.s32 %s32, 1
      %s34 = scalar_select %p31, %s32, %s33
      %p37 = pneg %p31
      %p38 = scmp.eq.s32.totalorder %s22, 1
      %p39 = por %p37, %p38
      %p40 = scmp.ne.s32.totalorder %s32, %s35
      %p41 = scmp.eq.s32.totalorder %s22, 0
      %p42 = por %p40, %p41
      %p43 = scmp.ne.s32.totalorder %s32, %s35
      %p44 = scmp.eq.s32.totalorder %s27, 1
      %p45 = por %p43, %p44
      %p46 = scmp.ne.s32.totalorder %s35, %s36
      %p47 = scmp.eq.s32.totalorder %s27, 0
      %p48 = por %p46, %p47
      %p49 = scmp.ne.s32.totalorder %s35, %s36
      %p50 = scmp.eq.s32.totalorder %s28, 1
      %p51 = por %p49, %p50
      %p53 = scmp.ne.s32.totalorder %s36, %s52
      %p54 = scmp.eq.s32.totalorder %s28, 0
      %p55 = por %p53, %p54
      %s56 = ssub.s32 1, %s22
      %s57 = ssub.s32 1, %s29
      %s58 = ssub.s32 %s56, %s57
      %p59 = scmp.eq.s32.totalorder %s58, 0
      %s61 = sadd.s32 %s60, 1
      %s62 = scalar_select %p59, %s60, %s61
      %p65 = pneg %p59
      %p66 = scmp.eq.s32.totalorder %s22, 1
      %p67 = por %p65, %p66
      %p68 = scmp.ne.s32.totalorder %s60, %s63
      %p69 = scmp.eq.s32.totalorder %s22, 0
      %p70 = por %p68, %p69
      %p71 = scmp.ne.s32.totalorder %s60, %s63
      %p72 = scmp.eq.s32.totalorder %s27, 1
      %p73 = por %p71, %p72
      %p74 = scmp.ne.s32.totalorder %s63, %s64
      %p75 = scmp.eq.s32.totalorder %s27, 0
      %p76 = por %p74, %p75
      %p77 = scmp.ne.s32.totalorder %s63, %s64
      %p78 = scmp.eq.s32.totalorder %s28, 1
      %p79 = por %p77, %p78
      %p81 = scmp.ne.s32.totalorder %s64, %s80
      %p82 = scmp.eq.s32.totalorder %s28, 0
      %p83 = por %p81, %p82
      %s84 = ssub.s32 %s22, %s29
      %p85 = scmp.eq.s32.totalorder %s84, 0
      %s87 = sadd.s32 %s86, 1
      %s88 = scalar_select %p85, %s86, %s87
      %p91 = pneg %p85
      %p92 = scmp.eq.s32.totalorder %s22, 1
      %p93 = por %p91, %p92
      %p94 = scmp.ne.s32.totalorder %s86, %s89
      %p95 = scmp.eq.s32.totalorder %s22, 0
      %p96 = por %p94, %p95
      %p97 = scmp.ne.s32.totalorder %s86, %s89
      %p98 = scmp.eq.s32.totalorder %s27, 1
      %p99 = por %p97, %p98
      %p100 = scmp.ne.s32.totalorder %s89, %s90
      %p101 = scmp.eq.s32.totalorder %s27, 0
      %p102 = por %p100, %p101
      %p103 = scmp.ne.s32.totalorder %s89, %s90
      %p104 = scmp.eq.s32.totalorder %s28, 1
      %p105 = por %p103, %p104
      %p107 = scmp.ne.s32.totalorder %s90, %s106
      %p108 = scmp.eq.s32.totalorder %s28, 0
      %p109 = por %p107, %p108
      %s110 = ssub.s32 1, %s22
      %s111 = ssub.s32 1, %s29
      %s112 = ssub.s32 %s110, %s111
      %p113 = scmp.eq.s32.totalorder %s112, 0
      %s115 = sadd.s32 %s114, 1
      %s116 = scalar_select %p113, %s114, %s115
      %p119 = pneg %p113
      %p120 = scmp.eq.s32.totalorder %s22, 1
      %p121 = por %p119, %p120
      %p122 = scmp.ne.s32.totalorder %s114, %s117
      %p123 = scmp.eq.s32.totalorder %s22, 0
      %p124 = por %p122, %p123
      %p125 = scmp.ne.s32.totalorder %s114, %s117
      %p126 = scmp.eq.s32.totalorder %s27, 1
      %p127 = por %p125, %p126
      %p128 = scmp.ne.s32.totalorder %s117, %s118
      %p129 = scmp.eq.s32.totalorder %s27, 0
      %p130 = por %p128, %p129
      %p131 = scmp.ne.s32.totalorder %s117, %s118
      %p132 = scmp.eq.s32.totalorder %s28, 1
      %p133 = por %p131, %p132
      %p135 = scmp.ne.s32.totalorder %s118, %s134
      %p136 = scmp.eq.s32.totalorder %s28, 0
      %p137 = por %p135, %p136
      %s139 = sadd.s32 %s138, 1
      %p142 = scmp.eq.s32.totalorder %s22, 1
      %p143 = scmp.ne.s32.totalorder %s138, %s140
      %p144 = scmp.eq.s32.totalorder %s22, 0
      %p145 = por %p143, %p144
      %p146 = scmp.ne.s32.totalorder %s138, %s140
      %p147 = scmp.eq.s32.totalorder %s27, 1
      %p148 = por %p146, %p147
      %p149 = scmp.ne.s32.totalorder %s140, %s141
      %p150 = scmp.eq.s32.totalorder %s27, 0
      %p151 = por %p149, %p150
      %p152 = scmp.ne.s32.totalorder %s140, %s141
      %p153 = scmp.eq.s32.totalorder %s28, 1
      %p154 = por %p152, %p153
      %p156 = scmp.ne.s32.totalorder %s141, %s155
      %p157 = scmp.eq.s32.totalorder %s28, 0
      %p158 = por %p156, %p157
      %s160 = sadd.s32 %s159, 1
      %p163 = scmp.eq.s32.totalorder %s22, 1
      %p164 = scmp.ne.s32.totalorder %s159, %s161
      %p165 = scmp.eq.s32.totalorder %s22, 0
      %p166 = por %p164, %p165
      %p167 = scmp.ne.s32.totalorder %s159, %s161
      %p168 = scmp.eq.s32.totalorder %s27, 1
      %p169 = por %p167, %p168
      %p170 = scmp.ne.s32.totalorder %s161, %s162
      %p171 = scmp.eq.s32.totalorder %s27, 0
      %p172 = por %p170, %p171
      %p173 = scmp.ne.s32.totalorder %s161, %s162
      %p174 = scmp.eq.s32.totalorder %s28, 1
      %p175 = por %p173, %p174
      %p177 = scmp.ne.s32.totalorder %s162, %s176
      %p178 = scmp.eq.s32.totalorder %s28, 0
      %p179 = por %p177, %p178
      %s180 = ssub.s32 %s22, %s29
      %p181 = scmp.eq.s32.totalorder %s180, 0
      %s183 = sadd.s32 %s182, 1
      %s184 = scalar_select %p181, %s182, %s183
      %p187 = pneg %p181
      %p188 = scmp.eq.s32.totalorder %s22, 1
      %p189 = por %p187, %p188
      %p190 = scmp.ne.s32.totalorder %s182, %s185
      %p191 = scmp.eq.s32.totalorder %s22, 0
      %p192 = por %p190, %p191
      %p193 = scmp.ne.s32.totalorder %s182, %s185
      %p194 = scmp.eq.s32.totalorder %s27, 1
      %p195 = por %p193, %p194
      %p196 = scmp.ne.s32.totalorder %s185, %s186
      %p197 = scmp.eq.s32.totalorder %s27, 0
      %p198 = por %p196, %p197
      %p199 = scmp.ne.s32.totalorder %s185, %s186
      %p200 = scmp.eq.s32.totalorder %s28, 1
      %p201 = por %p199, %p200
      %p203 = scmp.ne.s32.totalorder %s186, %s202
      %p204 = scmp.eq.s32.totalorder %s28, 0
      %p205 = por %p203, %p204
      %s206 = ssub.s32 1, %s22
      %s207 = ssub.s32 1, %s29
      %s208 = ssub.s32 %s206, %s207
      %p209 = scmp.eq.s32.totalorder %s208, 0
      %s211 = sadd.s32 %s210, 1
      %s212 = scalar_select %p209, %s210, %s211
      %p215 = pneg %p209
      %p216 = scmp.eq.s32.totalorder %s22, 1
      %p217 = por %p215, %p216
      %p218 = scmp.ne.s32.totalorder %s210, %s213
      %p219 = scmp.eq.s32.totalorder %s22, 0
      %p220 = por %p218, %p219
      %p221 = scmp.ne.s32.totalorder %s210, %s213
      %p222 = scmp.eq.s32.totalorder %s27, 1
      %p223 = por %p221, %p222
      %p224 = scmp.ne.s32.totalorder %s213, %s214
      %p225 = scmp.eq.s32.totalorder %s27, 0
      %p226 = por %p224, %p225
      %p227 = scmp.ne.s32.totalorder %s213, %s214
      %p228 = scmp.eq.s32.totalorder %s28, 1
      %p229 = por %p227, %p228
      %p231 = scmp.ne.s32.totalorder %s214, %s230
      %p232 = scmp.eq.s32.totalorder %s28, 0
      %p233 = por %p231, %p232
      %p234 = scmp.le.s32.totalorder 1, %s22
      %p235 = scmp.lt.s32.totalorder %s22, 3
      %p236 = pnand %p234, %p235
      %p237 = pneg %p236
      // Predicated region
      $region9: #{tpu_custom_call.1} parent=5 // pred_check
        _
      $region10: #{tpu_custom_call.1} parent=5 // pred_check_branch
        %239 = sbr.rel (%p236) target = $region12
      $region11: #{tpu_custom_call.1} parent=5 // pred_region
        %s240 = ssub.s32 %s22, 1
        // Predicated region
        $region13: #{tpu_custom_call.1} parent=11 // pred_check
          %p241 = pneg %p151
        $region14: #{tpu_custom_call.1} parent=11 // pred_check_branch
          %243 = sbr.rel (%p241) target = $region16
        $region15: #{tpu_custom_call.1} parent=11 // pred_region
          %s245 = ssub.s32 512, 512
          %246 = vsyncadd [#allocation7], %s245
          %s247 = sshll.u32 [#allocation6], 4
          %s248 = int_to_ptr.vmem [resolvable:$true] %s247
          %253 = dma.hbm_to_vmem [thread:$0]  %s4, 512, %s248, [#allocation7], 128, 128, 8
        $region16: #{tpu_custom_call.1} parent=11 // pred_fallthru
          _
        // Predicated region
        $region17: #{tpu_custom_call.1} parent=11 // pred_check
          %p254 = pneg %p172
        $region18: #{tpu_custom_call.1} parent=11 // pred_check_branch
          %256 = sbr.rel (%p254) target = $region20
        $region19: #{tpu_custom_call.1} parent=11 // pred_region
          %s258 = ssub.s32 512, 512
          %259 = vsyncadd [#allocation10], %s258
          %s260 = sshll.u32 [#allocation9], 4
          %s261 = int_to_ptr.vmem [resolvable:$true] %s260
          %266 = dma.hbm_to_vmem [thread:$0]  %s5, 512, %s261, [#allocation10], 128, 128, 8
        $region20: #{tpu_custom_call.1} parent=11 // pred_fallthru
          _
      $region12: #{tpu_custom_call.1} parent=5 // pred_fallthru
        _
      %p267 = scmp.lt.s32.totalorder %s22, 2
      // Predicated region
      $region21: #{tpu_custom_call.1} parent=5 // pred_check
        %p268 = pneg %p267
      $region22: #{tpu_custom_call.1} parent=5 // pred_check_branch
        %270 = sbr.rel (%p268) target = $region24
      $region23: #{tpu_custom_call.1} parent=5 // pred_region
        // Predicated region
        $region25: #{tpu_custom_call.1} parent=23 // pred_check
          %p271 = pneg %p42
        $region26: #{tpu_custom_call.1} parent=23 // pred_check_branch
          %273 = sbr.rel (%p271) target = $region28
        $region27: #{tpu_custom_call.1} parent=23 // pred_region
          %s274 = smul.u32 8, %s22
          %p275 = scmp.lt.s32.totalorder %s274, 15
          %s276 = scalar_select %p275, %s274, 15
          %s277 = smul.addr %s276, 8
          %s278 = scalar_lea.vmem %s0, %s277
          %s279 = smul.u32 8, %s22
        $region28: #{tpu_custom_call.1} parent=23 // pred_fallthru
          _
        // Predicated region
        $region29: #{tpu_custom_call.1} parent=23 // pred_check
          %p280 = pneg %p70
        $region30: #{tpu_custom_call.1} parent=23 // pred_check_branch
          %282 = sbr.rel (%p280) target = $region32
        $region31: #{tpu_custom_call.1} parent=23 // pred_region
          %s283 = ssub.s32 1, %s22
          %s284 = smul.u32 8, %s283
          %p285 = scmp.lt.s32.totalorder %s284, 15
          %s286 = scalar_select %p285, %s284, 15
          %s287 = smul.addr %s286, 8
          %s288 = scalar_lea.vmem %s1, %s287
          %s289 = ssub.s32 1, %s22
          %s290 = smul.u32 8, %s289
        $region32: #{tpu_custom_call.1} parent=23 // pred_fallthru
          _
        // Predicated region
        $region33: #{tpu_custom_call.1} parent=23 // pred_check
          %p291 = pneg %p96
        $region34: #{tpu_custom_call.1} parent=23 // pred_check_branch
          %293 = sbr.rel (%p291) target = $region36
        $region35: #{tpu_custom_call.1} parent=23 // pred_region
          %s294 = smul.u32 8, %s22
          %p295 = scmp.lt.s32.totalorder %s294, 15
          %s296 = scalar_select %p295, %s294, 15
          %s297 = smul.addr %s296, 8
          %s298 = scalar_lea.vmem %s2, %s297
          %s299 = smul.u32 8, %s22
        $region36: #{tpu_custom_call.1} parent=23 // pred_fallthru
          _
        // Predicated region
        $region37: #{tpu_custom_call.1} parent=23 // pred_check
          %p300 = pneg %p124
        $region38: #{tpu_custom_call.1} parent=23 // pred_check_branch
          %302 = sbr.rel (%p300) target = $region40
        $region39: #{tpu_custom_call.1} parent=23 // pred_region
          %s303 = ssub.s32 1, %s22
          %s304 = smul.u32 8, %s303
          %p305 = scmp.lt.s32.totalorder %s304, 15
          %s306 = scalar_select %p305, %s304, 15
          %s307 = smul.addr %s306, 8
          %s308 = scalar_lea.vmem %s3, %s307
          %s309 = ssub.s32 1, %s22
          %s310 = smul.u32 8, %s309
        $region40: #{tpu_custom_call.1} parent=23 // pred_fallthru
          _
      $region24: #{tpu_custom_call.1} parent=5 // pred_fallthru
        _
      %p311 = scmp.le.s32.totalorder 1, %s22
      %p312 = scmp.lt.s32.totalorder %s22, 3
      %p313 = pnand %p311, %p312
      %p314 = pneg %p313
      // Predicated region
      $region41: #{tpu_custom_call.1} parent=5 // pred_check
        _
      $region42: #{tpu_custom_call.1} parent=5 // pred_check_branch
        %316 = sbr.rel (%p313) target = $region44
      $region43: #{tpu_custom_call.1} parent=5 // pred_region
        %s317 = ssub.s32 %s22, 1
        // Predicated region
        $region45: #{tpu_custom_call.1} parent=43 // pred_check
          %p318 = pneg %p151
        $region46: #{tpu_custom_call.1} parent=43 // pred_check_branch
          %320 = sbr.rel (%p318) target = $region48
        $region47: #{tpu_custom_call.1} parent=43 // pred_region
          %321 = dma.done [#allocation7], 512
        $region48: #{tpu_custom_call.1} parent=43 // pred_fallthru
          _
        // Predicated region
        $region49: #{tpu_custom_call.1} parent=43 // pred_check
          %p322 = pneg %p172
        $region50: #{tpu_custom_call.1} parent=43 // pred_check_branch
          %324 = sbr.rel (%p322) target = $region52
        $region51: #{tpu_custom_call.1} parent=43 // pred_region
          %325 = dma.done [#allocation10], 512
        $region52: #{tpu_custom_call.1} parent=43 // pred_fallthru
          _
        %s326 = smul.u32 8, %s27
        %p327 = scmp.lt.s32.totalorder %s326, 15
        %s328 = scalar_select %p327, %s326, 15
        %s329 = smul.addr %s328, 8
        %s330 = scalar_lea.vmem %s0, %s329
        %p331 = pneg %p48
        %p332 = pneg %p45
        %s333 = ssub.s32 1, %s27
        %s334 = smul.u32 8, %s333
        %p335 = scmp.lt.s32.totalorder %s334, 15
        %s336 = scalar_select %p335, %s334, 15
        %s337 = smul.addr %s336, 8
        %s338 = scalar_lea.vmem %s1, %s337
        %p339 = pneg %p76
        %p340 = pneg %p73
        %s341 = smul.u32 8, %s27
        %p342 = scmp.lt.s32.totalorder %s341, 15
        %s343 = scalar_select %p342, %s341, 15
        %s344 = smul.addr %s343, 8
        %s345 = scalar_lea.vmem %s2, %s344
        %p346 = pneg %p102
        %p347 = pneg %p99
        %s348 = ssub.s32 1, %s27
        %s349 = smul.u32 8, %s348
        %p350 = scmp.lt.s32.totalorder %s349, 15
        %s351 = scalar_select %p350, %s349, 15
        %s352 = smul.addr %s351, 8
        %s353 = scalar_lea.vmem %s3, %s352
        %p354 = pneg %p130
        %p355 = pneg %p127
        %p356 = pneg %p151
        %p357 = pneg %p148
        %p358 = pneg %p172
        %p359 = pneg %p169
        %p360 = pneg %p198
        %p361 = pneg %p195
        %s362 = sand.u32 %s185, 1
        %s363 = scalar_lea.sflag [#allocation8], %s362
        %s364 = sand.u32 %s185, 1
        %s365 = smul.addr %s364, 64
        %s366 = scalar_lea.vmem [#allocation11], %s365
        %p367 = pneg %p226
        %p368 = pneg %p223
        %s369 = sand.u32 %s213, 1
        %s370 = scalar_lea.sflag [#allocation13], %s369
        %s371 = sand.u32 %s213, 1
        %s372 = smul.addr %s371, 64
        %s373 = scalar_lea.vmem [#allocation12], %s372
        %s374 = smul.u32 8, %s27
        %p375 = scmp.lt.s32.totalorder %s374, 15
        %s376 = scalar_select %p375, %s374, 15
        %s377 = smul.addr %s376, 8
        %s378 = scalar_lea.vmem %s0, %s377
        %s379 = smul.u32 8, %s27
        %s380 = ssub.s32 1, %s27
        %s381 = smul.u32 8, %s380
        %p382 = scmp.lt.s32.totalorder %s381, 15
        %s383 = scalar_select %p382, %s381, 15
        %s384 = smul.addr %s383, 8
        %s385 = scalar_lea.vmem %s1, %s384
        %s386 = ssub.s32 1, %s27
        %s387 = smul.u32 8, %s386
        %s388 = smul.u32 8, %s27
        %p389 = scmp.lt.s32.totalorder %s388, 15
        %s390 = scalar_select %p389, %s388, 15
        %s391 = smul.addr %s390, 8
        %s392 = scalar_lea.vmem %s2, %s391
        %s393 = smul.u32 8, %s27
        %s394 = ssub.s32 1, %s27
        %s395 = smul.u32 8, %s394
        %p396 = scmp.lt.s32.totalorder %s395, 15
        %s397 = scalar_select %p396, %s395, 15
        %s398 = smul.addr %s397, 8
        %s399 = scalar_lea.vmem %s3, %s398
        %s400 = ssub.s32 1, %s27
        %s401 = smul.u32 8, %s400
        %s402 = smul.u32 8, %s27
        %s403 = ssub.s32 1, %s27
        %s404 = smul.u32 8, %s403
        %p405 = scmp.eq.s32.totalorder %s27, 0
        // Predicated region
        $region53: #{tpu_custom_call.1} parent=43 // pred_check
          %p406 = pneg %p405
        $region54: #{tpu_custom_call.1} parent=43 // pred_check_branch
          %408 = sbr.rel (%p406) target = $region56
        $region55: #{tpu_custom_call.1} parent=43 // pred_region
          %vm409 = vcmask 261120
          %410 = vst.msk [vmem:[#allocation2] sm:$0xff] %vm409, 0.0
          %411 = vst.msk [vmem:[#allocation3] sm:$0xff] %vm409, 0.0
          %412 = vst.msk [vmem:[#allocation4] sm:$0xff] %vm409, 0.0
          %413 = vst.msk [vmem:[#allocation5] sm:$0xff] %vm409, 0.0
        $region56: #{tpu_custom_call.1} parent=43 // pred_fallthru
          _
        %v414 = vld [vmem:[#allocation6] sm:$0xff]
        %v415 = vld [vmem:[#allocation6 + $0x8] sm:$0xff]
        %v416 = vld [vmem:[#allocation6 + $0x10] sm:$0xff]
        %v417 = vld [vmem:[#allocation6 + $0x18] sm:$0xff]
        %v418 = vld [vmem:[#allocation9] sm:$0xff]
        %v419 = vld [vmem:[#allocation9 + $0x8] sm:$0xff]
        %v420 = vld [vmem:[#allocation9 + $0x10] sm:$0xff]
        %v421 = vld [vmem:[#allocation9 + $0x18] sm:$0xff]
        %v422 = vld [vmem:[#allocation2] sm:$0xff]
        %v423 = vld [vmem:[#allocation3] sm:$0xff]
        %v424 = vld [vmem:[%s378] sm:$0xff]
        %vm425 = vcmask 261120
        %v427 = vsel %vm425, %v422, 0
        %429 = vmatprep.subr.mxu0 0.0
        %430 = vmatpush1.msra.mxu0 0.0
        %431 = vmatprep.subr.mxu0 0.0
        %432 = vmatpush1.msra.mxu0 0.0
        %433 = vmatprep.subr.mxu0 0.0
        %434 = vmatpush1.msra.mxu0 0.0
        %435 = vmatprep.subr.mxu0 0.0
        %436 = vmatpush1.msra.mxu0 0.0
        %437 = vmatprep.subr.mxu0 0.0
        %438 = vmatpush1.msra.mxu0 0.0
        %439 = vmatprep.subr.mxu0 0.0
        %440 = vmatpush1.msra.mxu0 0.0
        %441 = vmatprep.subr.mxu0 0.0
        %442 = vmatpush1.msra.mxu0 0.0
        %443 = vmatprep.subr.mxu0 0.0
        %444 = vmatpush1.msra.mxu0 0.0
        %445 = vmatprep.subr.mxu0 0.0
        %446 = vmatpush1.msra.mxu0 0.0
        %447 = vmatprep.subr.mxu0 0.0
        %448 = vmatpush1.msra.mxu0 0.0
        %449 = vmatprep.subr.mxu0 0.0
        %450 = vmatpush1.msra.mxu0 0.0
        %451 = vmatprep.subr.mxu0 0.0
        %452 = vmatpush1.msra.mxu0 0.0
        %453 = vmatprep.subr.mxu0 0.0
        %454 = vmatpush1.msra.mxu0 %v417
        %455 = vmatprep.subr.mxu0 0.0
        %456 = vmatpush1.msra.mxu0 %v416
        %457 = vmatprep.subr.mxu0 0.0
        %458 = vmatpush1.msra.mxu0 %v415
        %459 = vmatprep.subr.mxu0 0.0
        %460 = vmatpush1.msra.mxu0 %v414
        %461 = vmatprep.subr.mxu0 0.0
        %462 = vmatpush2.msra.mxu0 0.0
        %463 = vmatprep.subr.mxu0 0.0
        %464 = vmatpush2.msra.mxu0 0.0
        %465 = vmatprep.subr.mxu0 0.0
        %466 = vmatpush2.msra.mxu0 0.0
        %467 = vmatprep.subr.mxu0 0.0
        %468 = vmatpush2.msra.mxu0 0.0
        %469 = vmatprep.subr.mxu0 0.0
        %470 = vmatpush2.msra.mxu0 0.0
        %471 = vmatprep.subr.mxu0 0.0
        %472 = vmatpush2.msra.mxu0 0.0
        %473 = vmatprep.subr.mxu0 0.0
        %474 = vmatpush2.msra.mxu0 0.0
        %475 = vmatprep.subr.mxu0 0.0
        %476 = vmatpush2.msra.mxu0 0.0
        %477 = vmatprep.subr.mxu0 0.0
        %478 = vmatpush2.msra.mxu0 0.0
        %479 = vmatprep.subr.mxu0 0.0
        %480 = vmatpush2.msra.mxu0 0.0
        %481 = vmatprep.subr.mxu0 0.0
        %482 = vmatpush2.msra.mxu0 0.0
        %483 = vmatprep.subr.mxu0 0.0
        %484 = vmatpush2.msra.mxu0 0.0
        %485 = vmatprep.subr.mxu0 0.0
        %486 = vmatpush2.msra.mxu0 0.0
        %487 = vmatprep.subr.mxu0 0.0
        %488 = vmatpush2.msra.mxu0 0.0
        %489 = vmatprep.subr.mxu0 0.0
        %490 = vmatpush2.msra.mxu0 0.0
        %491 = vmatprep.subr.mxu0 0.0
        %492 = vmatpush2.msra.mxu0 0.0
        %493 = vmatprep.mubr.f32.mxu0 0.0
        %494 = vmatmul.mubr.f32.gmra.mxu0 %v427
        %v495 = vpop.f32.mrf.mxu0
        %v496 = vadd.f32 0.0, %v495
        %v497 = vpop.f32.mrf.mxu0
        %498 = vdwg.mxu0
        %v499 = vadd.f32 %v424, %v496
        %v500 = vxor.u32 %v499, 2147483648
        %v501 = vmul.f32 %v500, 1.442695
        %v502 = vpow.pop %v501
        %v503 = vadd.f32 %v502, 1.0
        %v504 = vrcp.pop %v503
        %v505 = vmul.f32 1.0, %v504
        %v506 = vtanh.pop %v499
        %508 = vrot.lane.b32.xlu0 %v423, 32
        %v509 = vpop.permute.xlu0 %508
        %v511 = vmul.f32 %v505, %v509
        %513 = vrot.lane.b32.xlu0 %v506, 64
        %v514 = vpop.permute.xlu0 %513
        %v516 = vmul.f32 %v505, %v514
        %518 = vrot.lane.b32.xlu0 %v516, 32
        %v519 = vpop.permute.xlu0 %518
        %v521 = vadd.f32 %v511, %v519
        %v522 = vtanh.pop %v521
        %524 = vrot.lane.b32.xlu0 %v522, 64
        %v525 = vpop.permute.xlu0 %524
        %v527 = vmul.f32 %v505, %v525
        %v528 = vld [vmem:[%s392] sm:$0xff]
        %529 = vrot.lane.b32.xlu0 %v422, 96
        %v530 = vpop.permute.xlu0 %529
        %v532 = vsub.f32 %v527, %v530
        %534 = vset.pattern.permute.xlu0 0
        %535 = vperm.xlu0 %534, %v528
        %v536 = vpop.permute.xlu0 %535
        %v538 = vmul.f32 %v536, %v532
        %540 = vrot.lane.b32.xlu0 %v538, 32
        %v541 = vpop.permute.xlu0 %540
        %v543 = vadd.f32 %v422, %v541
        %544 = vst.msk [vmem:[#allocation2] sm:$0xff] %vm425, %v543
        %v545 = vsub.f32 %v521, %v509
        %v546 = vmul.f32 %v536, %v545
        %548 = vrot.lane.b32.xlu0 %v546, 96
        %v549 = vpop.permute.xlu0 %548
        %v551 = vadd.f32 %v423, %v549
        %552 = vst.msk [vmem:[#allocation3] sm:$0xff] %vm425, %v551
        %v553 = vmul.f32 %v536, %v527
        %555 = vrot.lane.b32.xlu0 %v553, 32
        %v556 = vpop.permute.xlu0 %555
        %558 = vst.msk [vmem:[%s366] sm:$0xff] %vm425, %v556
        %v559 = vld [vmem:[#allocation4] sm:$0xff]
        %v560 = vld [vmem:[#allocation5] sm:$0xff]
        %s561 = scalar_lea.vmem %s385, 56
        %v562 = vld [vmem:[%s561] sm:$0xff]
        %v564 = vsel %vm425, %v559, 0
        %566 = vmatprep.subr.mxu0 0.0
        %567 = vmatpush1.msra.mxu0 0.0
        %568 = vmatprep.subr.mxu0 0.0
        %569 = vmatpush1.msra.mxu0 0.0
        %570 = vmatprep.subr.mxu0 0.0
        %571 = vmatpush1.msra.mxu0 0.0
        %572 = vmatprep.subr.mxu0 0.0
        %573 = vmatpush1.msra.mxu0 0.0
        %574 = vmatprep.subr.mxu0 0.0
        %575 = vmatpush1.msra.mxu0 0.0
        %576 = vmatprep.subr.mxu0 0.0
        %577 = vmatpush1.msra.mxu0 0.0
        %578 = vmatprep.subr.mxu0 0.0
        %579 = vmatpush1.msra.mxu0 0.0
        %580 = vmatprep.subr.mxu0 0.0
        %581 = vmatpush1.msra.mxu0 0.0
        %582 = vmatprep.subr.mxu0 0.0
        %583 = vmatpush1.msra.mxu0 0.0
        %584 = vmatprep.subr.mxu0 0.0
        %585 = vmatpush1.msra.mxu0 0.0
        %586 = vmatprep.subr.mxu0 0.0
        %587 = vmatpush1.msra.mxu0 0.0
        %588 = vmatprep.subr.mxu0 0.0
        %589 = vmatpush1.msra.mxu0 0.0
        %590 = vmatprep.subr.mxu0 0.0
        %591 = vmatpush1.msra.mxu0 %v421
        %592 = vmatprep.subr.mxu0 0.0
        %593 = vmatpush1.msra.mxu0 %v420
        %594 = vmatprep.subr.mxu0 0.0
        %595 = vmatpush1.msra.mxu0 %v419
        %596 = vmatprep.subr.mxu0 0.0
        %597 = vmatpush1.msra.mxu0 %v418
        %598 = vmatprep.subr.mxu0 0.0
        %599 = vmatpush2.msra.mxu0 0.0
        %600 = vmatprep.subr.mxu0 0.0
        %601 = vmatpush2.msra.mxu0 0.0
        %602 = vmatprep.subr.mxu0 0.0
        %603 = vmatpush2.msra.mxu0 0.0
        %604 = vmatprep.subr.mxu0 0.0
        %605 = vmatpush2.msra.mxu0 0.0
        %606 = vmatprep.subr.mxu0 0.0
        %607 = vmatpush2.msra.mxu0 0.0
        %608 = vmatprep.subr.mxu0 0.0
        %609 = vmatpush2.msra.mxu0 0.0
        %610 = vmatprep.subr.mxu0 0.0
        %611 = vmatpush2.msra.mxu0 0.0
        %612 = vmatprep.subr.mxu0 0.0
        %613 = vmatpush2.msra.mxu0 0.0
        %614 = vmatprep.subr.mxu0 0.0
        %615 = vmatpush2.msra.mxu0 0.0
        %616 = vmatprep.subr.mxu0 0.0
        %617 = vmatpush2.msra.mxu0 0.0
        %618 = vmatprep.subr.mxu0 0.0
        %619 = vmatpush2.msra.mxu0 0.0
        %620 = vmatprep.subr.mxu0 0.0
        %621 = vmatpush2.msra.mxu0 0.0
        %622 = vmatprep.subr.mxu0 0.0
        %623 = vmatpush2.msra.mxu0 0.0
        %624 = vmatprep.subr.mxu0 0.0
        %625 = vmatpush2.msra.mxu0 0.0
        %626 = vmatprep.subr.mxu0 0.0
        %627 = vmatpush2.msra.mxu0 0.0
        %628 = vmatprep.subr.mxu0 0.0
        %629 = vmatpush2.msra.mxu0 0.0
        %630 = vmatprep.mubr.f32.mxu0 0.0
        %631 = vmatmul.mubr.f32.gmra.mxu0 %v564
        %v632 = vpop.f32.mrf.mxu0
        %v633 = vadd.f32 0.0, %v632
        %v634 = vpop.f32.mrf.mxu0
        %635 = vdwg.mxu0
        %v636 = vadd.f32 %v562, %v633
        %v637 = vxor.u32 %v636, 2147483648
        %v638 = vmul.f32 %v637, 1.442695
        %v639 = vpow.pop %v638
        %v640 = vadd.f32 %v639, 1.0
        %v641 = vrcp.pop %v640
        %v642 = vmul.f32 1.0, %v641
        %v643 = vtanh.pop %v636
        %645 = vrot.lane.b32.xlu0 %v560, 32
        %v646 = vpop.permute.xlu0 %645
        %v648 = vmul.f32 %v642, %v646
        %650 = vrot.lane.b32.xlu0 %v643, 64
        %v651 = vpop.permute.xlu0 %650
        %v653 = vmul.f32 %v642, %v651
        %655 = vrot.lane.b32.xlu0 %v653, 32
        %v656 = vpop.permute.xlu0 %655
        %v658 = vadd.f32 %v648, %v656
        %v659 = vtanh.pop %v658
        %661 = vrot.lane.b32.xlu0 %v659, 64
        %v662 = vpop.permute.xlu0 %661
        %v664 = vmul.f32 %v642, %v662
        %s665 = scalar_lea.vmem %s399, 56
        %v666 = vld [vmem:[%s665] sm:$0xff]
        %667 = vrot.lane.b32.xlu0 %v559, 96
        %v668 = vpop.permute.xlu0 %667
        %v670 = vsub.f32 %v664, %v668
        %672 = vset.pattern.permute.xlu0 0
        %673 = vperm.xlu0 %672, %v666
        %v674 = vpop.permute.xlu0 %673
        %v676 = vmul.f32 %v674, %v670
        %678 = vrot.lane.b32.xlu0 %v676, 32
        %v679 = vpop.permute.xlu0 %678
        %v681 = vadd.f32 %v559, %v679
        %682 = vst.msk [vmem:[#allocation4] sm:$0xff] %vm425, %v681
        %v683 = vsub.f32 %v658, %v646
        %v684 = vmul.f32 %v674, %v683
        %686 = vrot.lane.b32.xlu0 %v684, 96
        %v687 = vpop.permute.xlu0 %686
        %v689 = vadd.f32 %v560, %v687
        %690 = vst.msk [vmem:[#allocation5] sm:$0xff] %vm425, %v689
        %v691 = vmul.f32 %v674, %v664
        %693 = vrot.lane.b32.xlu0 %v691, 32
        %v694 = vpop.permute.xlu0 %693
        %s696 = scalar_lea.vmem %s373, 56 [#allocation12]
        %697 = vst.msk [vmem:[%s696] sm:$0xff] %vm425, %v694
        %v698 = vld [vmem:[#allocation2] sm:$0xff]
        %v699 = vld [vmem:[#allocation3] sm:$0xff]
        %s700 = scalar_lea.vmem %s378, 8
        %v701 = vld [vmem:[%s700] sm:$0xff]
        %v703 = vsel %vm425, %v698, 0
        %705 = vmatprep.subr.mxu0 0.0
        %706 = vmatpush1.msra.mxu0 0.0
        %707 = vmatprep.subr.mxu0 0.0
        %708 = vmatpush1.msra.mxu0 0.0
        %709 = vmatprep.subr.mxu0 0.0
        %710 = vmatpush1.msra.mxu0 0.0
        %711 = vmatprep.subr.mxu0 0.0
        %712 = vmatpush1.msra.mxu0 0.0
        %713 = vmatprep.subr.mxu0 0.0
        %714 = vmatpush1.msra.mxu0 0.0
        %715 = vmatprep.subr.mxu0 0.0
        %716 = vmatpush1.msra.mxu0 0.0
        %717 = vmatprep.subr.mxu0 0.0
        %718 = vmatpush1.msra.mxu0 0.0
        %719 = vmatprep.subr.mxu0 0.0
        %720 = vmatpush1.msra.mxu0 0.0
        %721 = vmatprep.subr.mxu0 0.0
        %722 = vmatpush1.msra.mxu0 0.0
        %723 = vmatprep.subr.mxu0 0.0
        %724 = vmatpush1.msra.mxu0 0.0
        %725 = vmatprep.subr.mxu0 0.0
        %726 = vmatpush1.msra.mxu0 0.0
        %727 = vmatprep.subr.mxu0 0.0
        %728 = vmatpush1.msra.mxu0 0.0
        %729 = vmatprep.subr.mxu0 0.0
        %730 = vmatpush1.msra.mxu0 %v417
        %731 = vmatprep.subr.mxu0 0.0
        %732 = vmatpush1.msra.mxu0 %v416
        %733 = vmatprep.subr.mxu0 0.0
        %734 = vmatpush1.msra.mxu0 %v415
        %735 = vmatprep.subr.mxu0 0.0
        %736 = vmatpush1.msra.mxu0 %v414
        %737 = vmatprep.subr.mxu0 0.0
        %738 = vmatpush2.msra.mxu0 0.0
        %739 = vmatprep.subr.mxu0 0.0
        %740 = vmatpush2.msra.mxu0 0.0
        %741 = vmatprep.subr.mxu0 0.0
        %742 = vmatpush2.msra.mxu0 0.0
        %743 = vmatprep.subr.mxu0 0.0
        %744 = vmatpush2.msra.mxu0 0.0
        %745 = vmatprep.subr.mxu0 0.0
        %746 = vmatpush2.msra.mxu0 0.0
        %747 = vmatprep.subr.mxu0 0.0
        %748 = vmatpush2.msra.mxu0 0.0
        %749 = vmatprep.subr.mxu0 0.0
        %750 = vmatpush2.msra.mxu0 0.0
        %751 = vmatprep.subr.mxu0 0.0
        %752 = vmatpush2.msra.mxu0 0.0
        %753 = vmatprep.subr.mxu0 0.0
        %754 = vmatpush2.msra.mxu0 0.0
        %755 = vmatprep.subr.mxu0 0.0
        %756 = vmatpush2.msra.mxu0 0.0
        %757 = vmatprep.subr.mxu0 0.0
        %758 = vmatpush2.msra.mxu0 0.0
        %759 = vmatprep.subr.mxu0 0.0
        %760 = vmatpush2.msra.mxu0 0.0
        %761 = vmatprep.subr.mxu0 0.0
        %762 = vmatpush2.msra.mxu0 0.0
        %763 = vmatprep.subr.mxu0 0.0
        %764 = vmatpush2.msra.mxu0 0.0
        %765 = vmatprep.subr.mxu0 0.0
        %766 = vmatpush2.msra.mxu0 0.0
        %767 = vmatprep.subr.mxu0 0.0
        %768 = vmatpush2.msra.mxu0 0.0
        %769 = vmatprep.mubr.f32.mxu0 0.0
        %770 = vmatmul.mubr.f32.gmra.mxu0 %v703
        %v771 = vpop.f32.mrf.mxu0
        %v772 = vadd.f32 0.0, %v771
        %v773 = vpop.f32.mrf.mxu0
        %774 = vdwg.mxu0
        %v775 = vadd.f32 %v701, %v772
        %v776 = vxor.u32 %v775, 2147483648
        %v777 = vmul.f32 %v776, 1.442695
        %v778 = vpow.pop %v777
        %v779 = vadd.f32 %v778, 1.0
        %v780 = vrcp.pop %v779
        %v781 = vmul.f32 1.0, %v780
        %v782 = vtanh.pop %v775
        %784 = vrot.lane.b32.xlu0 %v699, 32
        %v785 = vpop.permute.xlu0 %784
        %v787 = vmul.f32 %v781, %v785
        %789 = vrot.lane.b32.xlu0 %v782, 64
        %v790 = vpop.permute.xlu0 %789
        %v792 = vmul.f32 %v781, %v790
        %794 = vrot.lane.b32.xlu0 %v792, 32
        %v795 = vpop.permute.xlu0 %794
        %v797 = vadd.f32 %v787, %v795
        %v798 = vtanh.pop %v797
        %800 = vrot.lane.b32.xlu0 %v798, 64
        %v801 = vpop.permute.xlu0 %800
        %v803 = vmul.f32 %v781, %v801
        %s804 = scalar_lea.vmem %s392, 8
        %v805 = vld [vmem:[%s804] sm:$0xff]
        %806 = vrot.lane.b32.xlu0 %v698, 96
        %v807 = vpop.permute.xlu0 %806
        %v809 = vsub.f32 %v803, %v807
        %811 = vset.pattern.permute.xlu0 0
        %812 = vperm.xlu0 %811, %v805
        %v813 = vpop.permute.xlu0 %812
        %v815 = vmul.f32 %v813, %v809
        %817 = vrot.lane.b32.xlu0 %v815, 32
        %v818 = vpop.permute.xlu0 %817
        %v820 = vadd.f32 %v698, %v818
        %821 = vst.msk [vmem:[#allocation2] sm:$0xff] %vm425, %v820
        %v822 = vsub.f32 %v797, %v785
        %v823 = vmul.f32 %v813, %v822
        %825 = vrot.lane.b32.xlu0 %v823, 96
        %v826 = vpop.permute.xlu0 %825
        %v828 = vadd.f32 %v699, %v826
        %829 = vst.msk [vmem:[#allocation3] sm:$0xff] %vm425, %v828
        %v830 = vmul.f32 %v813, %v803
        %832 = vrot.lane.b32.xlu0 %v830, 32
        %v833 = vpop.permute.xlu0 %832
        %s835 = scalar_lea.vmem %s366, 8 [#allocation11]
        %836 = vst.msk [vmem:[%s835] sm:$0xff] %vm425, %v833
        %v837 = vld [vmem:[#allocation4] sm:$0xff]
        %v838 = vld [vmem:[#allocation5] sm:$0xff]
        %s839 = scalar_lea.vmem %s385, 48
        %v840 = vld [vmem:[%s839] sm:$0xff]
        %v842 = vsel %vm425, %v837, 0
        %844 = vmatprep.subr.mxu0 0.0
        %845 = vmatpush1.msra.mxu0 0.0
        %846 = vmatprep.subr.mxu0 0.0
        %847 = vmatpush1.msra.mxu0 0.0
        %848 = vmatprep.subr.mxu0 0.0
        %849 = vmatpush1.msra.mxu0 0.0
        %850 = vmatprep.subr.mxu0 0.0
        %851 = vmatpush1.msra.mxu0 0.0
        %852 = vmatprep.subr.mxu0 0.0
        %853 = vmatpush1.msra.mxu0 0.0
        %854 = vmatprep.subr.mxu0 0.0
        %855 = vmatpush1.msra.mxu0 0.0
        %856 = vmatprep.subr.mxu0 0.0
        %857 = vmatpush1.msra.mxu0 0.0
        %858 = vmatprep.subr.mxu0 0.0
        %859 = vmatpush1.msra.mxu0 0.0
        %860 = vmatprep.subr.mxu0 0.0
        %861 = vmatpush1.msra.mxu0 0.0
        %862 = vmatprep.subr.mxu0 0.0
        %863 = vmatpush1.msra.mxu0 0.0
        %864 = vmatprep.subr.mxu0 0.0
        %865 = vmatpush1.msra.mxu0 0.0
        %866 = vmatprep.subr.mxu0 0.0
        %867 = vmatpush1.msra.mxu0 0.0
        %868 = vmatprep.subr.mxu0 0.0
        %869 = vmatpush1.msra.mxu0 %v421
        %870 = vmatprep.subr.mxu0 0.0
        %871 = vmatpush1.msra.mxu0 %v420
        %872 = vmatprep.subr.mxu0 0.0
        %873 = vmatpush1.msra.mxu0 %v419
        %874 = vmatprep.subr.mxu0 0.0
        %875 = vmatpush1.msra.mxu0 %v418
        %876 = vmatprep.subr.mxu0 0.0
        %877 = vmatpush2.msra.mxu0 0.0
        %878 = vmatprep.subr.mxu0 0.0
        %879 = vmatpush2.msra.mxu0 0.0
        %880 = vmatprep.subr.mxu0 0.0
        %881 = vmatpush2.msra.mxu0 0.0
        %882 = vmatprep.subr.mxu0 0.0
        %883 = vmatpush2.msra.mxu0 0.0
        %884 = vmatprep.subr.mxu0 0.0
        %885 = vmatpush2.msra.mxu0 0.0
        %886 = vmatprep.subr.mxu0 0.0
        %887 = vmatpush2.msra.mxu0 0.0
        %888 = vmatprep.subr.mxu0 0.0
        %889 = vmatpush2.msra.mxu0 0.0
        %890 = vmatprep.subr.mxu0 0.0
        %891 = vmatpush2.msra.mxu0 0.0
        %892 = vmatprep.subr.mxu0 0.0
        %893 = vmatpush2.msra.mxu0 0.0
        %894 = vmatprep.subr.mxu0 0.0
        %895 = vmatpush2.msra.mxu0 0.0
        %896 = vmatprep.subr.mxu0 0.0
        %897 = vmatpush2.msra.mxu0 0.0
        %898 = vmatprep.subr.mxu0 0.0
        %899 = vmatpush2.msra.mxu0 0.0
        %900 = vmatprep.subr.mxu0 0.0
        %901 = vmatpush2.msra.mxu0 0.0
        %902 = vmatprep.subr.mxu0 0.0
        %903 = vmatpush2.msra.mxu0 0.0
        %904 = vmatprep.subr.mxu0 0.0
        %905 = vmatpush2.msra.mxu0 0.0
        %906 = vmatprep.subr.mxu0 0.0
        %907 = vmatpush2.msra.mxu0 0.0
        %908 = vmatprep.mubr.f32.mxu0 0.0
        %909 = vmatmul.mubr.f32.gmra.mxu0 %v842
        %v910 = vpop.f32.mrf.mxu0
        %v911 = vadd.f32 0.0, %v910
        %v912 = vpop.f32.mrf.mxu0
        %913 = vdwg.mxu0
        %v914 = vadd.f32 %v840, %v911
        %v915 = vxor.u32 %v914, 2147483648
        %v916 = vmul.f32 %v915, 1.442695
        %v917 = vpow.pop %v916
        %v918 = vadd.f32 %v917, 1.0
        %v919 = vrcp.pop %v918
        %v920 = vmul.f32 1.0, %v919
        %v921 = vtanh.pop %v914
        %923 = vrot.lane.b32.xlu0 %v838, 32
        %v924 = vpop.permute.xlu0 %923
        %v926 = vmul.f32 %v920, %v924
        %928 = vrot.lane.b32.xlu0 %v921, 64
        %v929 = vpop.permute.xlu0 %928
        %v931 = vmul.f32 %v920, %v929
        %933 = vrot.lane.b32.xlu0 %v931, 32
        %v934 = vpop.permute.xlu0 %933
        %v936 = vadd.f32 %v926, %v934
        %v937 = vtanh.pop %v936
        %939 = vrot.lane.b32.xlu0 %v937, 64
        %v940 = vpop.permute.xlu0 %939
        %v942 = vmul.f32 %v920, %v940
        %s943 = scalar_lea.vmem %s399, 48
        %v944 = vld [vmem:[%s943] sm:$0xff]
        %945 = vrot.lane.b32.xlu0 %v837, 96
        %v946 = vpop.permute.xlu0 %945
        %v948 = vsub.f32 %v942, %v946
        %950 = vset.pattern.permute.xlu0 0
        %951 = vperm.xlu0 %950, %v944
        %v952 = vpop.permute.xlu0 %951
        %v954 = vmul.f32 %v952, %v948
        %956 = vrot.lane.b32.xlu0 %v954, 32
        %v957 = vpop.permute.xlu0 %956
        %v959 = vadd.f32 %v837, %v957
        %960 = vst.msk [vmem:[#allocation4] sm:$0xff] %vm425, %v959
        %v961 = vsub.f32 %v936, %v924
        %v962 = vmul.f32 %v952, %v961
        %964 = vrot.lane.b32.xlu0 %v962, 96
        %v965 = vpop.permute.xlu0 %964
        %v967 = vadd.f32 %v838, %v965
        %968 = vst.msk [vmem:[#allocation5] sm:$0xff] %vm425, %v967
        %v969 = vmul.f32 %v952, %v942
        %971 = vrot.lane.b32.xlu0 %v969, 32
        %v972 = vpop.permute.xlu0 %971
        %s974 = scalar_lea.vmem %s373, 48 [#allocation12]
        %975 = vst.msk [vmem:[%s974] sm:$0xff] %vm425, %v972
        %v976 = vld [vmem:[#allocation2] sm:$0xff]
        %v977 = vld [vmem:[#allocation3] sm:$0xff]
        %s978 = scalar_lea.vmem %s378, 16
        %v979 = vld [vmem:[%s978] sm:$0xff]
        %v981 = vsel %vm425, %v976, 0
        %983 = vmatprep.subr.mxu0 0.0
        %984 = vmatpush1.msra.mxu0 0.0
        %985 = vmatprep.subr.mxu0 0.0
        %986 = vmatpush1.msra.mxu0 0.0
        %987 = vmatprep.subr.mxu0 0.0
        %988 = vmatpush1.msra.mxu0 0.0
        %989 = vmatprep.subr.mxu0 0.0
        %990 = vmatpush1.msra.mxu0 0.0
        %991 = vmatprep.subr.mxu0 0.0
        %992 = vmatpush1.msra.mxu0 0.0
        %993 = vmatprep.subr.mxu0 0.0
        %994 = vmatpush1.msra.mxu0 0.0
        %995 = vmatprep.subr.mxu0 0.0
        %996 = vmatpush1.msra.mxu0 0.0
        %997 = vmatprep.subr.mxu0 0.0
        %998 = vmatpush1.msra.mxu0 0.0
        %999 = vmatprep.subr.mxu0 0.0
        %1000 = vmatpush1.msra.mxu0 0.0
        %1001 = vmatprep.subr.mxu0 0.0
        %1002 = vmatpush1.msra.mxu0 0.0
        %1003 = vmatprep.subr.mxu0 0.0
        %1004 = vmatpush1.msra.mxu0 0.0
        %1005 = vmatprep.subr.mxu0 0.0
        %1006 = vmatpush1.msra.mxu0 0.0
        %1007 = vmatprep.subr.mxu0 0.0
        %1008 = vmatpush1.msra.mxu0 %v417
        %1009 = vmatprep.subr.mxu0 0.0
        %1010 = vmatpush1.msra.mxu0 %v416
        %1011 = vmatprep.subr.mxu0 0.0
        %1012 = vmatpush1.msra.mxu0 %v415
        %1013 = vmatprep.subr.mxu0 0.0
        %1014 = vmatpush1.msra.mxu0 %v414
        %1015 = vmatprep.subr.mxu0 0.0
        %1016 = vmatpush2.msra.mxu0 0.0
        %1017 = vmatprep.subr.mxu0 0.0
        %1018 = vmatpush2.msra.mxu0 0.0
        %1019 = vmatprep.subr.mxu0 0.0
        %1020 = vmatpush2.msra.mxu0 0.0
        %1021 = vmatprep.subr.mxu0 0.0
        %1022 = vmatpush2.msra.mxu0 0.0
        %1023 = vmatprep.subr.mxu0 0.0
        %1024 = vmatpush2.msra.mxu0 0.0
        %1025 = vmatprep.subr.mxu0 0.0
        %1026 = vmatpush2.msra.mxu0 0.0
        %1027 = vmatprep.subr.mxu0 0.0
        %1028 = vmatpush2.msra.mxu0 0.0
        %1029 = vmatprep.subr.mxu0 0.0
        %1030 = vmatpush2.msra.mxu0 0.0
        %1031 = vmatprep.subr.mxu0 0.0
        %1032 = vmatpush2.msra.mxu0 0.0
        %1033 = vmatprep.subr.mxu0 0.0
        %1034 = vmatpush2.msra.mxu0 0.0
        %1035 = vmatprep.subr.mxu0 0.0
        %1036 = vmatpush2.msra.mxu0 0.0
        %1037 = vmatprep.subr.mxu0 0.0
        %1038 = vmatpush2.msra.mxu0 0.0
        %1039 = vmatprep.subr.mxu0 0.0
        %1040 = vmatpush2.msra.mxu0 0.0
        %1041 = vmatprep.subr.mxu0 0.0
        %1042 = vmatpush2.msra.mxu0 0.0
        %1043 = vmatprep.subr.mxu0 0.0
        %1044 = vmatpush2.msra.mxu0 0.0
        %1045 = vmatprep.subr.mxu0 0.0
        %1046 = vmatpush2.msra.mxu0 0.0
        %1047 = vmatprep.mubr.f32.mxu0 0.0
        %1048 = vmatmul.mubr.f32.gmra.mxu0 %v981
        %v1049 = vpop.f32.mrf.mxu0
        %v1050 = vadd.f32 0.0, %v1049
        %v1051 = vpop.f32.mrf.mxu0
        %1052 = vdwg.mxu0
        %v1053 = vadd.f32 %v979, %v1050
        %v1054 = vxor.u32 %v1053, 2147483648
        %v1055 = vmul.f32 %v1054, 1.442695
        %v1056 = vpow.pop %v1055
        %v1057 = vadd.f32 %v1056, 1.0
        %v1058 = vrcp.pop %v1057
        %v1059 = vmul.f32 1.0, %v1058
        %v1060 = vtanh.pop %v1053
        %1062 = vrot.lane.b32.xlu0 %v977, 32
        %v1063 = vpop.permute.xlu0 %1062
        %v1065 = vmul.f32 %v1059, %v1063
        %1067 = vrot.lane.b32.xlu0 %v1060, 64
        %v1068 = vpop.permute.xlu0 %1067
        %v1070 = vmul.f32 %v1059, %v1068
        %1072 = vrot.lane.b32.xlu0 %v1070, 32
        %v1073 = vpop.permute.xlu0 %1072
        %v1075 = vadd.f32 %v1065, %v1073
        %v1076 = vtanh.pop %v1075
        %1078 = vrot.lane.b32.xlu0 %v1076, 64
        %v1079 = vpop.permute.xlu0 %1078
        %v1081 = vmul.f32 %v1059, %v1079
        %s1082 = scalar_lea.vmem %s392, 16
        %v1083 = vld [vmem:[%s1082] sm:$0xff]
        %1084 = vrot.lane.b32.xlu0 %v976, 96
        %v1085 = vpop.permute.xlu0 %1084
        %v1087 = vsub.f32 %v1081, %v1085
        %1089 = vset.pattern.permute.xlu0 0
        %1090 = vperm.xlu0 %1089, %v1083
        %v1091 = vpop.permute.xlu0 %1090
        %v1093 = vmul.f32 %v1091, %v1087
        %1095 = vrot.lane.b32.xlu0 %v1093, 32
        %v1096 = vpop.permute.xlu0 %1095
        %v1098 = vadd.f32 %v976, %v1096
        %1099 = vst.msk [vmem:[#allocation2] sm:$0xff] %vm425, %v1098
        %v1100 = vsub.f32 %v1075, %v1063
        %v1101 = vmul.f32 %v1091, %v1100
        %1103 = vrot.lane.b32.xlu0 %v1101, 96
        %v1104 = vpop.permute.xlu0 %1103
        %v1106 = vadd.f32 %v977, %v1104
        %1107 = vst.msk [vmem:[#allocation3] sm:$0xff] %vm425, %v1106
        %v1108 = vmul.f32 %v1091, %v1081
        %1110 = vrot.lane.b32.xlu0 %v1108, 32
        %v1111 = vpop.permute.xlu0 %1110
        %s1113 = scalar_lea.vmem %s366, 16 [#allocation11]
        %1114 = vst.msk [vmem:[%s1113] sm:$0xff] %vm425, %v1111
        %v1115 = vld [vmem:[#allocation4] sm:$0xff]
        %v1116 = vld [vmem:[#allocation5] sm:$0xff]
        %s1117 = scalar_lea.vmem %s385, 40
        %v1118 = vld [vmem:[%s1117] sm:$0xff]
        %v1120 = vsel %vm425, %v1115, 0
        %1122 = vmatprep.subr.mxu0 0.0
        %1123 = vmatpush1.msra.mxu0 0.0
        %1124 = vmatprep.subr.mxu0 0.0
        %1125 = vmatpush1.msra.mxu0 0.0
        %1126 = vmatprep.subr.mxu0 0.0
        %1127 = vmatpush1.msra.mxu0 0.0
        %1128 = vmatprep.subr.mxu0 0.0
        %1129 = vmatpush1.msra.mxu0 0.0
        %1130 = vmatprep.subr.mxu0 0.0
        %1131 = vmatpush1.msra.mxu0 0.0
        %1132 = vmatprep.subr.mxu0 0.0
        %1133 = vmatpush1.msra.mxu0 0.0
        %1134 = vmatprep.subr.mxu0 0.0
        %1135 = vmatpush1.msra.mxu0 0.0
        %1136 = vmatprep.subr.mxu0 0.0
        %1137 = vmatpush1.msra.mxu0 0.0
        %1138 = vmatprep.subr.mxu0 0.0
        %1139 = vmatpush1.msra.mxu0 0.0
        %1140 = vmatprep.subr.mxu0 0.0
        %1141 = vmatpush1.msra.mxu0 0.0
        %1142 = vmatprep.subr.mxu0 0.0
        %1143 = vmatpush1.msra.mxu0 0.0
        %1144 = vmatprep.subr.mxu0 0.0
        %1145 = vmatpush1.msra.mxu0 0.0
        %1146 = vmatprep.subr.mxu0 0.0
        %1147 = vmatpush1.msra.mxu0 %v421
        %1148 = vmatprep.subr.mxu0 0.0
        %1149 = vmatpush1.msra.mxu0 %v420
        %1150 = vmatprep.subr.mxu0 0.0
        %1151 = vmatpush1.msra.mxu0 %v419
        %1152 = vmatprep.subr.mxu0 0.0
        %1153 = vmatpush1.msra.mxu0 %v418
        %1154 = vmatprep.subr.mxu0 0.0
        %1155 = vmatpush2.msra.mxu0 0.0
        %1156 = vmatprep.subr.mxu0 0.0
        %1157 = vmatpush2.msra.mxu0 0.0
        %1158 = vmatprep.subr.mxu0 0.0
        %1159 = vmatpush2.msra.mxu0 0.0
        %1160 = vmatprep.subr.mxu0 0.0
        %1161 = vmatpush2.msra.mxu0 0.0
        %1162 = vmatprep.subr.mxu0 0.0
        %1163 = vmatpush2.msra.mxu0 0.0
        %1164 = vmatprep.subr.mxu0 0.0
        %1165 = vmatpush2.msra.mxu0 0.0
        %1166 = vmatprep.subr.mxu0 0.0
        %1167 = vmatpush2.msra.mxu0 0.0
        %1168 = vmatprep.subr.mxu0 0.0
        %1169 = vmatpush2.msra.mxu0 0.0
        %1170 = vmatprep.subr.mxu0 0.0
        %1171 = vmatpush2.msra.mxu0 0.0
        %1172 = vmatprep.subr.mxu0 0.0
        %1173 = vmatpush2.msra.mxu0 0.0
        %1174 = vmatprep.subr.mxu0 0.0
        %1175 = vmatpush2.msra.mxu0 0.0
        %1176 = vmatprep.subr.mxu0 0.0
        %1177 = vmatpush2.msra.mxu0 0.0
        %1178 = vmatprep.subr.mxu0 0.0
        %1179 = vmatpush2.msra.mxu0 0.0
        %1180 = vmatprep.subr.mxu0 0.0
        %1181 = vmatpush2.msra.mxu0 0.0
        %1182 = vmatprep.subr.mxu0 0.0
        %1183 = vmatpush2.msra.mxu0 0.0
        %1184 = vmatprep.subr.mxu0 0.0
        %1185 = vmatpush2.msra.mxu0 0.0
        %1186 = vmatprep.mubr.f32.mxu0 0.0
        %1187 = vmatmul.mubr.f32.gmra.mxu0 %v1120
        %v1188 = vpop.f32.mrf.mxu0
        %v1189 = vadd.f32 0.0, %v1188
        %v1190 = vpop.f32.mrf.mxu0
        %1191 = vdwg.mxu0
        %v1192 = vadd.f32 %v1118, %v1189
        %v1193 = vxor.u32 %v1192, 2147483648
        %v1194 = vmul.f32 %v1193, 1.442695
        %v1195 = vpow.pop %v1194
        %v1196 = vadd.f32 %v1195, 1.0
        %v1197 = vrcp.pop %v1196
        %v1198 = vmul.f32 1.0, %v1197
        %v1199 = vtanh.pop %v1192
        %1201 = vrot.lane.b32.xlu0 %v1116, 32
        %v1202 = vpop.permute.xlu0 %1201
        %v1204 = vmul.f32 %v1198, %v1202
        %1206 = vrot.lane.b32.xlu0 %v1199, 64
        %v1207 = vpop.permute.xlu0 %1206
        %v1209 = vmul.f32 %v1198, %v1207
        %1211 = vrot.lane.b32.xlu0 %v1209, 32
        %v1212 = vpop.permute.xlu0 %1211
        %v1214 = vadd.f32 %v1204, %v1212
        %v1215 = vtanh.pop %v1214
        %1217 = vrot.lane.b32.xlu0 %v1215, 64
        %v1218 = vpop.permute.xlu0 %1217
        %v1220 = vmul.f32 %v1198, %v1218
        %s1221 = scalar_lea.vmem %s399, 40
        %v1222 = vld [vmem:[%s1221] sm:$0xff]
        %1223 = vrot.lane.b32.xlu0 %v1115, 96
        %v1224 = vpop.permute.xlu0 %1223
        %v1226 = vsub.f32 %v1220, %v1224
        %1228 = vset.pattern.permute.xlu0 0
        %1229 = vperm.xlu0 %1228, %v1222
        %v1230 = vpop.permute.xlu0 %1229
        %v1232 = vmul.f32 %v1230, %v1226
        %1234 = vrot.lane.b32.xlu0 %v1232, 32
        %v1235 = vpop.permute.xlu0 %1234
        %v1237 = vadd.f32 %v1115, %v1235
        %1238 = vst.msk [vmem:[#allocation4] sm:$0xff] %vm425, %v1237
        %v1239 = vsub.f32 %v1214, %v1202
        %v1240 = vmul.f32 %v1230, %v1239
        %1242 = vrot.lane.b32.xlu0 %v1240, 96
        %v1243 = vpop.permute.xlu0 %1242
        %v1245 = vadd.f32 %v1116, %v1243
        %1246 = vst.msk [vmem:[#allocation5] sm:$0xff] %vm425, %v1245
        %v1247 = vmul.f32 %v1230, %v1220
        %1249 = vrot.lane.b32.xlu0 %v1247, 32
        %v1250 = vpop.permute.xlu0 %1249
        %s1252 = scalar_lea.vmem %s373, 40 [#allocation12]
        %1253 = vst.msk [vmem:[%s1252] sm:$0xff] %vm425, %v1250
        %v1254 = vld [vmem:[#allocation2] sm:$0xff]
        %v1255 = vld [vmem:[#allocation3] sm:$0xff]
        %s1256 = scalar_lea.vmem %s378, 24
        %v1257 = vld [vmem:[%s1256] sm:$0xff]
        %v1259 = vsel %vm425, %v1254, 0
        %1261 = vmatprep.subr.mxu0 0.0
        %1262 = vmatpush1.msra.mxu0 0.0
        %1263 = vmatprep.subr.mxu0 0.0
        %1264 = vmatpush1.msra.mxu0 0.0
        %1265 = vmatprep.subr.mxu0 0.0
        %1266 = vmatpush1.msra.mxu0 0.0
        %1267 = vmatprep.subr.mxu0 0.0
        %1268 = vmatpush1.msra.mxu0 0.0
        %1269 = vmatprep.subr.mxu0 0.0
        %1270 = vmatpush1.msra.mxu0 0.0
        %1271 = vmatprep.subr.mxu0 0.0
        %1272 = vmatpush1.msra.mxu0 0.0
        %1273 = vmatprep.subr.mxu0 0.0
        %1274 = vmatpush1.msra.mxu0 0.0
        %1275 = vmatprep.subr.mxu0 0.0
        %1276 = vmatpush1.msra.mxu0 0.0
        %1277 = vmatprep.subr.mxu0 0.0
        %1278 = vmatpush1.msra.mxu0 0.0
        %1279 = vmatprep.subr.mxu0 0.0
        %1280 = vmatpush1.msra.mxu0 0.0
        %1281 = vmatprep.subr.mxu0 0.0
        %1282 = vmatpush1.msra.mxu0 0.0
        %1283 = vmatprep.subr.mxu0 0.0
        %1284 = vmatpush1.msra.mxu0 0.0
        %1285 = vmatprep.subr.mxu0 0.0
        %1286 = vmatpush1.msra.mxu0 %v417
        %1287 = vmatprep.subr.mxu0 0.0
        %1288 = vmatpush1.msra.mxu0 %v416
        %1289 = vmatprep.subr.mxu0 0.0
        %1290 = vmatpush1.msra.mxu0 %v415
        %1291 = vmatprep.subr.mxu0 0.0
        %1292 = vmatpush1.msra.mxu0 %v414
        %1293 = vmatprep.subr.mxu0 0.0
        %1294 = vmatpush2.msra.mxu0 0.0
        %1295 = vmatprep.subr.mxu0 0.0
        %1296 = vmatpush2.msra.mxu0 0.0
        %1297 = vmatprep.subr.mxu0 0.0
        %1298 = vmatpush2.msra.mxu0 0.0
        %1299 = vmatprep.subr.mxu0 0.0
        %1300 = vmatpush2.msra.mxu0 0.0
        %1301 = vmatprep.subr.mxu0 0.0
        %1302 = vmatpush2.msra.mxu0 0.0
        %1303 = vmatprep.subr.mxu0 0.0
        %1304 = vmatpush2.msra.mxu0 0.0
        %1305 = vmatprep.subr.mxu0 0.0
        %1306 = vmatpush2.msra.mxu0 0.0
        %1307 = vmatprep.subr.mxu0 0.0
        %1308 = vmatpush2.msra.mxu0 0.0
        %1309 = vmatprep.subr.mxu0 0.0
        %1310 = vmatpush2.msra.mxu0 0.0
        %1311 = vmatprep.subr.mxu0 0.0
        %1312 = vmatpush2.msra.mxu0 0.0
        %1313 = vmatprep.subr.mxu0 0.0
        %1314 = vmatpush2.msra.mxu0 0.0
        %1315 = vmatprep.subr.mxu0 0.0
        %1316 = vmatpush2.msra.mxu0 0.0
        %1317 = vmatprep.subr.mxu0 0.0
        %1318 = vmatpush2.msra.mxu0 0.0
        %1319 = vmatprep.subr.mxu0 0.0
        %1320 = vmatpush2.msra.mxu0 0.0
        %1321 = vmatprep.subr.mxu0 0.0
        %1322 = vmatpush2.msra.mxu0 0.0
        %1323 = vmatprep.subr.mxu0 0.0
        %1324 = vmatpush2.msra.mxu0 0.0
        %1325 = vmatprep.mubr.f32.mxu0 0.0
        %1326 = vmatmul.mubr.f32.gmra.mxu0 %v1259
        %v1327 = vpop.f32.mrf.mxu0
        %v1328 = vadd.f32 0.0, %v1327
        %v1329 = vpop.f32.mrf.mxu0
        %1330 = vdwg.mxu0
        %v1331 = vadd.f32 %v1257, %v1328
        %v1332 = vxor.u32 %v1331, 2147483648
        %v1333 = vmul.f32 %v1332, 1.442695
        %v1334 = vpow.pop %v1333
        %v1335 = vadd.f32 %v1334, 1.0
        %v1336 = vrcp.pop %v1335
        %v1337 = vmul.f32 1.0, %v1336
        %v1338 = vtanh.pop %v1331
        %1340 = vrot.lane.b32.xlu0 %v1255, 32
        %v1341 = vpop.permute.xlu0 %1340
        %v1343 = vmul.f32 %v1337, %v1341
        %1345 = vrot.lane.b32.xlu0 %v1338, 64
        %v1346 = vpop.permute.xlu0 %1345
        %v1348 = vmul.f32 %v1337, %v1346
        %1350 = vrot.lane.b32.xlu0 %v1348, 32
        %v1351 = vpop.permute.xlu0 %1350
        %v1353 = vadd.f32 %v1343, %v1351
        %v1354 = vtanh.pop %v1353
        %1356 = vrot.lane.b32.xlu0 %v1354, 64
        %v1357 = vpop.permute.xlu0 %1356
        %v1359 = vmul.f32 %v1337, %v1357
        %s1360 = scalar_lea.vmem %s392, 24
        %v1361 = vld [vmem:[%s1360] sm:$0xff]
        %1362 = vrot.lane.b32.xlu0 %v1254, 96
        %v1363 = vpop.permute.xlu0 %1362
        %v1365 = vsub.f32 %v1359, %v1363
        %1367 = vset.pattern.permute.xlu0 0
        %1368 = vperm.xlu0 %1367, %v1361
        %v1369 = vpop.permute.xlu0 %1368
        %v1371 = vmul.f32 %v1369, %v1365
        %1373 = vrot.lane.b32.xlu0 %v1371, 32
        %v1374 = vpop.permute.xlu0 %1373
        %v1376 = vadd.f32 %v1254, %v1374
        %1377 = vst.msk [vmem:[#allocation2] sm:$0xff] %vm425, %v1376
        %v1378 = vsub.f32 %v1353, %v1341
        %v1379 = vmul.f32 %v1369, %v1378
        %1381 = vrot.lane.b32.xlu0 %v1379, 96
        %v1382 = vpop.permute.xlu0 %1381
        %v1384 = vadd.f32 %v1255, %v1382
        %1385 = vst.msk [vmem:[#allocation3] sm:$0xff] %vm425, %v1384
        %v1386 = vmul.f32 %v1369, %v1359
        %1388 = vrot.lane.b32.xlu0 %v1386, 32
        %v1389 = vpop.permute.xlu0 %1388
        %s1391 = scalar_lea.vmem %s366, 24 [#allocation11]
        %1392 = vst.msk [vmem:[%s1391] sm:$0xff] %vm425, %v1389
        %v1393 = vld [vmem:[#allocation4] sm:$0xff]
        %v1394 = vld [vmem:[#allocation5] sm:$0xff]
        %s1395 = scalar_lea.vmem %s385, 32
        %v1396 = vld [vmem:[%s1395] sm:$0xff]
        %v1398 = vsel %vm425, %v1393, 0
        %1400 = vmatprep.subr.mxu0 0.0
        %1401 = vmatpush1.msra.mxu0 0.0
        %1402 = vmatprep.subr.mxu0 0.0
        %1403 = vmatpush1.msra.mxu0 0.0
        %1404 = vmatprep.subr.mxu0 0.0
        %1405 = vmatpush1.msra.mxu0 0.0
        %1406 = vmatprep.subr.mxu0 0.0
        %1407 = vmatpush1.msra.mxu0 0.0
        %1408 = vmatprep.subr.mxu0 0.0
        %1409 = vmatpush1.msra.mxu0 0.0
        %1410 = vmatprep.subr.mxu0 0.0
        %1411 = vmatpush1.msra.mxu0 0.0
        %1412 = vmatprep.subr.mxu0 0.0
        %1413 = vmatpush1.msra.mxu0 0.0
        %1414 = vmatprep.subr.mxu0 0.0
        %1415 = vmatpush1.msra.mxu0 0.0
        %1416 = vmatprep.subr.mxu0 0.0
        %1417 = vmatpush1.msra.mxu0 0.0
        %1418 = vmatprep.subr.mxu0 0.0
        %1419 = vmatpush1.msra.mxu0 0.0
        %1420 = vmatprep.subr.mxu0 0.0
        %1421 = vmatpush1.msra.mxu0 0.0
        %1422 = vmatprep.subr.mxu0 0.0
        %1423 = vmatpush1.msra.mxu0 0.0
        %1424 = vmatprep.subr.mxu0 0.0
        %1425 = vmatpush1.msra.mxu0 %v421
        %1426 = vmatprep.subr.mxu0 0.0
        %1427 = vmatpush1.msra.mxu0 %v420
        %1428 = vmatprep.subr.mxu0 0.0
        %1429 = vmatpush1.msra.mxu0 %v419
        %1430 = vmatprep.subr.mxu0 0.0
        %1431 = vmatpush1.msra.mxu0 %v418
        %1432 = vmatprep.subr.mxu0 0.0
        %1433 = vmatpush2.msra.mxu0 0.0
        %1434 = vmatprep.subr.mxu0 0.0
        %1435 = vmatpush2.msra.mxu0 0.0
        %1436 = vmatprep.subr.mxu0 0.0
        %1437 = vmatpush2.msra.mxu0 0.0
        %1438 = vmatprep.subr.mxu0 0.0
        %1439 = vmatpush2.msra.mxu0 0.0
        %1440 = vmatprep.subr.mxu0 0.0
        %1441 = vmatpush2.msra.mxu0 0.0
        %1442 = vmatprep.subr.mxu0 0.0
        %1443 = vmatpush2.msra.mxu0 0.0
        %1444 = vmatprep.subr.mxu0 0.0
        %1445 = vmatpush2.msra.mxu0 0.0
        %1446 = vmatprep.subr.mxu0 0.0
        %1447 = vmatpush2.msra.mxu0 0.0
        %1448 = vmatprep.subr.mxu0 0.0
        %1449 = vmatpush2.msra.mxu0 0.0
        %1450 = vmatprep.subr.mxu0 0.0
        %1451 = vmatpush2.msra.mxu0 0.0
        %1452 = vmatprep.subr.mxu0 0.0
        %1453 = vmatpush2.msra.mxu0 0.0
        %1454 = vmatprep.subr.mxu0 0.0
        %1455 = vmatpush2.msra.mxu0 0.0
        %1456 = vmatprep.subr.mxu0 0.0
        %1457 = vmatpush2.msra.mxu0 0.0
        %1458 = vmatprep.subr.mxu0 0.0
        %1459 = vmatpush2.msra.mxu0 0.0
        %1460 = vmatprep.subr.mxu0 0.0
        %1461 = vmatpush2.msra.mxu0 0.0
        %1462 = vmatprep.subr.mxu0 0.0
        %1463 = vmatpush2.msra.mxu0 0.0
        %1464 = vmatprep.mubr.f32.mxu0 0.0
        %1465 = vmatmul.mubr.f32.gmra.mxu0 %v1398
        %v1466 = vpop.f32.mrf.mxu0
        %v1467 = vadd.f32 0.0, %v1466
        %v1468 = vpop.f32.mrf.mxu0
        %1469 = vdwg.mxu0
        %v1470 = vadd.f32 %v1396, %v1467
        %v1471 = vxor.u32 %v1470, 2147483648
        %v1472 = vmul.f32 %v1471, 1.442695
        %v1473 = vpow.pop %v1472
        %v1474 = vadd.f32 %v1473, 1.0
        %v1475 = vrcp.pop %v1474
        %v1476 = vmul.f32 1.0, %v1475
        %v1477 = vtanh.pop %v1470
        %1479 = vrot.lane.b32.xlu0 %v1394, 32
        %v1480 = vpop.permute.xlu0 %1479
        %v1482 = vmul.f32 %v1476, %v1480
        %1484 = vrot.lane.b32.xlu0 %v1477, 64
        %v1485 = vpop.permute.xlu0 %1484
        %v1487 = vmul.f32 %v1476, %v1485
        %1489 = vrot.lane.b32.xlu0 %v1487, 32
        %v1490 = vpop.permute.xlu0 %1489
        %v1492 = vadd.f32 %v1482, %v1490
        %v1493 = vtanh.pop %v1492
        %1495 = vrot.lane.b32.xlu0 %v1493, 64
        %v1496 = vpop.permute.xlu0 %1495
        %v1498 = vmul.f32 %v1476, %v1496
        %s1499 = scalar_lea.vmem %s399, 32
        %v1500 = vld [vmem:[%s1499] sm:$0xff]
        %1501 = vrot.lane.b32.xlu0 %v1393, 96
        %v1502 = vpop.permute.xlu0 %1501
        %v1504 = vsub.f32 %v1498, %v1502
        %1506 = vset.pattern.permute.xlu0 0
        %1507 = vperm.xlu0 %1506, %v1500
        %v1508 = vpop.permute.xlu0 %1507
        %v1510 = vmul.f32 %v1508, %v1504
        %1512 = vrot.lane.b32.xlu0 %v1510, 32
        %v1513 = vpop.permute.xlu0 %1512
        %v1515 = vadd.f32 %v1393, %v1513
        %1516 = vst.msk [vmem:[#allocation4] sm:$0xff] %vm425, %v1515
        %v1517 = vsub.f32 %v1492, %v1480
        %v1518 = vmul.f32 %v1508, %v1517
        %1520 = vrot.lane.b32.xlu0 %v1518, 96
        %v1521 = vpop.permute.xlu0 %1520
        %v1523 = vadd.f32 %v1394, %v1521
        %1524 = vst.msk [vmem:[#allocation5] sm:$0xff] %vm425, %v1523
        %v1525 = vmul.f32 %v1508, %v1498
        %1527 = vrot.lane.b32.xlu0 %v1525, 32
        %v1528 = vpop.permute.xlu0 %1527
        %s1530 = scalar_lea.vmem %s373, 32 [#allocation12]
        %1531 = vst.msk [vmem:[%s1530] sm:$0xff] %vm425, %v1528
        %v1532 = vld [vmem:[#allocation2] sm:$0xff]
        %v1533 = vld [vmem:[#allocation3] sm:$0xff]
        %s1534 = scalar_lea.vmem %s378, 32
        %v1535 = vld [vmem:[%s1534] sm:$0xff]
        %v1537 = vsel %vm425, %v1532, 0
        %1539 = vmatprep.subr.mxu0 0.0
        %1540 = vmatpush1.msra.mxu0 0.0
        %1541 = vmatprep.subr.mxu0 0.0
        %1542 = vmatpush1.msra.mxu0 0.0
        %1543 = vmatprep.subr.mxu0 0.0
        %1544 = vmatpush1.msra.mxu0 0.0
        %1545 = vmatprep.subr.mxu0 0.0
        %1546 = vmatpush1.msra.mxu0 0.0
        %1547 = vmatprep.subr.mxu0 0.0
        %1548 = vmatpush1.msra.mxu0 0.0
        %1549 = vmatprep.subr.mxu0 0.0
        %1550 = vmatpush1.msra.mxu0 0.0
        %1551 = vmatprep.subr.mxu0 0.0
        %1552 = vmatpush1.msra.mxu0 0.0
        %1553 = vmatprep.subr.mxu0 0.0
        %1554 = vmatpush1.msra.mxu0 0.0
        %1555 = vmatprep.subr.mxu0 0.0
        %1556 = vmatpush1.msra.mxu0 0.0
        %1557 = vmatprep.subr.mxu0 0.0
        %1558 = vmatpush1.msra.mxu0 0.0
        %1559 = vmatprep.subr.mxu0 0.0
        %1560 = vmatpush1.msra.mxu0 0.0
        %1561 = vmatprep.subr.mxu0 0.0
        %1562 = vmatpush1.msra.mxu0 0.0
        %1563 = vmatprep.subr.mxu0 0.0
        %1564 = vmatpush1.msra.mxu0 %v417
        %1565 = vmatprep.subr.mxu0 0.0
        %1566 = vmatpush1.msra.mxu0 %v416
        %1567 = vmatprep.subr.mxu0 0.0
        %1568 = vmatpush1.msra.mxu0 %v415
        %1569 = vmatprep.subr.mxu0 0.0
        %1570 = vmatpush1.msra.mxu0 %v414
        %1571 = vmatprep.subr.mxu0 0.0
        %1572 = vmatpush2.msra.mxu0 0.0
        %1573 = vmatprep.subr.mxu0 0.0
        %1574 = vmatpush2.msra.mxu0 0.0
        %1575 = vmatprep.subr.mxu0 0.0
        %1576 = vmatpush2.msra.mxu0 0.0
        %1577 = vmatprep.subr.mxu0 0.0
        %1578 = vmatpush2.msra.mxu0 0.0
        %1579 = vmatprep.subr.mxu0 0.0
        %1580 = vmatpush2.msra.mxu0 0.0
        %1581 = vmatprep.subr.mxu0 0.0
        %1582 = vmatpush2.msra.mxu0 0.0
        %1583 = vmatprep.subr.mxu0 0.0
        %1584 = vmatpush2.msra.mxu0 0.0
        %1585 = vmatprep.subr.mxu0 0.0
        %1586 = vmatpush2.msra.mxu0 0.0
        %1587 = vmatprep.subr.mxu0 0.0
        %1588 = vmatpush2.msra.mxu0 0.0
        %1589 = vmatprep.subr.mxu0 0.0
        %1590 = vmatpush2.msra.mxu0 0.0
        %1591 = vmatprep.subr.mxu0 0.0
        %1592 = vmatpush2.msra.mxu0 0.0
        %1593 = vmatprep.subr.mxu0 0.0
        %1594 = vmatpush2.msra.mxu0 0.0
        %1595 = vmatprep.subr.mxu0 0.0
        %1596 = vmatpush2.msra.mxu0 0.0
        %1597 = vmatprep.subr.mxu0 0.0
        %1598 = vmatpush2.msra.mxu0 0.0
        %1599 = vmatprep.subr.mxu0 0.0
        %1600 = vmatpush2.msra.mxu0 0.0
        %1601 = vmatprep.subr.mxu0 0.0
        %1602 = vmatpush2.msra.mxu0 0.0
        %1603 = vmatprep.mubr.f32.mxu0 0.0
        %1604 = vmatmul.mubr.f32.gmra.mxu0 %v1537
        %v1605 = vpop.f32.mrf.mxu0
        %v1606 = vadd.f32 0.0, %v1605
        %v1607 = vpop.f32.mrf.mxu0
        %1608 = vdwg.mxu0
        %v1609 = vadd.f32 %v1535, %v1606
        %v1610 = vxor.u32 %v1609, 2147483648
        %v1611 = vmul.f32 %v1610, 1.442695
        %v1612 = vpow.pop %v1611
        %v1613 = vadd.f32 %v1612, 1.0
        %v1614 = vrcp.pop %v1613
        %v1615 = vmul.f32 1.0, %v1614
        %v1616 = vtanh.pop %v1609
        %1618 = vrot.lane.b32.xlu0 %v1533, 32
        %v1619 = vpop.permute.xlu0 %1618
        %v1621 = vmul.f32 %v1615, %v1619
        %1623 = vrot.lane.b32.xlu0 %v1616, 64
        %v1624 = vpop.permute.xlu0 %1623
        %v1626 = vmul.f32 %v1615, %v1624
        %1628 = vrot.lane.b32.xlu0 %v1626, 32
        %v1629 = vpop.permute.xlu0 %1628
        %v1631 = vadd.f32 %v1621, %v1629
        %v1632 = vtanh.pop %v1631
        %1634 = vrot.lane.b32.xlu0 %v1632, 64
        %v1635 = vpop.permute.xlu0 %1634
        %v1637 = vmul.f32 %v1615, %v1635
        %s1638 = scalar_lea.vmem %s392, 32
        %v1639 = vld [vmem:[%s1638] sm:$0xff]
        %1640 = vrot.lane.b32.xlu0 %v1532, 96
        %v1641 = vpop.permute.xlu0 %1640
        %v1643 = vsub.f32 %v1637, %v1641
        %1645 = vset.pattern.permute.xlu0 0
        %1646 = vperm.xlu0 %1645, %v1639
        %v1647 = vpop.permute.xlu0 %1646
        %v1649 = vmul.f32 %v1647, %v1643
        %1651 = vrot.lane.b32.xlu0 %v1649, 32
        %v1652 = vpop.permute.xlu0 %1651
        %v1654 = vadd.f32 %v1532, %v1652
        %1655 = vst.msk [vmem:[#allocation2] sm:$0xff] %vm425, %v1654
        %v1656 = vsub.f32 %v1631, %v1619
        %v1657 = vmul.f32 %v1647, %v1656
        %1659 = vrot.lane.b32.xlu0 %v1657, 96
        %v1660 = vpop.permute.xlu0 %1659
        %v1662 = vadd.f32 %v1533, %v1660
        %1663 = vst.msk [vmem:[#allocation3] sm:$0xff] %vm425, %v1662
        %v1664 = vmul.f32 %v1647, %v1637
        %1666 = vrot.lane.b32.xlu0 %v1664, 32
        %v1667 = vpop.permute.xlu0 %1666
        %s1669 = scalar_lea.vmem %s366, 32 [#allocation11]
        %1670 = vst.msk [vmem:[%s1669] sm:$0xff] %vm425, %v1667
        %v1671 = vld [vmem:[#allocation4] sm:$0xff]
        %v1672 = vld [vmem:[#allocation5] sm:$0xff]
        %s1673 = scalar_lea.vmem %s385, 24
        %v1674 = vld [vmem:[%s1673] sm:$0xff]
        %v1676 = vsel %vm425, %v1671, 0
        %1678 = vmatprep.subr.mxu0 0.0
        %1679 = vmatpush1.msra.mxu0 0.0
        %1680 = vmatprep.subr.mxu0 0.0
        %1681 = vmatpush1.msra.mxu0 0.0
        %1682 = vmatprep.subr.mxu0 0.0
        %1683 = vmatpush1.msra.mxu0 0.0
        %1684 = vmatprep.subr.mxu0 0.0
        %1685 = vmatpush1.msra.mxu0 0.0
        %1686 = vmatprep.subr.mxu0 0.0
        %1687 = vmatpush1.msra.mxu0 0.0
        %1688 = vmatprep.subr.mxu0 0.0
        %1689 = vmatpush1.msra.mxu0 0.0
        %1690 = vmatprep.subr.mxu0 0.0
        %1691 = vmatpush1.msra.mxu0 0.0
        %1692 = vmatprep.subr.mxu0 0.0
        %1693 = vmatpush1.msra.mxu0 0.0
        %1694 = vmatprep.subr.mxu0 0.0
        %1695 = vmatpush1.msra.mxu0 0.0
        %1696 = vmatprep.subr.mxu0 0.0
        %1697 = vmatpush1.msra.mxu0 0.0
        %1698 = vmatprep.subr.mxu0 0.0
        %1699 = vmatpush1.msra.mxu0 0.0
        %1700 = vmatprep.subr.mxu0 0.0
        %1701 = vmatpush1.msra.mxu0 0.0
        %1702 = vmatprep.subr.mxu0 0.0
        %1703 = vmatpush1.msra.mxu0 %v421
        %1704 = vmatprep.subr.mxu0 0.0
        %1705 = vmatpush1.msra.mxu0 %v420
        %1706 = vmatprep.subr.mxu0 0.0
        %1707 = vmatpush1.msra.mxu0 %v419
        %1708 = vmatprep.subr.mxu0 0.0
        %1709 = vmatpush1.msra.mxu0 %v418
        %1710 = vmatprep.subr.mxu0 0.0
        %1711 = vmatpush2.msra.mxu0 0.0
        %1712 = vmatprep.subr.mxu0 0.0
        %1713 = vmatpush2.msra.mxu0 0.0
        %1714 = vmatprep.subr.mxu0 0.0
        %1715 = vmatpush2.msra.mxu0 0.0
        %1716 = vmatprep.subr.mxu0 0.0
        %1717 = vmatpush2.msra.mxu0 0.0
        %1718 = vmatprep.subr.mxu0 0.0
        %1719 = vmatpush2.msra.mxu0 0.0
        %1720 = vmatprep.subr.mxu0 0.0
        %1721 = vmatpush2.msra.mxu0 0.0
        %1722 = vmatprep.subr.mxu0 0.0
        %1723 = vmatpush2.msra.mxu0 0.0
        %1724 = vmatprep.subr.mxu0 0.0
        %1725 = vmatpush2.msra.mxu0 0.0
        %1726 = vmatprep.subr.mxu0 0.0
        %1727 = vmatpush2.msra.mxu0 0.0
        %1728 = vmatprep.subr.mxu0 0.0
        %1729 = vmatpush2.msra.mxu0 0.0
        %1730 = vmatprep.subr.mxu0 0.0
        %1731 = vmatpush2.msra.mxu0 0.0
        %1732 = vmatprep.subr.mxu0 0.0
        %1733 = vmatpush2.msra.mxu0 0.0
        %1734 = vmatprep.subr.mxu0 0.0
        %1735 = vmatpush2.msra.mxu0 0.0
        %1736 = vmatprep.subr.mxu0 0.0
        %1737 = vmatpush2.msra.mxu0 0.0
        %1738 = vmatprep.subr.mxu0 0.0
        %1739 = vmatpush2.msra.mxu0 0.0
        %1740 = vmatprep.subr.mxu0 0.0
        %1741 = vmatpush2.msra.mxu0 0.0
        %1742 = vmatprep.mubr.f32.mxu0 0.0
        %1743 = vmatmul.mubr.f32.gmra.mxu0 %v1676
        %v1744 = vpop.f32.mrf.mxu0
        %v1745 = vadd.f32 0.0, %v1744
        %v1746 = vpop.f32.mrf.mxu0
        %1747 = vdwg.mxu0
        %v1748 = vadd.f32 %v1674, %v1745
        %v1749 = vxor.u32 %v1748, 2147483648
        %v1750 = vmul.f32 %v1749, 1.442695
        %v1751 = vpow.pop %v1750
        %v1752 = vadd.f32 %v1751, 1.0
        %v1753 = vrcp.pop %v1752
        %v1754 = vmul.f32 1.0, %v1753
        %v1755 = vtanh.pop %v1748
        %1757 = vrot.lane.b32.xlu0 %v1672, 32
        %v1758 = vpop.permute.xlu0 %1757
        %v1760 = vmul.f32 %v1754, %v1758
        %1762 = vrot.lane.b32.xlu0 %v1755, 64
        %v1763 = vpop.permute.xlu0 %1762
        %v1765 = vmul.f32 %v1754, %v1763
        %1767 = vrot.lane.b32.xlu0 %v1765, 32
        %v1768 = vpop.permute.xlu0 %1767
        %v1770 = vadd.f32 %v1760, %v1768
        %v1771 = vtanh.pop %v1770
        %1773 = vrot.lane.b32.xlu0 %v1771, 64
        %v1774 = vpop.permute.xlu0 %1773
        %v1776 = vmul.f32 %v1754, %v1774
        %s1777 = scalar_lea.vmem %s399, 24
        %v1778 = vld [vmem:[%s1777] sm:$0xff]
        %1779 = vrot.lane.b32.xlu0 %v1671, 96
        %v1780 = vpop.permute.xlu0 %1779
        %v1782 = vsub.f32 %v1776, %v1780
        %1784 = vset.pattern.permute.xlu0 0
        %1785 = vperm.xlu0 %1784, %v1778
        %v1786 = vpop.permute.xlu0 %1785
        %v1788 = vmul.f32 %v1786, %v1782
        %1790 = vrot.lane.b32.xlu0 %v1788, 32
        %v1791 = vpop.permute.xlu0 %1790
        %v1793 = vadd.f32 %v1671, %v1791
        %1794 = vst.msk [vmem:[#allocation4] sm:$0xff] %vm425, %v1793
        %v1795 = vsub.f32 %v1770, %v1758
        %v1796 = vmul.f32 %v1786, %v1795
        %1798 = vrot.lane.b32.xlu0 %v1796, 96
        %v1799 = vpop.permute.xlu0 %1798
        %v1801 = vadd.f32 %v1672, %v1799
        %1802 = vst.msk [vmem:[#allocation5] sm:$0xff] %vm425, %v1801
        %v1803 = vmul.f32 %v1786, %v1776
        %1805 = vrot.lane.b32.xlu0 %v1803, 32
        %v1806 = vpop.permute.xlu0 %1805
        %s1808 = scalar_lea.vmem %s373, 24 [#allocation12]
        %1809 = vst.msk [vmem:[%s1808] sm:$0xff] %vm425, %v1806
        %v1810 = vld [vmem:[#allocation2] sm:$0xff]
        %v1811 = vld [vmem:[#allocation3] sm:$0xff]
        %s1812 = scalar_lea.vmem %s378, 40
        %v1813 = vld [vmem:[%s1812] sm:$0xff]
        %v1815 = vsel %vm425, %v1810, 0
        %1817 = vmatprep.subr.mxu0 0.0
        %1818 = vmatpush1.msra.mxu0 0.0
        %1819 = vmatprep.subr.mxu0 0.0
        %1820 = vmatpush1.msra.mxu0 0.0
        %1821 = vmatprep.subr.mxu0 0.0
        %1822 = vmatpush1.msra.mxu0 0.0
        %1823 = vmatprep.subr.mxu0 0.0
        %1824 = vmatpush1.msra.mxu0 0.0
        %1825 = vmatprep.subr.mxu0 0.0
        %1826 = vmatpush1.msra.mxu0 0.0
        %1827 = vmatprep.subr.mxu0 0.0
        %1828 = vmatpush1.msra.mxu0 0.0
        %1829 = vmatprep.subr.mxu0 0.0
        %1830 = vmatpush1.msra.mxu0 0.0
        %1831 = vmatprep.subr.mxu0 0.0
        %1832 = vmatpush1.msra.mxu0 0.0
        %1833 = vmatprep.subr.mxu0 0.0
        %1834 = vmatpush1.msra.mxu0 0.0
        %1835 = vmatprep.subr.mxu0 0.0
        %1836 = vmatpush1.msra.mxu0 0.0
        %1837 = vmatprep.subr.mxu0 0.0
        %1838 = vmatpush1.msra.mxu0 0.0
        %1839 = vmatprep.subr.mxu0 0.0
        %1840 = vmatpush1.msra.mxu0 0.0
        %1841 = vmatprep.subr.mxu0 0.0
        %1842 = vmatpush1.msra.mxu0 %v417
        %1843 = vmatprep.subr.mxu0 0.0
        %1844 = vmatpush1.msra.mxu0 %v416
        %1845 = vmatprep.subr.mxu0 0.0
        %1846 = vmatpush1.msra.mxu0 %v415
        %1847 = vmatprep.subr.mxu0 0.0
        %1848 = vmatpush1.msra.mxu0 %v414
        %1849 = vmatprep.subr.mxu0 0.0
        %1850 = vmatpush2.msra.mxu0 0.0
        %1851 = vmatprep.subr.mxu0 0.0
        %1852 = vmatpush2.msra.mxu0 0.0
        %1853 = vmatprep.subr.mxu0 0.0
        %1854 = vmatpush2.msra.mxu0 0.0
        %1855 = vmatprep.subr.mxu0 0.0
        %1856 = vmatpush2.msra.mxu0 0.0
        %1857 = vmatprep.subr.mxu0 0.0
        %1858 = vmatpush2.msra.mxu0 0.0
        %1859 = vmatprep.subr.mxu0 0.0
        %1860 = vmatpush2.msra.mxu0 0.0
        %1861 = vmatprep.subr.mxu0 0.0
        %1862 = vmatpush2.msra.mxu0 0.0
        %1863 = vmatprep.subr.mxu0 0.0
        %1864 = vmatpush2.msra.mxu0 0.0
        %1865 = vmatprep.subr.mxu0 0.0
        %1866 = vmatpush2.msra.mxu0 0.0
        %1867 = vmatprep.subr.mxu0 0.0
        %1868 = vmatpush2.msra.mxu0 0.0
        %1869 = vmatprep.subr.mxu0 0.0
        %1870 = vmatpush2.msra.mxu0 0.0
        %1871 = vmatprep.subr.mxu0 0.0
        %1872 = vmatpush2.msra.mxu0 0.0
        %1873 = vmatprep.subr.mxu0 0.0
        %1874 = vmatpush2.msra.mxu0 0.0
        %1875 = vmatprep.subr.mxu0 0.0
        %1876 = vmatpush2.msra.mxu0 0.0
        %1877 = vmatprep.subr.mxu0 0.0
        %1878 = vmatpush2.msra.mxu0 0.0
        %1879 = vmatprep.subr.mxu0 0.0
        %1880 = vmatpush2.msra.mxu0 0.0
        %1881 = vmatprep.mubr.f32.mxu0 0.0
        %1882 = vmatmul.mubr.f32.gmra.mxu0 %v1815
        %v1883 = vpop.f32.mrf.mxu0
        %v1884 = vadd.f32 0.0, %v1883
        %v1885 = vpop.f32.mrf.mxu0
        %1886 = vdwg.mxu0
        %v1887 = vadd.f32 %v1813, %v1884
        %v1888 = vxor.u32 %v1887, 2147483648
        %v1889 = vmul.f32 %v1888, 1.442695
        %v1890 = vpow.pop %v1889
        %v1891 = vadd.f32 %v1890, 1.0
        %v1892 = vrcp.pop %v1891
        %v1893 = vmul.f32 1.0, %v1892
        %v1894 = vtanh.pop %v1887
        %1896 = vrot.lane.b32.xlu0 %v1811, 32
        %v1897 = vpop.permute.xlu0 %1896
        %v1899 = vmul.f32 %v1893, %v1897
        %1901 = vrot.lane.b32.xlu0 %v1894, 64
        %v1902 = vpop.permute.xlu0 %1901
        %v1904 = vmul.f32 %v1893, %v1902
        %1906 = vrot.lane.b32.xlu0 %v1904, 32
        %v1907 = vpop.permute.xlu0 %1906
        %v1909 = vadd.f32 %v1899, %v1907
        %v1910 = vtanh.pop %v1909
        %1912 = vrot.lane.b32.xlu0 %v1910, 64
        %v1913 = vpop.permute.xlu0 %1912
        %v1915 = vmul.f32 %v1893, %v1913
        %s1916 = scalar_lea.vmem %s392, 40
        %v1917 = vld [vmem:[%s1916] sm:$0xff]
        %1918 = vrot.lane.b32.xlu0 %v1810, 96
        %v1919 = vpop.permute.xlu0 %1918
        %v1921 = vsub.f32 %v1915, %v1919
        %1923 = vset.pattern.permute.xlu0 0
        %1924 = vperm.xlu0 %1923, %v1917
        %v1925 = vpop.permute.xlu0 %1924
        %v1927 = vmul.f32 %v1925, %v1921
        %1929 = vrot.lane.b32.xlu0 %v1927, 32
        %v1930 = vpop.permute.xlu0 %1929
        %v1932 = vadd.f32 %v1810, %v1930
        %1933 = vst.msk [vmem:[#allocation2] sm:$0xff] %vm425, %v1932
        %v1934 = vsub.f32 %v1909, %v1897
        %v1935 = vmul.f32 %v1925, %v1934
        %1937 = vrot.lane.b32.xlu0 %v1935, 96
        %v1938 = vpop.permute.xlu0 %1937
        %v1940 = vadd.f32 %v1811, %v1938
        %1941 = vst.msk [vmem:[#allocation3] sm:$0xff] %vm425, %v1940
        %v1942 = vmul.f32 %v1925, %v1915
        %1944 = vrot.lane.b32.xlu0 %v1942, 32
        %v1945 = vpop.permute.xlu0 %1944
        %s1947 = scalar_lea.vmem %s366, 40 [#allocation11]
        %1948 = vst.msk [vmem:[%s1947] sm:$0xff] %vm425, %v1945
        %v1949 = vld [vmem:[#allocation4] sm:$0xff]
        %v1950 = vld [vmem:[#allocation5] sm:$0xff]
        %s1951 = scalar_lea.vmem %s385, 16
        %v1952 = vld [vmem:[%s1951] sm:$0xff]
        %v1954 = vsel %vm425, %v1949, 0
        %1956 = vmatprep.subr.mxu0 0.0
        %1957 = vmatpush1.msra.mxu0 0.0
        %1958 = vmatprep.subr.mxu0 0.0
        %1959 = vmatpush1.msra.mxu0 0.0
        %1960 = vmatprep.subr.mxu0 0.0
        %1961 = vmatpush1.msra.mxu0 0.0
        %1962 = vmatprep.subr.mxu0 0.0
        %1963 = vmatpush1.msra.mxu0 0.0
        %1964 = vmatprep.subr.mxu0 0.0
        %1965 = vmatpush1.msra.mxu0 0.0
        %1966 = vmatprep.subr.mxu0 0.0
        %1967 = vmatpush1.msra.mxu0 0.0
        %1968 = vmatprep.subr.mxu0 0.0
        %1969 = vmatpush1.msra.mxu0 0.0
        %1970 = vmatprep.subr.mxu0 0.0
        %1971 = vmatpush1.msra.mxu0 0.0
        %1972 = vmatprep.subr.mxu0 0.0
        %1973 = vmatpush1.msra.mxu0 0.0
        %1974 = vmatprep.subr.mxu0 0.0
        %1975 = vmatpush1.msra.mxu0 0.0
        %1976 = vmatprep.subr.mxu0 0.0
        %1977 = vmatpush1.msra.mxu0 0.0
        %1978 = vmatprep.subr.mxu0 0.0
        %1979 = vmatpush1.msra.mxu0 0.0
        %1980 = vmatprep.subr.mxu0 0.0
        %1981 = vmatpush1.msra.mxu0 %v421
        %1982 = vmatprep.subr.mxu0 0.0
        %1983 = vmatpush1.msra.mxu0 %v420
        %1984 = vmatprep.subr.mxu0 0.0
        %1985 = vmatpush1.msra.mxu0 %v419
        %1986 = vmatprep.subr.mxu0 0.0
        %1987 = vmatpush1.msra.mxu0 %v418
        %1988 = vmatprep.subr.mxu0 0.0
        %1989 = vmatpush2.msra.mxu0 0.0
        %1990 = vmatprep.subr.mxu0 0.0
        %1991 = vmatpush2.msra.mxu0 0.0
        %1992 = vmatprep.subr.mxu0 0.0
        %1993 = vmatpush2.msra.mxu0 0.0
        %1994 = vmatprep.subr.mxu0 0.0
        %1995 = vmatpush2.msra.mxu0 0.0
        %1996 = vmatprep.subr.mxu0 0.0
        %1997 = vmatpush2.msra.mxu0 0.0
        %1998 = vmatprep.subr.mxu0 0.0
        %1999 = vmatpush2.msra.mxu0 0.0
        %2000 = vmatprep.subr.mxu0 0.0
        %2001 = vmatpush2.msra.mxu0 0.0
        %2002 = vmatprep.subr.mxu0 0.0
        %2003 = vmatpush2.msra.mxu0 0.0
        %2004 = vmatprep.subr.mxu0 0.0
        %2005 = vmatpush2.msra.mxu0 0.0
        %2006 = vmatprep.subr.mxu0 0.0
        %2007 = vmatpush2.msra.mxu0 0.0
        %2008 = vmatprep.subr.mxu0 0.0
        %2009 = vmatpush2.msra.mxu0 0.0
        %2010 = vmatprep.subr.mxu0 0.0
        %2011 = vmatpush2.msra.mxu0 0.0
        %2012 = vmatprep.subr.mxu0 0.0
        %2013 = vmatpush2.msra.mxu0 0.0
        %2014 = vmatprep.subr.mxu0 0.0
        %2015 = vmatpush2.msra.mxu0 0.0
        %2016 = vmatprep.subr.mxu0 0.0
        %2017 = vmatpush2.msra.mxu0 0.0
        %2018 = vmatprep.subr.mxu0 0.0
        %2019 = vmatpush2.msra.mxu0 0.0
        %2020 = vmatprep.mubr.f32.mxu0 0.0
        %2021 = vmatmul.mubr.f32.gmra.mxu0 %v1954
        %v2022 = vpop.f32.mrf.mxu0
        %v2023 = vadd.f32 0.0, %v2022
        %v2024 = vpop.f32.mrf.mxu0
        %2025 = vdwg.mxu0
        %v2026 = vadd.f32 %v1952, %v2023
        %v2027 = vxor.u32 %v2026, 2147483648
        %v2028 = vmul.f32 %v2027, 1.442695
        %v2029 = vpow.pop %v2028
        %v2030 = vadd.f32 %v2029, 1.0
        %v2031 = vrcp.pop %v2030
        %v2032 = vmul.f32 1.0, %v2031
        %v2033 = vtanh.pop %v2026
        %2035 = vrot.lane.b32.xlu0 %v1950, 32
        %v2036 = vpop.permute.xlu0 %2035
        %v2038 = vmul.f32 %v2032, %v2036
        %2040 = vrot.lane.b32.xlu0 %v2033, 64
        %v2041 = vpop.permute.xlu0 %2040
        %v2043 = vmul.f32 %v2032, %v2041
        %2045 = vrot.lane.b32.xlu0 %v2043, 32
        %v2046 = vpop.permute.xlu0 %2045
        %v2048 = vadd.f32 %v2038, %v2046
        %v2049 = vtanh.pop %v2048
        %2051 = vrot.lane.b32.xlu0 %v2049, 64
        %v2052 = vpop.permute.xlu0 %2051
        %v2054 = vmul.f32 %v2032, %v2052
        %s2055 = scalar_lea.vmem %s399, 16
        %v2056 = vld [vmem:[%s2055] sm:$0xff]
        %2057 = vrot.lane.b32.xlu0 %v1949, 96
        %v2058 = vpop.permute.xlu0 %2057
        %v2060 = vsub.f32 %v2054, %v2058
        %2062 = vset.pattern.permute.xlu0 0
        %2063 = vperm.xlu0 %2062, %v2056
        %v2064 = vpop.permute.xlu0 %2063
        %v2066 = vmul.f32 %v2064, %v2060
        %2068 = vrot.lane.b32.xlu0 %v2066, 32
        %v2069 = vpop.permute.xlu0 %2068
        %v2071 = vadd.f32 %v1949, %v2069
        %2072 = vst.msk [vmem:[#allocation4] sm:$0xff] %vm425, %v2071
        %v2073 = vsub.f32 %v2048, %v2036
        %v2074 = vmul.f32 %v2064, %v2073
        %2076 = vrot.lane.b32.xlu0 %v2074, 96
        %v2077 = vpop.permute.xlu0 %2076
        %v2079 = vadd.f32 %v1950, %v2077
        %2080 = vst.msk [vmem:[#allocation5] sm:$0xff] %vm425, %v2079
        %v2081 = vmul.f32 %v2064, %v2054
        %2083 = vrot.lane.b32.xlu0 %v2081, 32
        %v2084 = vpop.permute.xlu0 %2083
        %s2086 = scalar_lea.vmem %s373, 16 [#allocation12]
        %2087 = vst.msk [vmem:[%s2086] sm:$0xff] %vm425, %v2084
        %v2088 = vld [vmem:[#allocation2] sm:$0xff]
        %v2089 = vld [vmem:[#allocation3] sm:$0xff]
        %s2090 = scalar_lea.vmem %s378, 48
        %v2091 = vld [vmem:[%s2090] sm:$0xff]
        %v2093 = vsel %vm425, %v2088, 0
        %2095 = vmatprep.subr.mxu0 0.0
        %2096 = vmatpush1.msra.mxu0 0.0
        %2097 = vmatprep.subr.mxu0 0.0
        %2098 = vmatpush1.msra.mxu0 0.0
        %2099 = vmatprep.subr.mxu0 0.0
        %2100 = vmatpush1.msra.mxu0 0.0
        %2101 = vmatprep.subr.mxu0 0.0
        %2102 = vmatpush1.msra.mxu0 0.0
        %2103 = vmatprep.subr.mxu0 0.0
        %2104 = vmatpush1.msra.mxu0 0.0
        %2105 = vmatprep.subr.mxu0 0.0
        %2106 = vmatpush1.msra.mxu0 0.0
        %2107 = vmatprep.subr.mxu0 0.0
        %2108 = vmatpush1.msra.mxu0 0.0
        %2109 = vmatprep.subr.mxu0 0.0
        %2110 = vmatpush1.msra.mxu0 0.0
        %2111 = vmatprep.subr.mxu0 0.0
        %2112 = vmatpush1.msra.mxu0 0.0
        %2113 = vmatprep.subr.mxu0 0.0
        %2114 = vmatpush1.msra.mxu0 0.0
        %2115 = vmatprep.subr.mxu0 0.0
        %2116 = vmatpush1.msra.mxu0 0.0
        %2117 = vmatprep.subr.mxu0 0.0
        %2118 = vmatpush1.msra.mxu0 0.0
        %2119 = vmatprep.subr.mxu0 0.0
        %2120 = vmatpush1.msra.mxu0 %v417
        %2121 = vmatprep.subr.mxu0 0.0
        %2122 = vmatpush1.msra.mxu0 %v416
        %2123 = vmatprep.subr.mxu0 0.0
        %2124 = vmatpush1.msra.mxu0 %v415
        %2125 = vmatprep.subr.mxu0 0.0
        %2126 = vmatpush1.msra.mxu0 %v414
        %2127 = vmatprep.subr.mxu0 0.0
        %2128 = vmatpush2.msra.mxu0 0.0
        %2129 = vmatprep.subr.mxu0 0.0
        %2130 = vmatpush2.msra.mxu0 0.0
        %2131 = vmatprep.subr.mxu0 0.0
        %2132 = vmatpush2.msra.mxu0 0.0
        %2133 = vmatprep.subr.mxu0 0.0
        %2134 = vmatpush2.msra.mxu0 0.0
        %2135 = vmatprep.subr.mxu0 0.0
        %2136 = vmatpush2.msra.mxu0 0.0
        %2137 = vmatprep.subr.mxu0 0.0
        %2138 = vmatpush2.msra.mxu0 0.0
        %2139 = vmatprep.subr.mxu0 0.0
        %2140 = vmatpush2.msra.mxu0 0.0
        %2141 = vmatprep.subr.mxu0 0.0
        %2142 = vmatpush2.msra.mxu0 0.0
        %2143 = vmatprep.subr.mxu0 0.0
        %2144 = vmatpush2.msra.mxu0 0.0
        %2145 = vmatprep.subr.mxu0 0.0
        %2146 = vmatpush2.msra.mxu0 0.0
        %2147 = vmatprep.subr.mxu0 0.0
        %2148 = vmatpush2.msra.mxu0 0.0
        %2149 = vmatprep.subr.mxu0 0.0
        %2150 = vmatpush2.msra.mxu0 0.0
        %2151 = vmatprep.subr.mxu0 0.0
        %2152 = vmatpush2.msra.mxu0 0.0
        %2153 = vmatprep.subr.mxu0 0.0
        %2154 = vmatpush2.msra.mxu0 0.0
        %2155 = vmatprep.subr.mxu0 0.0
        %2156 = vmatpush2.msra.mxu0 0.0
        %2157 = vmatprep.subr.mxu0 0.0
        %2158 = vmatpush2.msra.mxu0 0.0
        %2159 = vmatprep.mubr.f32.mxu0 0.0
        %2160 = vmatmul.mubr.f32.gmra.mxu0 %v2093
        %v2161 = vpop.f32.mrf.mxu0
        %v2162 = vadd.f32 0.0, %v2161
        %v2163 = vpop.f32.mrf.mxu0
        %2164 = vdwg.mxu0
        %v2165 = vadd.f32 %v2091, %v2162
        %v2166 = vxor.u32 %v2165, 2147483648
        %v2167 = vmul.f32 %v2166, 1.442695
        %v2168 = vpow.pop %v2167
        %v2169 = vadd.f32 %v2168, 1.0
        %v2170 = vrcp.pop %v2169
        %v2171 = vmul.f32 1.0, %v2170
        %v2172 = vtanh.pop %v2165
        %2174 = vrot.lane.b32.xlu0 %v2089, 32
        %v2175 = vpop.permute.xlu0 %2174
        %v2177 = vmul.f32 %v2171, %v2175
        %2179 = vrot.lane.b32.xlu0 %v2172, 64
        %v2180 = vpop.permute.xlu0 %2179
        %v2182 = vmul.f32 %v2171, %v2180
        %2184 = vrot.lane.b32.xlu0 %v2182, 32
        %v2185 = vpop.permute.xlu0 %2184
        %v2187 = vadd.f32 %v2177, %v2185
        %v2188 = vtanh.pop %v2187
        %2190 = vrot.lane.b32.xlu0 %v2188, 64
        %v2191 = vpop.permute.xlu0 %2190
        %v2193 = vmul.f32 %v2171, %v2191
        %s2194 = scalar_lea.vmem %s392, 48
        %v2195 = vld [vmem:[%s2194] sm:$0xff]
        %2196 = vrot.lane.b32.xlu0 %v2088, 96
        %v2197 = vpop.permute.xlu0 %2196
        %v2199 = vsub.f32 %v2193, %v2197
        %2201 = vset.pattern.permute.xlu0 0
        %2202 = vperm.xlu0 %2201, %v2195
        %v2203 = vpop.permute.xlu0 %2202
        %v2205 = vmul.f32 %v2203, %v2199
        %2207 = vrot.lane.b32.xlu0 %v2205, 32
        %v2208 = vpop.permute.xlu0 %2207
        %v2210 = vadd.f32 %v2088, %v2208
        %2211 = vst.msk [vmem:[#allocation2] sm:$0xff] %vm425, %v2210
        %v2212 = vsub.f32 %v2187, %v2175
        %v2213 = vmul.f32 %v2203, %v2212
        %2215 = vrot.lane.b32.xlu0 %v2213, 96
        %v2216 = vpop.permute.xlu0 %2215
        %v2218 = vadd.f32 %v2089, %v2216
        %2219 = vst.msk [vmem:[#allocation3] sm:$0xff] %vm425, %v2218
        %v2220 = vmul.f32 %v2203, %v2193
        %2222 = vrot.lane.b32.xlu0 %v2220, 32
        %v2223 = vpop.permute.xlu0 %2222
        %s2225 = scalar_lea.vmem %s366, 48 [#allocation11]
        %2226 = vst.msk [vmem:[%s2225] sm:$0xff] %vm425, %v2223
        %v2227 = vld [vmem:[#allocation4] sm:$0xff]
        %v2228 = vld [vmem:[#allocation5] sm:$0xff]
        %s2229 = scalar_lea.vmem %s385, 8
        %v2230 = vld [vmem:[%s2229] sm:$0xff]
        %v2232 = vsel %vm425, %v2227, 0
        %2234 = vmatprep.subr.mxu0 0.0
        %2235 = vmatpush1.msra.mxu0 0.0
        %2236 = vmatprep.subr.mxu0 0.0
        %2237 = vmatpush1.msra.mxu0 0.0
        %2238 = vmatprep.subr.mxu0 0.0
        %2239 = vmatpush1.msra.mxu0 0.0
        %2240 = vmatprep.subr.mxu0 0.0
        %2241 = vmatpush1.msra.mxu0 0.0
        %2242 = vmatprep.subr.mxu0 0.0
        %2243 = vmatpush1.msra.mxu0 0.0
        %2244 = vmatprep.subr.mxu0 0.0
        %2245 = vmatpush1.msra.mxu0 0.0
        %2246 = vmatprep.subr.mxu0 0.0
        %2247 = vmatpush1.msra.mxu0 0.0
        %2248 = vmatprep.subr.mxu0 0.0
        %2249 = vmatpush1.msra.mxu0 0.0
        %2250 = vmatprep.subr.mxu0 0.0
        %2251 = vmatpush1.msra.mxu0 0.0
        %2252 = vmatprep.subr.mxu0 0.0
        %2253 = vmatpush1.msra.mxu0 0.0
        %2254 = vmatprep.subr.mxu0 0.0
        %2255 = vmatpush1.msra.mxu0 0.0
        %2256 = vmatprep.subr.mxu0 0.0
        %2257 = vmatpush1.msra.mxu0 0.0
        %2258 = vmatprep.subr.mxu0 0.0
        %2259 = vmatpush1.msra.mxu0 %v421
        %2260 = vmatprep.subr.mxu0 0.0
        %2261 = vmatpush1.msra.mxu0 %v420
        %2262 = vmatprep.subr.mxu0 0.0
        %2263 = vmatpush1.msra.mxu0 %v419
        %2264 = vmatprep.subr.mxu0 0.0
        %2265 = vmatpush1.msra.mxu0 %v418
        %2266 = vmatprep.subr.mxu0 0.0
        %2267 = vmatpush2.msra.mxu0 0.0
        %2268 = vmatprep.subr.mxu0 0.0
        %2269 = vmatpush2.msra.mxu0 0.0
        %2270 = vmatprep.subr.mxu0 0.0
        %2271 = vmatpush2.msra.mxu0 0.0
        %2272 = vmatprep.subr.mxu0 0.0
        %2273 = vmatpush2.msra.mxu0 0.0
        %2274 = vmatprep.subr.mxu0 0.0
        %2275 = vmatpush2.msra.mxu0 0.0
        %2276 = vmatprep.subr.mxu0 0.0
        %2277 = vmatpush2.msra.mxu0 0.0
        %2278 = vmatprep.subr.mxu0 0.0
        %2279 = vmatpush2.msra.mxu0 0.0
        %2280 = vmatprep.subr.mxu0 0.0
        %2281 = vmatpush2.msra.mxu0 0.0
        %2282 = vmatprep.subr.mxu0 0.0
        %2283 = vmatpush2.msra.mxu0 0.0
        %2284 = vmatprep.subr.mxu0 0.0
        %2285 = vmatpush2.msra.mxu0 0.0
        %2286 = vmatprep.subr.mxu0 0.0
        %2287 = vmatpush2.msra.mxu0 0.0
        %2288 = vmatprep.subr.mxu0 0.0
        %2289 = vmatpush2.msra.mxu0 0.0
        %2290 = vmatprep.subr.mxu0 0.0
        %2291 = vmatpush2.msra.mxu0 0.0
        %2292 = vmatprep.subr.mxu0 0.0
        %2293 = vmatpush2.msra.mxu0 0.0
        %2294 = vmatprep.subr.mxu0 0.0
        %2295 = vmatpush2.msra.mxu0 0.0
        %2296 = vmatprep.subr.mxu0 0.0
        %2297 = vmatpush2.msra.mxu0 0.0
        %2298 = vmatprep.mubr.f32.mxu0 0.0
        %2299 = vmatmul.mubr.f32.gmra.mxu0 %v2232
        %v2300 = vpop.f32.mrf.mxu0
        %v2301 = vadd.f32 0.0, %v2300
        %v2302 = vpop.f32.mrf.mxu0
        %2303 = vdwg.mxu0
        %v2304 = vadd.f32 %v2230, %v2301
        %v2305 = vxor.u32 %v2304, 2147483648
        %v2306 = vmul.f32 %v2305, 1.442695
        %v2307 = vpow.pop %v2306
        %v2308 = vadd.f32 %v2307, 1.0
        %v2309 = vrcp.pop %v2308
        %v2310 = vmul.f32 1.0, %v2309
        %v2311 = vtanh.pop %v2304
        %2313 = vrot.lane.b32.xlu0 %v2228, 32
        %v2314 = vpop.permute.xlu0 %2313
        %v2316 = vmul.f32 %v2310, %v2314
        %2318 = vrot.lane.b32.xlu0 %v2311, 64
        %v2319 = vpop.permute.xlu0 %2318
        %v2321 = vmul.f32 %v2310, %v2319
        %2323 = vrot.lane.b32.xlu0 %v2321, 32
        %v2324 = vpop.permute.xlu0 %2323
        %v2326 = vadd.f32 %v2316, %v2324
        %v2327 = vtanh.pop %v2326
        %2329 = vrot.lane.b32.xlu0 %v2327, 64
        %v2330 = vpop.permute.xlu0 %2329
        %v2332 = vmul.f32 %v2310, %v2330
        %s2333 = scalar_lea.vmem %s399, 8
        %v2334 = vld [vmem:[%s2333] sm:$0xff]
        %2335 = vrot.lane.b32.xlu0 %v2227, 96
        %v2336 = vpop.permute.xlu0 %2335
        %v2338 = vsub.f32 %v2332, %v2336
        %2340 = vset.pattern.permute.xlu0 0
        %2341 = vperm.xlu0 %2340, %v2334
        %v2342 = vpop.permute.xlu0 %2341
        %v2344 = vmul.f32 %v2342, %v2338
        %2346 = vrot.lane.b32.xlu0 %v2344, 32
        %v2347 = vpop.permute.xlu0 %2346
        %v2349 = vadd.f32 %v2227, %v2347
        %2350 = vst.msk [vmem:[#allocation4] sm:$0xff] %vm425, %v2349
        %v2351 = vsub.f32 %v2326, %v2314
        %v2352 = vmul.f32 %v2342, %v2351
        %2354 = vrot.lane.b32.xlu0 %v2352, 96
        %v2355 = vpop.permute.xlu0 %2354
        %v2357 = vadd.f32 %v2228, %v2355
        %2358 = vst.msk [vmem:[#allocation5] sm:$0xff] %vm425, %v2357
        %v2359 = vmul.f32 %v2342, %v2332
        %2361 = vrot.lane.b32.xlu0 %v2359, 32
        %v2362 = vpop.permute.xlu0 %2361
        %s2364 = scalar_lea.vmem %s373, 8 [#allocation12]
        %2365 = vst.msk [vmem:[%s2364] sm:$0xff] %vm425, %v2362
        %v2366 = vld [vmem:[#allocation2] sm:$0xff]
        %v2367 = vld [vmem:[#allocation3] sm:$0xff]
        %s2368 = scalar_lea.vmem %s378, 56
        %v2369 = vld [vmem:[%s2368] sm:$0xff]
        %v2371 = vsel %vm425, %v2366, 0
        %2373 = vmatprep.subr.mxu0 0.0
        %2374 = vmatpush1.msra.mxu0 0.0
        %2375 = vmatprep.subr.mxu0 0.0
        %2376 = vmatpush1.msra.mxu0 0.0
        %2377 = vmatprep.subr.mxu0 0.0
        %2378 = vmatpush1.msra.mxu0 0.0
        %2379 = vmatprep.subr.mxu0 0.0
        %2380 = vmatpush1.msra.mxu0 0.0
        %2381 = vmatprep.subr.mxu0 0.0
        %2382 = vmatpush1.msra.mxu0 0.0
        %2383 = vmatprep.subr.mxu0 0.0
        %2384 = vmatpush1.msra.mxu0 0.0
        %2385 = vmatprep.subr.mxu0 0.0
        %2386 = vmatpush1.msra.mxu0 0.0
        %2387 = vmatprep.subr.mxu0 0.0
        %2388 = vmatpush1.msra.mxu0 0.0
        %2389 = vmatprep.subr.mxu0 0.0
        %2390 = vmatpush1.msra.mxu0 0.0
        %2391 = vmatprep.subr.mxu0 0.0
        %2392 = vmatpush1.msra.mxu0 0.0
        %2393 = vmatprep.subr.mxu0 0.0
        %2394 = vmatpush1.msra.mxu0 0.0
        %2395 = vmatprep.subr.mxu0 0.0
        %2396 = vmatpush1.msra.mxu0 0.0
        %2397 = vmatprep.subr.mxu0 0.0
        %2398 = vmatpush1.msra.mxu0 %v417
        %2399 = vmatprep.subr.mxu0 0.0
        %2400 = vmatpush1.msra.mxu0 %v416
        %2401 = vmatprep.subr.mxu0 0.0
        %2402 = vmatpush1.msra.mxu0 %v415
        %2403 = vmatprep.subr.mxu0 0.0
        %2404 = vmatpush1.msra.mxu0 %v414
        %2405 = vmatprep.subr.mxu0 0.0
        %2406 = vmatpush2.msra.mxu0 0.0
        %2407 = vmatprep.subr.mxu0 0.0
        %2408 = vmatpush2.msra.mxu0 0.0
        %2409 = vmatprep.subr.mxu0 0.0
        %2410 = vmatpush2.msra.mxu0 0.0
        %2411 = vmatprep.subr.mxu0 0.0
        %2412 = vmatpush2.msra.mxu0 0.0
        %2413 = vmatprep.subr.mxu0 0.0
        %2414 = vmatpush2.msra.mxu0 0.0
        %2415 = vmatprep.subr.mxu0 0.0
        %2416 = vmatpush2.msra.mxu0 0.0
        %2417 = vmatprep.subr.mxu0 0.0
        %2418 = vmatpush2.msra.mxu0 0.0
        %2419 = vmatprep.subr.mxu0 0.0
        %2420 = vmatpush2.msra.mxu0 0.0
        %2421 = vmatprep.subr.mxu0 0.0
        %2422 = vmatpush2.msra.mxu0 0.0
        %2423 = vmatprep.subr.mxu0 0.0
        %2424 = vmatpush2.msra.mxu0 0.0
        %2425 = vmatprep.subr.mxu0 0.0
        %2426 = vmatpush2.msra.mxu0 0.0
        %2427 = vmatprep.subr.mxu0 0.0
        %2428 = vmatpush2.msra.mxu0 0.0
        %2429 = vmatprep.subr.mxu0 0.0
        %2430 = vmatpush2.msra.mxu0 0.0
        %2431 = vmatprep.subr.mxu0 0.0
        %2432 = vmatpush2.msra.mxu0 0.0
        %2433 = vmatprep.subr.mxu0 0.0
        %2434 = vmatpush2.msra.mxu0 0.0
        %2435 = vmatprep.subr.mxu0 0.0
        %2436 = vmatpush2.msra.mxu0 0.0
        %2437 = vmatprep.mubr.f32.mxu0 0.0
        %2438 = vmatmul.mubr.f32.gmra.mxu0 %v2371
        %v2439 = vpop.f32.mrf.mxu0
        %v2440 = vadd.f32 0.0, %v2439
        %v2441 = vpop.f32.mrf.mxu0
        %2442 = vdwg.mxu0
        %v2443 = vadd.f32 %v2369, %v2440
        %v2444 = vxor.u32 %v2443, 2147483648
        %v2445 = vmul.f32 %v2444, 1.442695
        %v2446 = vpow.pop %v2445
        %v2447 = vadd.f32 %v2446, 1.0
        %v2448 = vrcp.pop %v2447
        %v2449 = vmul.f32 1.0, %v2448
        %v2450 = vtanh.pop %v2443
        %2452 = vrot.lane.b32.xlu0 %v2367, 32
        %v2453 = vpop.permute.xlu0 %2452
        %v2455 = vmul.f32 %v2449, %v2453
        %2457 = vrot.lane.b32.xlu0 %v2450, 64
        %v2458 = vpop.permute.xlu0 %2457
        %v2460 = vmul.f32 %v2449, %v2458
        %2462 = vrot.lane.b32.xlu0 %v2460, 32
        %v2463 = vpop.permute.xlu0 %2462
        %v2465 = vadd.f32 %v2455, %v2463
        %v2466 = vtanh.pop %v2465
        %2468 = vrot.lane.b32.xlu0 %v2466, 64
        %v2469 = vpop.permute.xlu0 %2468
        %v2471 = vmul.f32 %v2449, %v2469
        %s2472 = scalar_lea.vmem %s392, 56
        %v2473 = vld [vmem:[%s2472] sm:$0xff]
        %2474 = vrot.lane.b32.xlu0 %v2366, 96
        %v2475 = vpop.permute.xlu0 %2474
        %v2477 = vsub.f32 %v2471, %v2475
        %2479 = vset.pattern.permute.xlu0 0
        %2480 = vperm.xlu0 %2479, %v2473
        %v2481 = vpop.permute.xlu0 %2480
        %v2483 = vmul.f32 %v2481, %v2477
        %2485 = vrot.lane.b32.xlu0 %v2483, 32
        %v2486 = vpop.permute.xlu0 %2485
        %v2488 = vadd.f32 %v2366, %v2486
        %2489 = vst.msk [vmem:[#allocation2] sm:$0xff] %vm425, %v2488
        %v2490 = vsub.f32 %v2465, %v2453
        %v2491 = vmul.f32 %v2481, %v2490
        %2493 = vrot.lane.b32.xlu0 %v2491, 96
        %v2494 = vpop.permute.xlu0 %2493
        %v2496 = vadd.f32 %v2367, %v2494
        %2497 = vst.msk [vmem:[#allocation3] sm:$0xff] %vm425, %v2496
        %v2498 = vmul.f32 %v2481, %v2471
        %2500 = vrot.lane.b32.xlu0 %v2498, 32
        %v2501 = vpop.permute.xlu0 %2500
        %s2503 = scalar_lea.vmem %s366, 56 [#allocation11]
        %2504 = vst.msk [vmem:[%s2503] sm:$0xff] %vm425, %v2501
        %v2505 = vld [vmem:[#allocation4] sm:$0xff]
        %v2506 = vld [vmem:[#allocation5] sm:$0xff]
        %v2507 = vld [vmem:[%s385] sm:$0xff]
        %v2509 = vsel %vm425, %v2505, 0
        %2511 = vmatprep.subr.mxu0 0.0
        %2512 = vmatpush1.msra.mxu0 0.0
        %2513 = vmatprep.subr.mxu0 0.0
        %2514 = vmatpush1.msra.mxu0 0.0
        %2515 = vmatprep.subr.mxu0 0.0
        %2516 = vmatpush1.msra.mxu0 0.0
        %2517 = vmatprep.subr.mxu0 0.0
        %2518 = vmatpush1.msra.mxu0 0.0
        %2519 = vmatprep.subr.mxu0 0.0
        %2520 = vmatpush1.msra.mxu0 0.0
        %2521 = vmatprep.subr.mxu0 0.0
        %2522 = vmatpush1.msra.mxu0 0.0
        %2523 = vmatprep.subr.mxu0 0.0
        %2524 = vmatpush1.msra.mxu0 0.0
        %2525 = vmatprep.subr.mxu0 0.0
        %2526 = vmatpush1.msra.mxu0 0.0
        %2527 = vmatprep.subr.mxu0 0.0
        %2528 = vmatpush1.msra.mxu0 0.0
        %2529 = vmatprep.subr.mxu0 0.0
        %2530 = vmatpush1.msra.mxu0 0.0
        %2531 = vmatprep.subr.mxu0 0.0
        %2532 = vmatpush1.msra.mxu0 0.0
        %2533 = vmatprep.subr.mxu0 0.0
        %2534 = vmatpush1.msra.mxu0 0.0
        %2535 = vmatprep.subr.mxu0 0.0
        %2536 = vmatpush1.msra.mxu0 %v421
        %2537 = vmatprep.subr.mxu0 0.0
        %2538 = vmatpush1.msra.mxu0 %v420
        %2539 = vmatprep.subr.mxu0 0.0
        %2540 = vmatpush1.msra.mxu0 %v419
        %2541 = vmatprep.subr.mxu0 0.0
        %2542 = vmatpush1.msra.mxu0 %v418
        %2543 = vmatprep.subr.mxu0 0.0
        %2544 = vmatpush2.msra.mxu0 0.0
        %2545 = vmatprep.subr.mxu0 0.0
        %2546 = vmatpush2.msra.mxu0 0.0
        %2547 = vmatprep.subr.mxu0 0.0
        %2548 = vmatpush2.msra.mxu0 0.0
        %2549 = vmatprep.subr.mxu0 0.0
        %2550 = vmatpush2.msra.mxu0 0.0
        %2551 = vmatprep.subr.mxu0 0.0
        %2552 = vmatpush2.msra.mxu0 0.0
        %2553 = vmatprep.subr.mxu0 0.0
        %2554 = vmatpush2.msra.mxu0 0.0
        %2555 = vmatprep.subr.mxu0 0.0
        %2556 = vmatpush2.msra.mxu0 0.0
        %2557 = vmatprep.subr.mxu0 0.0
        %2558 = vmatpush2.msra.mxu0 0.0
        %2559 = vmatprep.subr.mxu0 0.0
        %2560 = vmatpush2.msra.mxu0 0.0
        %2561 = vmatprep.subr.mxu0 0.0
        %2562 = vmatpush2.msra.mxu0 0.0
        %2563 = vmatprep.subr.mxu0 0.0
        %2564 = vmatpush2.msra.mxu0 0.0
        %2565 = vmatprep.subr.mxu0 0.0
        %2566 = vmatpush2.msra.mxu0 0.0
        %2567 = vmatprep.subr.mxu0 0.0
        %2568 = vmatpush2.msra.mxu0 0.0
        %2569 = vmatprep.subr.mxu0 0.0
        %2570 = vmatpush2.msra.mxu0 0.0
        %2571 = vmatprep.subr.mxu0 0.0
        %2572 = vmatpush2.msra.mxu0 0.0
        %2573 = vmatprep.subr.mxu0 0.0
        %2574 = vmatpush2.msra.mxu0 0.0
        %2575 = vmatprep.mubr.f32.mxu0 0.0
        %2576 = vmatmul.mubr.f32.gmra.mxu0 %v2509
        %v2577 = vpop.f32.mrf.mxu0
        %v2578 = vadd.f32 0.0, %v2577
        %v2579 = vpop.f32.mrf.mxu0
        %2580 = vdwg.mxu0
        %v2581 = vadd.f32 %v2507, %v2578
        %v2582 = vxor.u32 %v2581, 2147483648
        %v2583 = vmul.f32 %v2582, 1.442695
        %v2584 = vpow.pop %v2583
        %v2585 = vadd.f32 %v2584, 1.0
        %v2586 = vrcp.pop %v2585
        %v2587 = vmul.f32 1.0, %v2586
        %v2588 = vtanh.pop %v2581
        %2590 = vrot.lane.b32.xlu0 %v2506, 32
        %v2591 = vpop.permute.xlu0 %2590
        %v2593 = vmul.f32 %v2587, %v2591
        %2595 = vrot.lane.b32.xlu0 %v2588, 64
        %v2596 = vpop.permute.xlu0 %2595
        %v2598 = vmul.f32 %v2587, %v2596
        %2600 = vrot.lane.b32.xlu0 %v2598, 32
        %v2601 = vpop.permute.xlu0 %2600
        %v2603 = vadd.f32 %v2593, %v2601
        %v2604 = vtanh.pop %v2603
        %2606 = vrot.lane.b32.xlu0 %v2604, 64
        %v2607 = vpop.permute.xlu0 %2606
        %v2609 = vmul.f32 %v2587, %v2607
        %v2610 = vld [vmem:[%s399] sm:$0xff]
        %2611 = vrot.lane.b32.xlu0 %v2505, 96
        %v2612 = vpop.permute.xlu0 %2611
        %v2614 = vsub.f32 %v2609, %v2612
        %2616 = vset.pattern.permute.xlu0 0
        %2617 = vperm.xlu0 %2616, %v2610
        %v2618 = vpop.permute.xlu0 %2617
        %v2620 = vmul.f32 %v2618, %v2614
        %2622 = vrot.lane.b32.xlu0 %v2620, 32
        %v2623 = vpop.permute.xlu0 %2622
        %v2625 = vadd.f32 %v2505, %v2623
        %2626 = vst.msk [vmem:[#allocation4] sm:$0xff] %vm425, %v2625
        %v2627 = vsub.f32 %v2603, %v2591
        %v2628 = vmul.f32 %v2618, %v2627
        %2630 = vrot.lane.b32.xlu0 %v2628, 96
        %v2631 = vpop.permute.xlu0 %2630
        %v2633 = vadd.f32 %v2506, %v2631
        %2634 = vst.msk [vmem:[#allocation5] sm:$0xff] %vm425, %v2633
        %v2635 = vmul.f32 %v2618, %v2609
        %2637 = vrot.lane.b32.xlu0 %v2635, 32
        %v2638 = vpop.permute.xlu0 %2637
        %2640 = vst.msk [vmem:[%s373] sm:$0xff] %vm425, %v2638
        %s2641 = sand.u32 %s185, 1
        %s2642 = scalar_lea.sflag [#allocation8], %s2641
        %s2643 = sand.u32 %s185, 1
        %s2644 = smul.addr %s2643, 64
        %s2645 = scalar_lea.vmem [#allocation11], %s2644
        %s2646 = sand.u32 %s213, 1
        %s2647 = scalar_lea.sflag [#allocation13], %s2646
        %s2648 = sand.u32 %s213, 1
        %s2649 = smul.addr %s2648, 64
        %s2650 = scalar_lea.vmem [#allocation12], %s2649
        // Predicated region
        $region57: #{tpu_custom_call.1} parent=43 // pred_check
          %p2651 = pneg %p195
        $region58: #{tpu_custom_call.1} parent=43 // pred_check_branch
          %2653 = sbr.rel (%p2651) target = $region60
        $region59: #{tpu_custom_call.1} parent=43 // pred_region
          %s2654 = smul.u32 8, %s27
          %s2656 = ssub.s32 1024, 1024
          %2657 = vsyncadd %s2642, %s2656
          %s2658 = smul.addr %s2654, 128
          %s2659 = scalar_lea.hbm %s6, %s2658
          %s2660 = sshll.u32 %s2645, 4
          %s2661 = int_to_ptr.vmem [resolvable:$true] %s2660
          %2666 = dma.vmem_to_hbm [thread:$0]  %s2661, 1024, %s2659, %s2642, 128, 128, 8
        $region60: #{tpu_custom_call.1} parent=43 // pred_fallthru
          _
        // Predicated region
        $region61: #{tpu_custom_call.1} parent=43 // pred_check
          %p2667 = pneg %p223
        $region62: #{tpu_custom_call.1} parent=43 // pred_check_branch
          %2669 = sbr.rel (%p2667) target = $region64
        $region63: #{tpu_custom_call.1} parent=43 // pred_region
          %s2670 = ssub.s32 1, %s27
          %s2671 = smul.u32 8, %s2670
          %s2673 = ssub.s32 1024, 1024
          %2674 = vsyncadd %s2647, %s2673
          %s2675 = smul.addr %s2671, 128
          %s2676 = scalar_lea.hbm %s7, %s2675
          %s2677 = sshll.u32 %s2650, 4
          %s2678 = int_to_ptr.vmem [resolvable:$true] %s2677
          %2683 = dma.vmem_to_hbm [thread:$0]  %s2678, 1024, %s2676, %s2647, 128, 128, 8
        $region64: #{tpu_custom_call.1} parent=43 // pred_fallthru
          _
      $region44: #{tpu_custom_call.1} parent=5 // pred_fallthru
        _
      %p2684 = scmp.le.s32.totalorder 2, %s22
      // Predicated region
      $region65: #{tpu_custom_call.1} parent=5 // pred_check
        %p2685 = pneg %p2684
      $region66: #{tpu_custom_call.1} parent=5 // pred_check_branch
        %2687 = sbr.rel (%p2685) target = $region68
      $region67: #{tpu_custom_call.1} parent=5 // pred_region
        %s2688 = ssub.s32 %s22, 2
        // Predicated region
        $region69: #{tpu_custom_call.1} parent=67 // pred_check
          %p2689 = pneg %p201
        $region70: #{tpu_custom_call.1} parent=67 // pred_check_branch
          %2691 = sbr.rel (%p2689) target = $region72
        $region71: #{tpu_custom_call.1} parent=67 // pred_region
          %s2692 = sand.u32 %s186, 1
          %s2693 = scalar_lea.sflag [#allocation8], %s2692
          %s2694 = sand.u32 %s186, 1
          %s2695 = smul.addr %s2694, 64
          %s2696 = scalar_lea.vmem [#allocation11], %s2695
          %2697 = dma.done %s2693, 1024
        $region72: #{tpu_custom_call.1} parent=67 // pred_fallthru
          _
        // Predicated region
        $region73: #{tpu_custom_call.1} parent=67 // pred_check
          %p2698 = pneg %p229
        $region74: #{tpu_custom_call.1} parent=67 // pred_check_branch
          %2700 = sbr.rel (%p2698) target = $region76
        $region75: #{tpu_custom_call.1} parent=67 // pred_region
          %s2701 = sand.u32 %s214, 1
          %s2702 = scalar_lea.sflag [#allocation13], %s2701
          %s2703 = sand.u32 %s214, 1
          %s2704 = smul.addr %s2703, 64
          %s2705 = scalar_lea.vmem [#allocation12], %s2704
          %2706 = dma.done %s2702, 1024
        $region76: #{tpu_custom_call.1} parent=67 // pred_fallthru
          _
      $region68: #{tpu_custom_call.1} parent=5 // pred_fallthru
        _
    $region6: #{tpu_custom_call.1} parent=1 // loop_footer
      %s26 = sadd.s32 1, %s22
    $region7: #{tpu_custom_call.1} parent=1 // loop_footer_branch
      %21 = sbr.rel target = $region3
    $region8: #{tpu_custom_call.1} parent=1 // loop_exit
      _
    %2707 = vsyncpa [#allocation7], 1
    %s2708 = scalar_lea.sflag [#allocation7], 1
    %2709 = vsyncpa %s2708, 1
    %2710 = vsyncpa [#allocation10], 1
    %2711 = vsyncpa [#allocation8], 1
    %s2712 = scalar_lea.sflag [#allocation8], 1
    %2713 = vsyncpa %s2712, 1
    %2714 = vsyncpa [#allocation13], 1
    %s2715 = scalar_lea.sflag [#allocation13], 1
    %2716 = vsyncpa %s2715, 1

</llo_original>
